<compile_context>
chip_gen: v5e
topology: v5e:2x2
jax: 0.10.0
libtpu: 0.0.40
codegen_flags: <defaults>
</compile_context>

<pallas_src>
import functools

import jax
import jax.numpy as jnp
from jax import lax
from jax.experimental import pallas as pl
from jax.experimental.pallas import tpu as pltpu


def _round_up(x, m):
    return ((x + m - 1) // m) * m


# ----------------------------------------------------------------------------
# Fused kernel: all LSTM layers (recurrence) + decoder MLP in one pallas_call.
# ----------------------------------------------------------------------------
def _build_fused_kernel(num_layers, S, B_pad, H_pad, last_num, n_act, n_dec):
    # 8-way unroll only while per-step live values (g is (B_pad, 4*H_pad)) fit
    # comfortably in the 64-vreg file; back off for larger H_pad.
    unroll = True if S <= 16 else (8 if H_pad <= 128 else 4)

    def kernel(*refs):
        idx = 0
        gates0_ref = refs[idx]; idx += 1               # (S*B_pad, 4*H_pad) f32
        whh_refs = [None] * num_layers
        wih_refs = [None] * num_layers
        b_refs = [None] * num_layers
        whh_refs[0] = refs[idx]; idx += 1
        for l in range(1, num_layers):
            wih_refs[l] = refs[idx]
            b_refs[l] = refs[idx + 1]
            whh_refs[l] = refs[idx + 2]
            idx += 3
        dec_refs = []
        for _ in range(n_dec):
            dec_refs.append((refs[idx], refs[idx + 1]))
            idx += 2
        out_ref = refs[idx]; idx += 1
        scr = refs[idx:]
        si = 0
        gates_scr = None
        if num_layers > 1:
            gates_scr = scr[si]; si += 1
        act_refs = scr[si:si + n_act]; si += n_act
        tail_ref = scr[si] if last_num > 1 else None

        def run_layer(layer, gates_ref, act_out_ref):
            is_last = layer == num_layers - 1
            whh_ref = whh_refs[layer]

            def step(t, carry):
                h, c = carry                                   # live in vregs
                row = pl.multiple_of(t * B_pad, B_pad)
                # Per-step critical path: one small bf16 MXU matmul + VPU/EUP.
                g = gates_ref[pl.ds(row, B_pad), :] + jnp.dot(
                    h.astype(whh_ref.dtype), whh_ref[...],
                    preferred_element_type=jnp.float32)
                i_g = jax.nn.sigmoid(g[:, 0 * H_pad:1 * H_pad])
                f_g = jax.nn.sigmoid(g[:, 1 * H_pad:2 * H_pad])
                g_g = jnp.tanh(g[:, 2 * H_pad:3 * H_pad])
                o_g = jax.nn.sigmoid(g[:, 3 * H_pad:4 * H_pad])
                c_new = f_g * c + i_g * g_g
                h_new = o_g * jnp.tanh(c_new)
                if not is_last:
                    # Non-final layers: store the full hidden sequence for the
                    # next layer's hoisted input projection.
                    act_out_ref[pl.ds(row, B_pad), :] = h_new
                elif last_num > 1:
                    # Final layer: only keep the last `last_num` steps.
                    @pl.when(t >= S - last_num)
                    def _():
                        trow = pl.multiple_of(
                            (t - (S - last_num)) * B_pad, B_pad)
                        tail_ref[pl.ds(trow, B_pad), :] = h_new
                return h_new, c_new

            h0 = jnp.zeros((B_pad, H_pad), jnp.float32)
            c0 = jnp.zeros((B_pad, H_pad), jnp.float32)
            h_fin, _ = lax.fori_loop(0, S, step, (h0, c0), unroll=unroll)
            return h_fin

        # Layer 0 consumes the precomputed (XLA-side) input projection.
        prev_act = act_refs[0] if n_act > 0 else None
        h_last = run_layer(0, gates0_ref, prev_act)

        # Layers >= 1: hoisted input projection (one big MXU matmul, bias
        # folded in) into gates_scr, then the recurrence; activations ping-pong
        # between the act buffers (read A, write B), no aliased snapshot copy.
        for layer in range(1, num_layers):
            wih_ref = wih_refs[layer]
            gates_scr[...] = (
                jnp.dot(prev_act[...].astype(wih_ref.dtype), wih_ref[...],
                        preferred_element_type=jnp.float32)
                + b_refs[layer][...]
            )
            is_last_l = layer == num_layers - 1
            next_act = None if is_last_l else act_refs[layer % n_act]
            h_last = run_layer(layer, gates_scr, next_act)
            prev_act = next_act

        # -------- fused decoder MLP (eval-mode dropout is identity) --------
        # Decoder layer-0 weights are packed per tail block, zero-padded to
        # H_pad rows, so there is no [:, :H] slice and no transpose.
        dw0_ref, db0_ref = dec_refs[0]
        if last_num == 1:
            acc = jnp.dot(h_last, dw0_ref[...],
                          preferred_element_type=jnp.float32)
        else:
            acc = jnp.zeros((B_pad, dw0_ref.shape[1]), jnp.float32)
            for j in range(last_num):
                acc = acc + jnp.dot(
                    tail_ref[pl.ds(j * B_pad, B_pad), :],
                    dw0_ref[pl.ds(j * H_pad, H_pad), :],
                    preferred_element_type=jnp.float32)
        hdec = jnp.maximum(acc + db0_ref[...], 0.0)
        for li in range(1, n_dec):
            dw_ref, db_ref = dec_refs[li]
            hdec = jnp.dot(hdec, dw_ref[...],
                           preferred_element_type=jnp.float32) + db_ref[...]
            if li < n_dec - 1:
                hdec = jnp.maximum(hdec, 0.0)
        out_ref[...] = hdec.astype(out_ref.dtype)

    return kernel


def fused_lstm_forward(gates0, packed_lstm, packed_dec, *, last_num, S, B_pad):
    num_layers = len(packed_lstm)
    H_pad = packed_lstm[0][2].shape[0]            # W_hh is (H_pad, 4*H_pad)
    out_dim = packed_dec[-1][0].shape[1]
    n_act = min(num_layers - 1, 2)
    n_dec = len(packed_dec)

    kernel = _build_fused_kernel(
        num_layers, S, B_pad, H_pad, last_num, n_act, n_dec)

    inputs = [gates0, packed_lstm[0][2]]
    for l in range(1, num_layers):
        wih, b, whh = packed_lstm[l]
        inputs += [wih, b, whh]
    for dw, db in packed_dec:
        inputs += [dw, db]

    scratch = []
    scr_bytes = 0
    if num_layers > 1:
        scratch.append(pltpu.VMEM((S * B_pad, 4 * H_pad), jnp.float32))
        scr_bytes += S * B_pad * 4 * H_pad * 4
    for _ in range(n_act):
        scratch.append(pltpu.VMEM((S * B_pad, H_pad), jnp.float32))
        scr_bytes += S * B_pad * H_pad * 4
    if last_num > 1:
        scratch.append(pltpu.VMEM((last_num * B_pad, H_pad), jnp.float32))
        scr_bytes += last_num * B_pad * H_pad * 4

    in_bytes = sum(int(a.size) * a.dtype.itemsize for a in inputs)
    out_bytes = B_pad * out_dim * 4
    # Explicit scoped-VMEM budget: actual footprint x2 + headroom, clamped so
    # it stays valid on v7x (64 MiB physical) while never below the default.
    vmem_limit = int(min(max(2 * (in_bytes + scr_bytes + out_bytes) + (4 << 20),
                             32 << 20), 64 << 20))

    # No grid: single invocation, whole arrays resident in VMEM,
    # single-buffered (nothing to pipeline).
    vmem_spec = pl.BlockSpec(memory_space=pltpu.MemorySpace.VMEM)

    return pl.pallas_call(
        kernel,
        out_shape=jax.ShapeDtypeStruct((B_pad, out_dim), jnp.float32),
        in_specs=[vmem_spec] * len(inputs),
        out_specs=vmem_spec,
        scratch_shapes=scratch,
        compiler_params=pltpu.CompilerParams(vmem_limit_bytes=vmem_limit),
    )(*inputs)


# ----------------------------------------------------------------------------
# Host-side (one-time) parameter packing: transpose + (8,128)-friendly padding
# ----------------------------------------------------------------------------
def pack_params(lstm_raw, dec_raw, hidden_dim, last_num,
                lstm_weight_dtype=jnp.bfloat16):
    """lstm_raw: per layer (w_ih (4H,Din), w_hh (4H,H), b_ih (4H,), b_hh (4H,)).
    dec_raw: per layer (w (out,in), b (out,)).
    LSTM matmul weights are packed bf16 (native MXU); biases stay f32.
    Decoder weights are tiny, kept f32."""
    H = hidden_dim
    H_pad = _round_up(H, 128)

    def pad_gate_cols(w_t):  # (K, 4H) -> (K, 4*H_pad), per-gate zero padding
        K = w_t.shape[0]
        return jnp.pad(
            w_t.reshape(K, 4, H), ((0, 0), (0, 0), (0, H_pad - H))
        ).reshape(K, 4 * H_pad)

    packed_lstm = []
    for layer, (w_ih, w_hh, b_ih, b_hh) in enumerate(lstm_raw):
        wih_t = pad_gate_cols(w_ih.T)                    # (Din or H, 4*H_pad)
        if layer > 0:                                    # layer inputs are H_pad wide
            wih_t = jnp.pad(wih_t, ((0, H_pad - H), (0, 0)))
        whh_t = jnp.pad(pad_gate_cols(w_hh.T), ((0, H_pad - H), (0, 0)))
        b = jnp.pad((b_ih + b_hh).reshape(4, H),
                    ((0, 0), (0, H_pad - H))).reshape(1, 4 * H_pad)
        packed_lstm.append((wih_t.astype(lstm_weight_dtype),
                            b.astype(jnp.float32),
                            whh_t.astype(lstm_weight_dtype)))

    # Decoder layer 0: fold the (batch, last_num*H) feature layout into the
    # weights — per tail block, zero-padded to H_pad input rows.
    w0, b0 = dec_raw[0]
    d0 = w0.shape[0]
    w0_t = w0.T.reshape(last_num, H, d0)
    w0_t = jnp.pad(w0_t, ((0, 0), (0, H_pad - H), (0, 0)))
    w0_t = w0_t.reshape(last_num * H_pad, d0)
    packed_dec = [(w0_t.astype(jnp.float32),
                   b0.reshape(1, -1).astype(jnp.float32))]
    for w, b in dec_raw[1:]:
        packed_dec.append((w.T.astype(jnp.float32),
                           b.reshape(1, -1).astype(jnp.float32)))
    return packed_lstm, packed_dec


# ----------------------------------------------------------------------------
# Full model forward (equivalent to LSTM.forward with default flags)
# ----------------------------------------------------------------------------
@functools.partial(jax.jit, static_argnames=("last_num",))
def lstm_model_forward(x, packed_lstm, packed_dec, last_num=1):
    # x: (batch, seq, input_dim)
    B, S, D_in = x.shape
    B_pad = _round_up(max(B, 8), 8)
    wih0, b0, _ = packed_lstm[0]
    x_tm = jnp.transpose(x, (1, 0, 2)).astype(jnp.float32)     # (S, B, D)
    x_tm = jnp.pad(x_tm, ((0, 0), (0, B_pad - B), (0, 0)))
    x_flat = x_tm.reshape(S * B_pad, D_in)
    # Layer-0 input projection hoisted out of the kernel (plain XLA matmul):
    # keeps the lane-sparse raw x out of kernel VMEM entirely.
    gates0 = jnp.dot(x_flat.astype(wih0.dtype), wih0,
                     preferred_element_type=jnp.float32) + b0
    out = fused_lstm_forward(gates0, packed_lstm, packed_dec,
                             last_num=last_num, S=S, B_pad=B_pad)
    return out[:B]


# ----------------------------------------------------------------------------
# Pure-JAX reference (correctness sanity check, f32 weights)
# ----------------------------------------------------------------------------
def reference_forward(x, lstm_raw, dec_raw, last_num=1):
    x_tm = jnp.transpose(x, (1, 0, 2))
    h_seq = x_tm
    for (w_ih, w_hh, b_ih, b_hh) in lstm_raw:
        H = w_hh.shape[1]
        B = x.shape[0]
        h = jnp.zeros((B, H), jnp.float32)
        c = jnp.zeros((B, H), jnp.float32)
        b = b_ih + b_hh
        outs = []
        for t in range(h_seq.shape[0]):
            gates = h_seq[t] @ w_ih.T + h @ w_hh.T + b
            i = jax.nn.sigmoid(gates[:, 0 * H:1 * H])
            f = jax.nn.sigmoid(gates[:, 1 * H:2 * H])
            g = jnp.tanh(gates[:, 2 * H:3 * H])
            o = jax.nn.sigmoid(gates[:, 3 * H:4 * H])
            c = f * c + i * g
            h = o * jnp.tanh(c)
            outs.append(h)
        h_seq = jnp.stack(outs, axis=0)
    ht = jnp.transpose(h_seq, (1, 0, 2))
    feat = ht[:, -last_num:, :].reshape(ht.shape[0], -1)
    h = feat
    for idx, (w, b) in enumerate(dec_raw):
        h = h @ w.T + b
        if idx < len(dec_raw) - 1:
            h = jnp.maximum(h, 0.0)
    return h


# ----------------------------------------------------------------------------
# Deterministic parameter init (PyTorch-style uniform(-1/sqrt(H), 1/sqrt(H)))
# ----------------------------------------------------------------------------
def init_params(key, input_dim, hidden_dim, output_dim, num_layers, last_num):
    keys = iter(jax.random.split(key, 64))
    bound = 1.0 / jnp.sqrt(hidden_dim)

    lstm_raw = []
    for layer in range(num_layers):
        d_in = input_dim if layer == 0 else hidden_dim
        w_ih = jax.random.uniform(next(keys), (4 * hidden_dim, d_in), jnp.float32, -bound, bound)
        w_hh = jax.random.uniform(next(keys), (4 * hidden_dim, hidden_dim), jnp.float32, -bound, bound)
        b_ih = jax.random.uniform(next(keys), (4 * hidden_dim,), jnp.float32, -bound, bound)
        b_hh = jax.random.uniform(next(keys), (4 * hidden_dim,), jnp.float32, -bound, bound)
        lstm_raw.append((w_ih, w_hh, b_ih, b_hh))

    dec_dims = [
        (hidden_dim * last_num, hidden_dim // 4),
        (hidden_dim // 4, hidden_dim // 8),
        (hidden_dim // 8, hidden_dim // 16),
        (hidden_dim // 16, output_dim),
    ]
    dec_raw = []
    for d_in, d_out in dec_dims:
        lim = 1.0 / jnp.sqrt(d_in)
        w = jax.random.uniform(next(keys), (d_out, d_in), jnp.float32, -lim, lim)
        b = jax.random.uniform(next(keys), (d_out,), jnp.float32, -lim, lim)
        dec_raw.append((w, b))

    return lstm_raw, dec_raw


if __name__ == "__main__":
    # Small config consistent with the module's forward contract.
    batch, seq_len = 2, 8
    input_dim, hidden_dim, output_dim = 8, 32, 4
    num_layers, last_num = 2, 1

    key = jax.random.PRNGKey(0)
    k_x, k_p = jax.random.split(key)
    x = jax.random.normal(k_x, (batch, seq_len, input_dim), jnp.float32)

    lstm_raw, dec_raw = init_params(
        k_p, input_dim, hidden_dim, output_dim, num_layers, last_num
    )
    # One-time host-side pack: transpose + pad + bf16 matmul weights.
    packed_lstm, packed_dec = pack_params(lstm_raw, dec_raw, hidden_dim, last_num)

    out = lstm_model_forward(x, packed_lstm, packed_dec, last_num=last_num)
    out = jax.block_until_ready(out)

    ref = reference_forward(x, lstm_raw, dec_raw, last_num=last_num)
    assert out.shape == (batch, output_dim), out.shape
    max_err = float(jnp.max(jnp.abs(out - ref)))
    # bf16 matmul weights vs f32 reference -> relaxed tolerance.
    assert jnp.allclose(out, ref, atol=5e-2, rtol=5e-2), f"max abs err {max_err}"

    print("KERNEL_OK")
</pallas_src>

<mosaic_0001>
module attributes {stable_mosaic.version = 11 : i64} {
  func.func @kernel(%arg0: memref<64x512xf32, #tpu.memory_space<vmem>>, %arg1: memref<128x512xbf16, #tpu.memory_space<vmem>>, %arg2: memref<128x512xbf16, #tpu.memory_space<vmem>>, %arg3: memref<1x512xf32, #tpu.memory_space<vmem>>, %arg4: memref<128x512xbf16, #tpu.memory_space<vmem>>, %arg5: memref<128x8xf32, #tpu.memory_space<vmem>>, %arg6: memref<1x8xf32, #tpu.memory_space<vmem>>, %arg7: memref<8x4xf32, #tpu.memory_space<vmem>>, %arg8: memref<1x4xf32, #tpu.memory_space<vmem>>, %arg9: memref<4x2xf32, #tpu.memory_space<vmem>>, %arg10: memref<1x2xf32, #tpu.memory_space<vmem>>, %arg11: memref<2x4xf32, #tpu.memory_space<vmem>>, %arg12: memref<1x4xf32, #tpu.memory_space<vmem>>, %arg13: memref<8x4xf32, #tpu.memory_space<vmem>>, %arg14: memref<64x512xf32, #tpu.memory_space<vmem>>, %arg15: memref<64x128xf32, #tpu.memory_space<vmem>>) attributes {dimension_semantics = [], scalar_prefetch = 0 : i64, scratch_operands = 2 : i64, tpu.core_type = #tpu.core_type<tc>} {
    %cst = arith.constant 0.000000e+00 : f32
    %0 = vector.broadcast %cst : f32 to vector<8x128xf32>
    %cst_0 = arith.constant 0.000000e+00 : f32
    %1 = vector.broadcast %cst_0 : f32 to vector<8x128xf32>
    %c0_i32 = arith.constant 0 : i32
    %c8_i32 = arith.constant 8 : i32
    %2 = arith.muli %c0_i32, %c8_i32 : i32
    %3 = tpu.assume_multiple %2, 8 : i32
    %4 = arith.index_cast %3 : i32 to index
    %c0 = arith.constant 0 : index
    %5 = vector.load %arg0[%4, %c0] : memref<64x512xf32, #tpu.memory_space<vmem>>, vector<8x512xf32>
    %6 = arith.truncf %0 : vector<8x128xf32> to vector<8x128xbf16>
    %c0_1 = arith.constant 0 : index
    %c0_2 = arith.constant 0 : index
    %7 = vector.load %arg1[%c0_1, %c0_2] : memref<128x512xbf16, #tpu.memory_space<vmem>>, vector<128x512xbf16>
    %cst_3 = arith.constant dense<0.000000e+00> : vector<8x512xf32>
    %8 = tpu.matmul %6, %7, %cst_3 {dimension_numbers = #tpu.dot_dimension_numbers<[1], [0], [0], [1], [0, 0, 1, 1], [], []>} : vector<8x128xbf16>, vector<128x512xbf16>, vector<8x512xf32> -> vector<8x512xf32>
    %9 = arith.addf %5, %8 : vector<8x512xf32>
    %10 = vector.extract_strided_slice %9 {offsets = [0, 0], sizes = [8, 128], strides = [1, 1]} : vector<8x512xf32> to vector<8x128xf32>
    %11 = arith.negf %10 : vector<8x128xf32>
    %12 = math.exp %11 : vector<8x128xf32>
    %cst_4 = arith.constant 1.000000e+00 : f32
    %13 = vector.broadcast %cst_4 : f32 to vector<8x128xf32>
    %14 = arith.addf %13, %12 : vector<8x128xf32>
    %15 = arith.divf %13, %14 : vector<8x128xf32>
    %16 = vector.extract_strided_slice %9 {offsets = [0, 128], sizes = [8, 128], strides = [1, 1]} : vector<8x512xf32> to vector<8x128xf32>
    %17 = arith.negf %16 : vector<8x128xf32>
    %18 = math.exp %17 : vector<8x128xf32>
    %cst_5 = arith.constant 1.000000e+00 : f32
    %19 = vector.broadcast %cst_5 : f32 to vector<8x128xf32>
    %20 = arith.addf %19, %18 : vector<8x128xf32>
    %21 = arith.divf %19, %20 : vector<8x128xf32>
    %22 = vector.extract_strided_slice %9 {offsets = [0, 256], sizes = [8, 128], strides = [1, 1]} : vector<8x512xf32> to vector<8x128xf32>
    %23 = math.tanh %22 : vector<8x128xf32>
    %24 = vector.extract_strided_slice %9 {offsets = [0, 384], sizes = [8, 128], strides = [1, 1]} : vector<8x512xf32> to vector<8x128xf32>
    %25 = arith.negf %24 : vector<8x128xf32>
    %26 = math.exp %25 : vector<8x128xf32>
    %cst_6 = arith.constant 1.000000e+00 : f32
    %27 = vector.broadcast %cst_6 : f32 to vector<8x128xf32>
    %28 = arith.addf %27, %26 : vector<8x128xf32>
    %29 = arith.divf %27, %28 : vector<8x128xf32>
    %30 = arith.mulf %21, %1 : vector<8x128xf32>
    %31 = arith.mulf %15, %23 : vector<8x128xf32>
    %32 = arith.addf %30, %31 : vector<8x128xf32>
    %33 = math.tanh %32 : vector<8x128xf32>
    %34 = arith.mulf %29, %33 : vector<8x128xf32>
    %35 = arith.index_cast %3 : i32 to index
    %c0_7 = arith.constant 0 : index
    %36 = vector.load %arg15[%35, %c0_7] : memref<64x128xf32, #tpu.memory_space<vmem>>, vector<8x128xf32>
    tpu.vector_store %arg15[%35, %c0_7], %34 {strides = array<i32>} : memref<64x128xf32, #tpu.memory_space<vmem>>, vector<8x128xf32>,
    %c1_i32 = arith.constant 1 : i32
    %c8_i32_8 = arith.constant 8 : i32
    %37 = arith.muli %c1_i32, %c8_i32_8 : i32
    %38 = tpu.assume_multiple %37, 8 : i32
    %39 = arith.index_cast %38 : i32 to index
    %c0_9 = arith.constant 0 : index
    %40 = vector.load %arg0[%39, %c0_9] : memref<64x512xf32, #tpu.memory_space<vmem>>, vector<8x512xf32>
    %41 = arith.truncf %34 : vector<8x128xf32> to vector<8x128xbf16>
    %c0_10 = arith.constant 0 : index
    %c0_11 = arith.constant 0 : index
    %42 = vector.load %arg1[%c0_10, %c0_11] : memref<128x512xbf16, #tpu.memory_space<vmem>>, vector<128x512xbf16>
    %cst_12 = arith.constant dense<0.000000e+00> : vector<8x512xf32>
    %43 = tpu.matmul %41, %42, %cst_12 {dimension_numbers = #tpu.dot_dimension_numbers<[1], [0], [0], [1], [0, 0, 1, 1], [], []>} : vector<8x128xbf16>, vector<128x512xbf16>, vector<8x512xf32> -> vector<8x512xf32>
    %44 = arith.addf %40, %43 : vector<8x512xf32>
    %45 = vector.extract_strided_slice %44 {offsets = [0, 0], sizes = [8, 128], strides = [1, 1]} : vector<8x512xf32> to vector<8x128xf32>
    %46 = arith.negf %45 : vector<8x128xf32>
    %47 = math.exp %46 : vector<8x128xf32>
    %cst_13 = arith.constant 1.000000e+00 : f32
    %48 = vector.broadcast %cst_13 : f32 to vector<8x128xf32>
    %49 = arith.addf %48, %47 : vector<8x128xf32>
    %50 = arith.divf %48, %49 : vector<8x128xf32>
    %51 = vector.extract_strided_slice %44 {offsets = [0, 128], sizes = [8, 128], strides = [1, 1]} : vector<8x512xf32> to vector<8x128xf32>
    %52 = arith.negf %51 : vector<8x128xf32>
    %53 = math.exp %52 : vector<8x128xf32>
    %cst_14 = arith.constant 1.000000e+00 : f32
    %54 = vector.broadcast %cst_14 : f32 to vector<8x128xf32>
    %55 = arith.addf %54, %53 : vector<8x128xf32>
    %56 = arith.divf %54, %55 : vector<8x128xf32>
    %57 = vector.extract_strided_slice %44 {offsets = [0, 256], sizes = [8, 128], strides = [1, 1]} : vector<8x512xf32> to vector<8x128xf32>
    %58 = math.tanh %57 : vector<8x128xf32>
    %59 = vector.extract_strided_slice %44 {offsets = [0, 384], sizes = [8, 128], strides = [1, 1]} : vector<8x512xf32> to vector<8x128xf32>
    %60 = arith.negf %59 : vector<8x128xf32>
    %61 = math.exp %60 : vector<8x128xf32>
    %cst_15 = arith.constant 1.000000e+00 : f32
    %62 = vector.broadcast %cst_15 : f32 to vector<8x128xf32>
    %63 = arith.addf %62, %61 : vector<8x128xf32>
    %64 = arith.divf %62, %63 : vector<8x128xf32>
    %65 = arith.mulf %56, %32 : vector<8x128xf32>
    %66 = arith.mulf %50, %58 : vector<8x128xf32>
    %67 = arith.addf %65, %66 : vector<8x128xf32>
    %68 = math.tanh %67 : vector<8x128xf32>
    %69 = arith.mulf %64, %68 : vector<8x128xf32>
    %70 = arith.index_cast %38 : i32 to index
    %c0_16 = arith.constant 0 : index
    %71 = vector.load %arg15[%70, %c0_16] : memref<64x128xf32, #tpu.memory_space<vmem>>, vector<8x128xf32>
    tpu.vector_store %arg15[%70, %c0_16], %69 {strides = array<i32>} : memref<64x128xf32, #tpu.memory_space<vmem>>, vector<8x128xf32>,
    %c2_i32 = arith.constant 2 : i32
    %c8_i32_17 = arith.constant 8 : i32
    %72 = arith.muli %c2_i32, %c8_i32_17 : i32
    %73 = tpu.assume_multiple %72, 8 : i32
    %74 = arith.index_cast %73 : i32 to index
    %c0_18 = arith.constant 0 : index
    %75 = vector.load %arg0[%74, %c0_18] : memref<64x512xf32, #tpu.memory_space<vmem>>, vector<8x512xf32>
    %76 = arith.truncf %69 : vector<8x128xf32> to vector<8x128xbf16>
    %c0_19 = arith.constant 0 : index
    %c0_20 = arith.constant 0 : index
    %77 = vector.load %arg1[%c0_19, %c0_20] : memref<128x512xbf16, #tpu.memory_space<vmem>>, vector<128x512xbf16>
    %cst_21 = arith.constant dense<0.000000e+00> : vector<8x512xf32>
    %78 = tpu.matmul %76, %77, %cst_21 {dimension_numbers = #tpu.dot_dimension_numbers<[1], [0], [0], [1], [0, 0, 1, 1], [], []>} : vector<8x128xbf16>, vector<128x512xbf16>, vector<8x512xf32> -> vector<8x512xf32>
    %79 = arith.addf %75, %78 : vector<8x512xf32>
    %80 = vector.extract_strided_slice %79 {offsets = [0, 0], sizes = [8, 128], strides = [1, 1]} : vector<8x512xf32> to vector<8x128xf32>
    %81 = arith.negf %80 : vector<8x128xf32>
    %82 = math.exp %81 : vector<8x128xf32>
    %cst_22 = arith.constant 1.000000e+00 : f32
    %83 = vector.broadcast %cst_22 : f32 to vector<8x128xf32>
    %84 = arith.addf %83, %82 : vector<8x128xf32>
    %85 = arith.divf %83, %84 : vector<8x128xf32>
    %86 = vector.extract_strided_slice %79 {offsets = [0, 128], sizes = [8, 128], strides = [1, 1]} : vector<8x512xf32> to vector<8x128xf32>
    %87 = arith.negf %86 : vector<8x128xf32>
    %88 = math.exp %87 : vector<8x128xf32>
    %cst_23 = arith.constant 1.000000e+00 : f32
    %89 = vector.broadcast %cst_23 : f32 to vector<8x128xf32>
    %90 = arith.addf %89, %88 : vector<8x128xf32>
    %91 = arith.divf %89, %90 : vector<8x128xf32>
    %92 = vector.extract_strided_slice %79 {offsets = [0, 256], sizes = [8, 128], strides = [1, 1]} : vector<8x512xf32> to vector<8x128xf32>
    %93 = math.tanh %92 : vector<8x128xf32>
    %94 = vector.extract_strided_slice %79 {offsets = [0, 384], sizes = [8, 128], strides = [1, 1]} : vector<8x512xf32> to vector<8x128xf32>
    %95 = arith.negf %94 : vector<8x128xf32>
    %96 = math.exp %95 : vector<8x128xf32>
    %cst_24 = arith.constant 1.000000e+00 : f32
    %97 = vector.broadcast %cst_24 : f32 to vector<8x128xf32>
    %98 = arith.addf %97, %96 : vector<8x128xf32>
    %99 = arith.divf %97, %98 : vector<8x128xf32>
    %100 = arith.mulf %91, %67 : vector<8x128xf32>
    %101 = arith.mulf %85, %93 : vector<8x128xf32>
    %102 = arith.addf %100, %101 : vector<8x128xf32>
    %103 = math.tanh %102 : vector<8x128xf32>
    %104 = arith.mulf %99, %103 : vector<8x128xf32>
    %105 = arith.index_cast %73 : i32 to index
    %c0_25 = arith.constant 0 : index
    %106 = vector.load %arg15[%105, %c0_25] : memref<64x128xf32, #tpu.memory_space<vmem>>, vector<8x128xf32>
    tpu.vector_store %arg15[%105, %c0_25], %104 {strides = array<i32>} : memref<64x128xf32, #tpu.memory_space<vmem>>, vector<8x128xf32>,
    %c3_i32 = arith.constant 3 : i32
    %c8_i32_26 = arith.constant 8 : i32
    %107 = arith.muli %c3_i32, %c8_i32_26 : i32
    %108 = tpu.assume_multiple %107, 8 : i32
    %109 = arith.index_cast %108 : i32 to index
    %c0_27 = arith.constant 0 : index
    %110 = vector.load %arg0[%109, %c0_27] : memref<64x512xf32, #tpu.memory_space<vmem>>, vector<8x512xf32>
    %111 = arith.truncf %104 : vector<8x128xf32> to vector<8x128xbf16>
    %c0_28 = arith.constant 0 : index
    %c0_29 = arith.constant 0 : index
    %112 = vector.load %arg1[%c0_28, %c0_29] : memref<128x512xbf16, #tpu.memory_space<vmem>>, vector<128x512xbf16>
    %cst_30 = arith.constant dense<0.000000e+00> : vector<8x512xf32>
    %113 = tpu.matmul %111, %112, %cst_30 {dimension_numbers = #tpu.dot_dimension_numbers<[1], [0], [0], [1], [0, 0, 1, 1], [], []>} : vector<8x128xbf16>, vector<128x512xbf16>, vector<8x512xf32> -> vector<8x512xf32>
    %114 = arith.addf %110, %113 : vector<8x512xf32>
    %115 = vector.extract_strided_slice %114 {offsets = [0, 0], sizes = [8, 128], strides = [1, 1]} : vector<8x512xf32> to vector<8x128xf32>
    %116 = arith.negf %115 : vector<8x128xf32>
    %117 = math.exp %116 : vector<8x128xf32>
    %cst_31 = arith.constant 1.000000e+00 : f32
    %118 = vector.broadcast %cst_31 : f32 to vector<8x128xf32>
    %119 = arith.addf %118, %117 : vector<8x128xf32>
    %120 = arith.divf %118, %119 : vector<8x128xf32>
    %121 = vector.extract_strided_slice %114 {offsets = [0, 128], sizes = [8, 128], strides = [1, 1]} : vector<8x512xf32> to vector<8x128xf32>
    %122 = arith.negf %121 : vector<8x128xf32>
    %123 = math.exp %122 : vector<8x128xf32>
    %cst_32 = arith.constant 1.000000e+00 : f32
    %124 = vector.broadcast %cst_32 : f32 to vector<8x128xf32>
    %125 = arith.addf %124, %123 : vector<8x128xf32>
    %126 = arith.divf %124, %125 : vector<8x128xf32>
    %127 = vector.extract_strided_slice %114 {offsets = [0, 256], sizes = [8, 128], strides = [1, 1]} : vector<8x512xf32> to vector<8x128xf32>
    %128 = math.tanh %127 : vector<8x128xf32>
    %129 = vector.extract_strided_slice %114 {offsets = [0, 384], sizes = [8, 128], strides = [1, 1]} : vector<8x512xf32> to vector<8x128xf32>
    %130 = arith.negf %129 : vector<8x128xf32>
    %131 = math.exp %130 : vector<8x128xf32>
    %cst_33 = arith.constant 1.000000e+00 : f32
    %132 = vector.broadcast %cst_33 : f32 to vector<8x128xf32>
    %133 = arith.addf %132, %131 : vector<8x128xf32>
    %134 = arith.divf %132, %133 : vector<8x128xf32>
    %135 = arith.mulf %126, %102 : vector<8x128xf32>
    %136 = arith.mulf %120, %128 : vector<8x128xf32>
    %137 = arith.addf %135, %136 : vector<8x128xf32>
    %138 = math.tanh %137 : vector<8x128xf32>
    %139 = arith.mulf %134, %138 : vector<8x128xf32>
    %140 = arith.index_cast %108 : i32 to index
    %c0_34 = arith.constant 0 : index
    %141 = vector.load %arg15[%140, %c0_34] : memref<64x128xf32, #tpu.memory_space<vmem>>, vector<8x128xf32>
    tpu.vector_store %arg15[%140, %c0_34], %139 {strides = array<i32>} : memref<64x128xf32, #tpu.memory_space<vmem>>, vector<8x128xf32>,
    %c4_i32 = arith.constant 4 : i32
    %c8_i32_35 = arith.constant 8 : i32
    %142 = arith.muli %c4_i32, %c8_i32_35 : i32
    %143 = tpu.assume_multiple %142, 8 : i32
    %144 = arith.index_cast %143 : i32 to index
    %c0_36 = arith.constant 0 : index
    %145 = vector.load %arg0[%144, %c0_36] : memref<64x512xf32, #tpu.memory_space<vmem>>, vector<8x512xf32>
    %146 = arith.truncf %139 : vector<8x128xf32> to vector<8x128xbf16>
    %c0_37 = arith.constant 0 : index
    %c0_38 = arith.constant 0 : index
    %147 = vector.load %arg1[%c0_37, %c0_38] : memref<128x512xbf16, #tpu.memory_space<vmem>>, vector<128x512xbf16>
    %cst_39 = arith.constant dense<0.000000e+00> : vector<8x512xf32>
    %148 = tpu.matmul %146, %147, %cst_39 {dimension_numbers = #tpu.dot_dimension_numbers<[1], [0], [0], [1], [0, 0, 1, 1], [], []>} : vector<8x128xbf16>, vector<128x512xbf16>, vector<8x512xf32> -> vector<8x512xf32>
    %149 = arith.addf %145, %148 : vector<8x512xf32>
    %150 = vector.extract_strided_slice %149 {offsets = [0, 0], sizes = [8, 128], strides = [1, 1]} : vector<8x512xf32> to vector<8x128xf32>
    %151 = arith.negf %150 : vector<8x128xf32>
    %152 = math.exp %151 : vector<8x128xf32>
    %cst_40 = arith.constant 1.000000e+00 : f32
    %153 = vector.broadcast %cst_40 : f32 to vector<8x128xf32>
    %154 = arith.addf %153, %152 : vector<8x128xf32>
    %155 = arith.divf %153, %154 : vector<8x128xf32>
    %156 = vector.extract_strided_slice %149 {offsets = [0, 128], sizes = [8, 128], strides = [1, 1]} : vector<8x512xf32> to vector<8x128xf32>
    %157 = arith.negf %156 : vector<8x128xf32>
    %158 = math.exp %157 : vector<8x128xf32>
    %cst_41 = arith.constant 1.000000e+00 : f32
    %159 = vector.broadcast %cst_41 : f32 to vector<8x128xf32>
    %160 = arith.addf %159, %158 : vector<8x128xf32>
    %161 = arith.divf %159, %160 : vector<8x128xf32>
    %162 = vector.extract_strided_slice %149 {offsets = [0, 256], sizes = [8, 128], strides = [1, 1]} : vector<8x512xf32> to vector<8x128xf32>
    %163 = math.tanh %162 : vector<8x128xf32>
    %164 = vector.extract_strided_slice %149 {offsets = [0, 384], sizes = [8, 128], strides = [1, 1]} : vector<8x512xf32> to vector<8x128xf32>
    %165 = arith.negf %164 : vector<8x128xf32>
    %166 = math.exp %165 : vector<8x128xf32>
    %cst_42 = arith.constant 1.000000e+00 : f32
    %167 = vector.broadcast %cst_42 : f32 to vector<8x128xf32>
    %168 = arith.addf %167, %166 : vector<8x128xf32>
    %169 = arith.divf %167, %168 : vector<8x128xf32>
    %170 = arith.mulf %161, %137 : vector<8x128xf32>
    %171 = arith.mulf %155, %163 : vector<8x128xf32>
    %172 = arith.addf %170, %171 : vector<8x128xf32>
    %173 = math.tanh %172 : vector<8x128xf32>
    %174 = arith.mulf %169, %173 : vector<8x128xf32>
    %175 = arith.index_cast %143 : i32 to index
    %c0_43 = arith.constant 0 : index
    %176 = vector.load %arg15[%175, %c0_43] : memref<64x128xf32, #tpu.memory_space<vmem>>, vector<8x128xf32>
    tpu.vector_store %arg15[%175, %c0_43], %174 {strides = array<i32>} : memref<64x128xf32, #tpu.memory_space<vmem>>, vector<8x128xf32>,
    %c5_i32 = arith.constant 5 : i32
    %c8_i32_44 = arith.constant 8 : i32
    %177 = arith.muli %c5_i32, %c8_i32_44 : i32
    %178 = tpu.assume_multiple %177, 8 : i32
    %179 = arith.index_cast %178 : i32 to index
    %c0_45 = arith.constant 0 : index
    %180 = vector.load %arg0[%179, %c0_45] : memref<64x512xf32, #tpu.memory_space<vmem>>, vector<8x512xf32>
    %181 = arith.truncf %174 : vector<8x128xf32> to vector<8x128xbf16>
    %c0_46 = arith.constant 0 : index
    %c0_47 = arith.constant 0 : index
    %182 = vector.load %arg1[%c0_46, %c0_47] : memref<128x512xbf16, #tpu.memory_space<vmem>>, vector<128x512xbf16>
    %cst_48 = arith.constant dense<0.000000e+00> : vector<8x512xf32>
    %183 = tpu.matmul %181, %182, %cst_48 {dimension_numbers = #tpu.dot_dimension_numbers<[1], [0], [0], [1], [0, 0, 1, 1], [], []>} : vector<8x128xbf16>, vector<128x512xbf16>, vector<8x512xf32> -> vector<8x512xf32>
    %184 = arith.addf %180, %183 : vector<8x512xf32>
    %185 = vector.extract_strided_slice %184 {offsets = [0, 0], sizes = [8, 128], strides = [1, 1]} : vector<8x512xf32> to vector<8x128xf32>
    %186 = arith.negf %185 : vector<8x128xf32>
    %187 = math.exp %186 : vector<8x128xf32>
    %cst_49 = arith.constant 1.000000e+00 : f32
    %188 = vector.broadcast %cst_49 : f32 to vector<8x128xf32>
    %189 = arith.addf %188, %187 : vector<8x128xf32>
    %190 = arith.divf %188, %189 : vector<8x128xf32>
    %191 = vector.extract_strided_slice %184 {offsets = [0, 128], sizes = [8, 128], strides = [1, 1]} : vector<8x512xf32> to vector<8x128xf32>
    %192 = arith.negf %191 : vector<8x128xf32>
    %193 = math.exp %192 : vector<8x128xf32>
    %cst_50 = arith.constant 1.000000e+00 : f32
    %194 = vector.broadcast %cst_50 : f32 to vector<8x128xf32>
    %195 = arith.addf %194, %193 : vector<8x128xf32>
    %196 = arith.divf %194, %195 : vector<8x128xf32>
    %197 = vector.extract_strided_slice %184 {offsets = [0, 256], sizes = [8, 128], strides = [1, 1]} : vector<8x512xf32> to vector<8x128xf32>
    %198 = math.tanh %197 : vector<8x128xf32>
    %199 = vector.extract_strided_slice %184 {offsets = [0, 384], sizes = [8, 128], strides = [1, 1]} : vector<8x512xf32> to vector<8x128xf32>
    %200 = arith.negf %199 : vector<8x128xf32>
    %201 = math.exp %200 : vector<8x128xf32>
    %cst_51 = arith.constant 1.000000e+00 : f32
    %202 = vector.broadcast %cst_51 : f32 to vector<8x128xf32>
    %203 = arith.addf %202, %201 : vector<8x128xf32>
    %204 = arith.divf %202, %203 : vector<8x128xf32>
    %205 = arith.mulf %196, %172 : vector<8x128xf32>
    %206 = arith.mulf %190, %198 : vector<8x128xf32>
    %207 = arith.addf %205, %206 : vector<8x128xf32>
    %208 = math.tanh %207 : vector<8x128xf32>
    %209 = arith.mulf %204, %208 : vector<8x128xf32>
    %210 = arith.index_cast %178 : i32 to index
    %c0_52 = arith.constant 0 : index
    %211 = vector.load %arg15[%210, %c0_52] : memref<64x128xf32, #tpu.memory_space<vmem>>, vector<8x128xf32>
    tpu.vector_store %arg15[%210, %c0_52], %209 {strides = array<i32>} : memref<64x128xf32, #tpu.memory_space<vmem>>, vector<8x128xf32>,
    %c6_i32 = arith.constant 6 : i32
    %c8_i32_53 = arith.constant 8 : i32
    %212 = arith.muli %c6_i32, %c8_i32_53 : i32
    %213 = tpu.assume_multiple %212, 8 : i32
    %214 = arith.index_cast %213 : i32 to index
    %c0_54 = arith.constant 0 : index
    %215 = vector.load %arg0[%214, %c0_54] : memref<64x512xf32, #tpu.memory_space<vmem>>, vector<8x512xf32>
    %216 = arith.truncf %209 : vector<8x128xf32> to vector<8x128xbf16>
    %c0_55 = arith.constant 0 : index
    %c0_56 = arith.constant 0 : index
    %217 = vector.load %arg1[%c0_55, %c0_56] : memref<128x512xbf16, #tpu.memory_space<vmem>>, vector<128x512xbf16>
    %cst_57 = arith.constant dense<0.000000e+00> : vector<8x512xf32>
    %218 = tpu.matmul %216, %217, %cst_57 {dimension_numbers = #tpu.dot_dimension_numbers<[1], [0], [0], [1], [0, 0, 1, 1], [], []>} : vector<8x128xbf16>, vector<128x512xbf16>, vector<8x512xf32> -> vector<8x512xf32>
    %219 = arith.addf %215, %218 : vector<8x512xf32>
    %220 = vector.extract_strided_slice %219 {offsets = [0, 0], sizes = [8, 128], strides = [1, 1]} : vector<8x512xf32> to vector<8x128xf32>
    %221 = arith.negf %220 : vector<8x128xf32>
    %222 = math.exp %221 : vector<8x128xf32>
    %cst_58 = arith.constant 1.000000e+00 : f32
    %223 = vector.broadcast %cst_58 : f32 to vector<8x128xf32>
    %224 = arith.addf %223, %222 : vector<8x128xf32>
    %225 = arith.divf %223, %224 : vector<8x128xf32>
    %226 = vector.extract_strided_slice %219 {offsets = [0, 128], sizes = [8, 128], strides = [1, 1]} : vector<8x512xf32> to vector<8x128xf32>
    %227 = arith.negf %226 : vector<8x128xf32>
    %228 = math.exp %227 : vector<8x128xf32>
    %cst_59 = arith.constant 1.000000e+00 : f32
    %229 = vector.broadcast %cst_59 : f32 to vector<8x128xf32>
    %230 = arith.addf %229, %228 : vector<8x128xf32>
    %231 = arith.divf %229, %230 : vector<8x128xf32>
    %232 = vector.extract_strided_slice %219 {offsets = [0, 256], sizes = [8, 128], strides = [1, 1]} : vector<8x512xf32> to vector<8x128xf32>
    %233 = math.tanh %232 : vector<8x128xf32>
    %234 = vector.extract_strided_slice %219 {offsets = [0, 384], sizes = [8, 128], strides = [1, 1]} : vector<8x512xf32> to vector<8x128xf32>
    %235 = arith.negf %234 : vector<8x128xf32>
    %236 = math.exp %235 : vector<8x128xf32>
    %cst_60 = arith.constant 1.000000e+00 : f32
    %237 = vector.broadcast %cst_60 : f32 to vector<8x128xf32>
    %238 = arith.addf %237, %236 : vector<8x128xf32>
    %239 = arith.divf %237, %238 : vector<8x128xf32>
    %240 = arith.mulf %231, %207 : vector<8x128xf32>
    %241 = arith.mulf %225, %233 : vector<8x128xf32>
    %242 = arith.addf %240, %241 : vector<8x128xf32>
    %243 = math.tanh %242 : vector<8x128xf32>
    %244 = arith.mulf %239, %243 : vector<8x128xf32>
    %245 = arith.index_cast %213 : i32 to index
    %c0_61 = arith.constant 0 : index
    %246 = vector.load %arg15[%245, %c0_61] : memref<64x128xf32, #tpu.memory_space<vmem>>, vector<8x128xf32>
    tpu.vector_store %arg15[%245, %c0_61], %244 {strides = array<i32>} : memref<64x128xf32, #tpu.memory_space<vmem>>, vector<8x128xf32>,
    %c7_i32 = arith.constant 7 : i32
    %c8_i32_62 = arith.constant 8 : i32
    %247 = arith.muli %c7_i32, %c8_i32_62 : i32
    %248 = tpu.assume_multiple %247, 8 : i32
    %249 = arith.index_cast %248 : i32 to index
    %c0_63 = arith.constant 0 : index
    %250 = vector.load %arg0[%249, %c0_63] : memref<64x512xf32, #tpu.memory_space<vmem>>, vector<8x512xf32>
    %251 = arith.truncf %244 : vector<8x128xf32> to vector<8x128xbf16>
    %c0_64 = arith.constant 0 : index
    %c0_65 = arith.constant 0 : index
    %252 = vector.load %arg1[%c0_64, %c0_65] : memref<128x512xbf16, #tpu.memory_space<vmem>>, vector<128x512xbf16>
    %cst_66 = arith.constant dense<0.000000e+00> : vector<8x512xf32>
    %253 = tpu.matmul %251, %252, %cst_66 {dimension_numbers = #tpu.dot_dimension_numbers<[1], [0], [0], [1], [0, 0, 1, 1], [], []>} : vector<8x128xbf16>, vector<128x512xbf16>, vector<8x512xf32> -> vector<8x512xf32>
    %254 = arith.addf %250, %253 : vector<8x512xf32>
    %255 = vector.extract_strided_slice %254 {offsets = [0, 0], sizes = [8, 128], strides = [1, 1]} : vector<8x512xf32> to vector<8x128xf32>
    %256 = arith.negf %255 : vector<8x128xf32>
    %257 = math.exp %256 : vector<8x128xf32>
    %cst_67 = arith.constant 1.000000e+00 : f32
    %258 = vector.broadcast %cst_67 : f32 to vector<8x128xf32>
    %259 = arith.addf %258, %257 : vector<8x128xf32>
    %260 = arith.divf %258, %259 : vector<8x128xf32>
    %261 = vector.extract_strided_slice %254 {offsets = [0, 128], sizes = [8, 128], strides = [1, 1]} : vector<8x512xf32> to vector<8x128xf32>
    %262 = arith.negf %261 : vector<8x128xf32>
    %263 = math.exp %262 : vector<8x128xf32>
    %cst_68 = arith.constant 1.000000e+00 : f32
    %264 = vector.broadcast %cst_68 : f32 to vector<8x128xf32>
    %265 = arith.addf %264, %263 : vector<8x128xf32>
    %266 = arith.divf %264, %265 : vector<8x128xf32>
    %267 = vector.extract_strided_slice %254 {offsets = [0, 256], sizes = [8, 128], strides = [1, 1]} : vector<8x512xf32> to vector<8x128xf32>
    %268 = math.tanh %267 : vector<8x128xf32>
    %269 = vector.extract_strided_slice %254 {offsets = [0, 384], sizes = [8, 128], strides = [1, 1]} : vector<8x512xf32> to vector<8x128xf32>
    %270 = arith.negf %269 : vector<8x128xf32>
    %271 = math.exp %270 : vector<8x128xf32>
    %cst_69 = arith.constant 1.000000e+00 : f32
    %272 = vector.broadcast %cst_69 : f32 to vector<8x128xf32>
    %273 = arith.addf %272, %271 : vector<8x128xf32>
    %274 = arith.divf %272, %273 : vector<8x128xf32>
    %275 = arith.mulf %266, %242 : vector<8x128xf32>
    %276 = arith.mulf %260, %268 : vector<8x128xf32>
    %277 = arith.addf %275, %276 : vector<8x128xf32>
    %278 = math.tanh %277 : vector<8x128xf32>
    %279 = arith.mulf %274, %278 : vector<8x128xf32>
    %280 = arith.index_cast %248 : i32 to index
    %c0_70 = arith.constant 0 : index
    %281 = vector.load %arg15[%280, %c0_70] : memref<64x128xf32, #tpu.memory_space<vmem>>, vector<8x128xf32>
    tpu.vector_store %arg15[%280, %c0_70], %279 {strides = array<i32>} : memref<64x128xf32, #tpu.memory_space<vmem>>, vector<8x128xf32>,
    %c8_i32_71 = arith.constant 8 : i32
    %c0_72 = arith.constant 0 : index
    %c0_73 = arith.constant 0 : index
    %282 = vector.load %arg15[%c0_72, %c0_73] : memref<64x128xf32, #tpu.memory_space<vmem>>, vector<64x128xf32>
    %283 = arith.truncf %282 : vector<64x128xf32> to vector<64x128xbf16>
    %c0_74 = arith.constant 0 : index
    %c0_75 = arith.constant 0 : index
    %284 = vector.load %arg2[%c0_74, %c0_75] : memref<128x512xbf16, #tpu.memory_space<vmem>>, vector<128x512xbf16>
    %cst_76 = arith.constant dense<0.000000e+00> : vector<64x512xf32>
    %285 = tpu.matmul %283, %284, %cst_76 {dimension_numbers = #tpu.dot_dimension_numbers<[1], [0], [0], [1], [0, 0, 1, 1], [], []>} : vector<64x128xbf16>, vector<128x512xbf16>, vector<64x512xf32> -> vector<64x512xf32>
    %c0_77 = arith.constant 0 : index
    %c0_78 = arith.constant 0 : index
    %286 = vector.load %arg3[%c0_77, %c0_78] : memref<1x512xf32, #tpu.memory_space<vmem>>, vector<1x512xf32>
    %287 = vector.broadcast %286 : vector<1x512xf32> to vector<64x512xf32>
    %288 = arith.addf %285, %287 : vector<64x512xf32>
    %c0_79 = arith.constant 0 : index
    %c0_80 = arith.constant 0 : index
    %289 = vector.load %arg14[%c0_79, %c0_80] : memref<64x512xf32, #tpu.memory_space<vmem>>, vector<64x512xf32>
    tpu.vector_store %arg14[%c0_79, %c0_80], %288 {strides = array<i32>} : memref<64x512xf32, #tpu.memory_space<vmem>>, vector<64x512xf32>,
    %cst_81 = arith.constant 0.000000e+00 : f32
    %290 = vector.broadcast %cst_81 : f32 to vector<8x128xf32>
    %cst_82 = arith.constant 0.000000e+00 : f32
    %291 = vector.broadcast %cst_82 : f32 to vector<8x128xf32>
    %c0_i32_83 = arith.constant 0 : i32
    %c8_i32_84 = arith.constant 8 : i32
    %292 = arith.muli %c0_i32_83, %c8_i32_84 : i32
    %293 = tpu.assume_multiple %292, 8 : i32
    %294 = arith.index_cast %293 : i32 to index
    %c0_85 = arith.constant 0 : index
    %295 = vector.load %arg14[%294, %c0_85] : memref<64x512xf32, #tpu.memory_space<vmem>>, vector<8x512xf32>
    %296 = arith.truncf %290 : vector<8x128xf32> to vector<8x128xbf16>
    %c0_86 = arith.constant 0 : index
    %c0_87 = arith.constant 0 : index
    %297 = vector.load %arg4[%c0_86, %c0_87] : memref<128x512xbf16, #tpu.memory_space<vmem>>, vector<128x512xbf16>
    %cst_88 = arith.constant dense<0.000000e+00> : vector<8x512xf32>
    %298 = tpu.matmul %296, %297, %cst_88 {dimension_numbers = #tpu.dot_dimension_numbers<[1], [0], [0], [1], [0, 0, 1, 1], [], []>} : vector<8x128xbf16>, vector<128x512xbf16>, vector<8x512xf32> -> vector<8x512xf32>
    %299 = arith.addf %295, %298 : vector<8x512xf32>
    %300 = vector.extract_strided_slice %299 {offsets = [0, 0], sizes = [8, 128], strides = [1, 1]} : vector<8x512xf32> to vector<8x128xf32>
    %301 = arith.negf %300 : vector<8x128xf32>
    %302 = math.exp %301 : vector<8x128xf32>
    %cst_89 = arith.constant 1.000000e+00 : f32
    %303 = vector.broadcast %cst_89 : f32 to vector<8x128xf32>
    %304 = arith.addf %303, %302 : vector<8x128xf32>
    %305 = arith.divf %303, %304 : vector<8x128xf32>
    %306 = vector.extract_strided_slice %299 {offsets = [0, 128], sizes = [8, 128], strides = [1, 1]} : vector<8x512xf32> to vector<8x128xf32>
    %307 = arith.negf %306 : vector<8x128xf32>
    %308 = math.exp %307 : vector<8x128xf32>
    %cst_90 = arith.constant 1.000000e+00 : f32
    %309 = vector.broadcast %cst_90 : f32 to vector<8x128xf32>
    %310 = arith.addf %309, %308 : vector<8x128xf32>
    %311 = arith.divf %309, %310 : vector<8x128xf32>
    %312 = vector.extract_strided_slice %299 {offsets = [0, 256], sizes = [8, 128], strides = [1, 1]} : vector<8x512xf32> to vector<8x128xf32>
    %313 = math.tanh %312 : vector<8x128xf32>
    %314 = vector.extract_strided_slice %299 {offsets = [0, 384], sizes = [8, 128], strides = [1, 1]} : vector<8x512xf32> to vector<8x128xf32>
    %315 = arith.negf %314 : vector<8x128xf32>
    %316 = math.exp %315 : vector<8x128xf32>
    %cst_91 = arith.constant 1.000000e+00 : f32
    %317 = vector.broadcast %cst_91 : f32 to vector<8x128xf32>
    %318 = arith.addf %317, %316 : vector<8x128xf32>
    %319 = arith.divf %317, %318 : vector<8x128xf32>
    %320 = arith.mulf %311, %291 : vector<8x128xf32>
    %321 = arith.mulf %305, %313 : vector<8x128xf32>
    %322 = arith.addf %320, %321 : vector<8x128xf32>
    %323 = math.tanh %322 : vector<8x128xf32>
    %324 = arith.mulf %319, %323 : vector<8x128xf32>
    %c1_i32_92 = arith.constant 1 : i32
    %c8_i32_93 = arith.constant 8 : i32
    %325 = arith.muli %c1_i32_92, %c8_i32_93 : i32
    %326 = tpu.assume_multiple %325, 8 : i32
    %327 = arith.index_cast %326 : i32 to index
    %c0_94 = arith.constant 0 : index
    %328 = vector.load %arg14[%327, %c0_94] : memref<64x512xf32, #tpu.memory_space<vmem>>, vector<8x512xf32>
    %329 = arith.truncf %324 : vector<8x128xf32> to vector<8x128xbf16>
    %c0_95 = arith.constant 0 : index
    %c0_96 = arith.constant 0 : index
    %330 = vector.load %arg4[%c0_95, %c0_96] : memref<128x512xbf16, #tpu.memory_space<vmem>>, vector<128x512xbf16>
    %cst_97 = arith.constant dense<0.000000e+00> : vector<8x512xf32>
    %331 = tpu.matmul %329, %330, %cst_97 {dimension_numbers = #tpu.dot_dimension_numbers<[1], [0], [0], [1], [0, 0, 1, 1], [], []>} : vector<8x128xbf16>, vector<128x512xbf16>, vector<8x512xf32> -> vector<8x512xf32>
    %332 = arith.addf %328, %331 : vector<8x512xf32>
    %333 = vector.extract_strided_slice %332 {offsets = [0, 0], sizes = [8, 128], strides = [1, 1]} : vector<8x512xf32> to vector<8x128xf32>
    %334 = arith.negf %333 : vector<8x128xf32>
    %335 = math.exp %334 : vector<8x128xf32>
    %cst_98 = arith.constant 1.000000e+00 : f32
    %336 = vector.broadcast %cst_98 : f32 to vector<8x128xf32>
    %337 = arith.addf %336, %335 : vector<8x128xf32>
    %338 = arith.divf %336, %337 : vector<8x128xf32>
    %339 = vector.extract_strided_slice %332 {offsets = [0, 128], sizes = [8, 128], strides = [1, 1]} : vector<8x512xf32> to vector<8x128xf32>
    %340 = arith.negf %339 : vector<8x128xf32>
    %341 = math.exp %340 : vector<8x128xf32>
    %cst_99 = arith.constant 1.000000e+00 : f32
    %342 = vector.broadcast %cst_99 : f32 to vector<8x128xf32>
    %343 = arith.addf %342, %341 : vector<8x128xf32>
    %344 = arith.divf %342, %343 : vector<8x128xf32>
    %345 = vector.extract_strided_slice %332 {offsets = [0, 256], sizes = [8, 128], strides = [1, 1]} : vector<8x512xf32> to vector<8x128xf32>
    %346 = math.tanh %345 : vector<8x128xf32>
    %347 = vector.extract_strided_slice %332 {offsets = [0, 384], sizes = [8, 128], strides = [1, 1]} : vector<8x512xf32> to vector<8x128xf32>
    %348 = arith.negf %347 : vector<8x128xf32>
    %349 = math.exp %348 : vector<8x128xf32>
    %cst_100 = arith.constant 1.000000e+00 : f32
    %350 = vector.broadcast %cst_100 : f32 to vector<8x128xf32>
    %351 = arith.addf %350, %349 : vector<8x128xf32>
    %352 = arith.divf %350, %351 : vector<8x128xf32>
    %353 = arith.mulf %344, %322 : vector<8x128xf32>
    %354 = arith.mulf %338, %346 : vector<8x128xf32>
    %355 = arith.addf %353, %354 : vector<8x128xf32>
    %356 = math.tanh %355 : vector<8x128xf32>
    %357 = arith.mulf %352, %356 : vector<8x128xf32>
    %c2_i32_101 = arith.constant 2 : i32
    %c8_i32_102 = arith.constant 8 : i32
    %358 = arith.muli %c2_i32_101, %c8_i32_102 : i32
    %359 = tpu.assume_multiple %358, 8 : i32
    %360 = arith.index_cast %359 : i32 to index
    %c0_103 = arith.constant 0 : index
    %361 = vector.load %arg14[%360, %c0_103] : memref<64x512xf32, #tpu.memory_space<vmem>>, vector<8x512xf32>
    %362 = arith.truncf %357 : vector<8x128xf32> to vector<8x128xbf16>
    %c0_104 = arith.constant 0 : index
    %c0_105 = arith.constant 0 : index
    %363 = vector.load %arg4[%c0_104, %c0_105] : memref<128x512xbf16, #tpu.memory_space<vmem>>, vector<128x512xbf16>
    %cst_106 = arith.constant dense<0.000000e+00> : vector<8x512xf32>
    %364 = tpu.matmul %362, %363, %cst_106 {dimension_numbers = #tpu.dot_dimension_numbers<[1], [0], [0], [1], [0, 0, 1, 1], [], []>} : vector<8x128xbf16>, vector<128x512xbf16>, vector<8x512xf32> -> vector<8x512xf32>
    %365 = arith.addf %361, %364 : vector<8x512xf32>
    %366 = vector.extract_strided_slice %365 {offsets = [0, 0], sizes = [8, 128], strides = [1, 1]} : vector<8x512xf32> to vector<8x128xf32>
    %367 = arith.negf %366 : vector<8x128xf32>
    %368 = math.exp %367 : vector<8x128xf32>
    %cst_107 = arith.constant 1.000000e+00 : f32
    %369 = vector.broadcast %cst_107 : f32 to vector<8x128xf32>
    %370 = arith.addf %369, %368 : vector<8x128xf32>
    %371 = arith.divf %369, %370 : vector<8x128xf32>
    %372 = vector.extract_strided_slice %365 {offsets = [0, 128], sizes = [8, 128], strides = [1, 1]} : vector<8x512xf32> to vector<8x128xf32>
    %373 = arith.negf %372 : vector<8x128xf32>
    %374 = math.exp %373 : vector<8x128xf32>
    %cst_108 = arith.constant 1.000000e+00 : f32
    %375 = vector.broadcast %cst_108 : f32 to vector<8x128xf32>
    %376 = arith.addf %375, %374 : vector<8x128xf32>
    %377 = arith.divf %375, %376 : vector<8x128xf32>
    %378 = vector.extract_strided_slice %365 {offsets = [0, 256], sizes = [8, 128], strides = [1, 1]} : vector<8x512xf32> to vector<8x128xf32>
    %379 = math.tanh %378 : vector<8x128xf32>
    %380 = vector.extract_strided_slice %365 {offsets = [0, 384], sizes = [8, 128], strides = [1, 1]} : vector<8x512xf32> to vector<8x128xf32>
    %381 = arith.negf %380 : vector<8x128xf32>
    %382 = math.exp %381 : vector<8x128xf32>
    %cst_109 = arith.constant 1.000000e+00 : f32
    %383 = vector.broadcast %cst_109 : f32 to vector<8x128xf32>
    %384 = arith.addf %383, %382 : vector<8x128xf32>
    %385 = arith.divf %383, %384 : vector<8x128xf32>
    %386 = arith.mulf %377, %355 : vector<8x128xf32>
    %387 = arith.mulf %371, %379 : vector<8x128xf32>
    %388 = arith.addf %386, %387 : vector<8x128xf32>
    %389 = math.tanh %388 : vector<8x128xf32>
    %390 = arith.mulf %385, %389 : vector<8x128xf32>
    %c3_i32_110 = arith.constant 3 : i32
    %c8_i32_111 = arith.constant 8 : i32
    %391 = arith.muli %c3_i32_110, %c8_i32_111 : i32
    %392 = tpu.assume_multiple %391, 8 : i32
    %393 = arith.index_cast %392 : i32 to index
    %c0_112 = arith.constant 0 : index
    %394 = vector.load %arg14[%393, %c0_112] : memref<64x512xf32, #tpu.memory_space<vmem>>, vector<8x512xf32>
    %395 = arith.truncf %390 : vector<8x128xf32> to vector<8x128xbf16>
    %c0_113 = arith.constant 0 : index
    %c0_114 = arith.constant 0 : index
    %396 = vector.load %arg4[%c0_113, %c0_114] : memref<128x512xbf16, #tpu.memory_space<vmem>>, vector<128x512xbf16>
    %cst_115 = arith.constant dense<0.000000e+00> : vector<8x512xf32>
    %397 = tpu.matmul %395, %396, %cst_115 {dimension_numbers = #tpu.dot_dimension_numbers<[1], [0], [0], [1], [0, 0, 1, 1], [], []>} : vector<8x128xbf16>, vector<128x512xbf16>, vector<8x512xf32> -> vector<8x512xf32>
    %398 = arith.addf %394, %397 : vector<8x512xf32>
    %399 = vector.extract_strided_slice %398 {offsets = [0, 0], sizes = [8, 128], strides = [1, 1]} : vector<8x512xf32> to vector<8x128xf32>
    %400 = arith.negf %399 : vector<8x128xf32>
    %401 = math.exp %400 : vector<8x128xf32>
    %cst_116 = arith.constant 1.000000e+00 : f32
    %402 = vector.broadcast %cst_116 : f32 to vector<8x128xf32>
    %403 = arith.addf %402, %401 : vector<8x128xf32>
    %404 = arith.divf %402, %403 : vector<8x128xf32>
    %405 = vector.extract_strided_slice %398 {offsets = [0, 128], sizes = [8, 128], strides = [1, 1]} : vector<8x512xf32> to vector<8x128xf32>
    %406 = arith.negf %405 : vector<8x128xf32>
    %407 = math.exp %406 : vector<8x128xf32>
    %cst_117 = arith.constant 1.000000e+00 : f32
    %408 = vector.broadcast %cst_117 : f32 to vector<8x128xf32>
    %409 = arith.addf %408, %407 : vector<8x128xf32>
    %410 = arith.divf %408, %409 : vector<8x128xf32>
    %411 = vector.extract_strided_slice %398 {offsets = [0, 256], sizes = [8, 128], strides = [1, 1]} : vector<8x512xf32> to vector<8x128xf32>
    %412 = math.tanh %411 : vector<8x128xf32>
    %413 = vector.extract_strided_slice %398 {offsets = [0, 384], sizes = [8, 128], strides = [1, 1]} : vector<8x512xf32> to vector<8x128xf32>
    %414 = arith.negf %413 : vector<8x128xf32>
    %415 = math.exp %414 : vector<8x128xf32>
    %cst_118 = arith.constant 1.000000e+00 : f32
    %416 = vector.broadcast %cst_118 : f32 to vector<8x128xf32>
    %417 = arith.addf %416, %415 : vector<8x128xf32>
    %418 = arith.divf %416, %417 : vector<8x128xf32>
    %419 = arith.mulf %410, %388 : vector<8x128xf32>
    %420 = arith.mulf %404, %412 : vector<8x128xf32>
    %421 = arith.addf %419, %420 : vector<8x128xf32>
    %422 = math.tanh %421 : vector<8x128xf32>
    %423 = arith.mulf %418, %422 : vector<8x128xf32>
    %c4_i32_119 = arith.constant 4 : i32
    %c8_i32_120 = arith.constant 8 : i32
    %424 = arith.muli %c4_i32_119, %c8_i32_120 : i32
    %425 = tpu.assume_multiple %424, 8 : i32
    %426 = arith.index_cast %425 : i32 to index
    %c0_121 = arith.constant 0 : index
    %427 = vector.load %arg14[%426, %c0_121] : memref<64x512xf32, #tpu.memory_space<vmem>>, vector<8x512xf32>
    %428 = arith.truncf %423 : vector<8x128xf32> to vector<8x128xbf16>
    %c0_122 = arith.constant 0 : index
    %c0_123 = arith.constant 0 : index
    %429 = vector.load %arg4[%c0_122, %c0_123] : memref<128x512xbf16, #tpu.memory_space<vmem>>, vector<128x512xbf16>
    %cst_124 = arith.constant dense<0.000000e+00> : vector<8x512xf32>
    %430 = tpu.matmul %428, %429, %cst_124 {dimension_numbers = #tpu.dot_dimension_numbers<[1], [0], [0], [1], [0, 0, 1, 1], [], []>} : vector<8x128xbf16>, vector<128x512xbf16>, vector<8x512xf32> -> vector<8x512xf32>
    %431 = arith.addf %427, %430 : vector<8x512xf32>
    %432 = vector.extract_strided_slice %431 {offsets = [0, 0], sizes = [8, 128], strides = [1, 1]} : vector<8x512xf32> to vector<8x128xf32>
    %433 = arith.negf %432 : vector<8x128xf32>
    %434 = math.exp %433 : vector<8x128xf32>
    %cst_125 = arith.constant 1.000000e+00 : f32
    %435 = vector.broadcast %cst_125 : f32 to vector<8x128xf32>
    %436 = arith.addf %435, %434 : vector<8x128xf32>
    %437 = arith.divf %435, %436 : vector<8x128xf32>
    %438 = vector.extract_strided_slice %431 {offsets = [0, 128], sizes = [8, 128], strides = [1, 1]} : vector<8x512xf32> to vector<8x128xf32>
    %439 = arith.negf %438 : vector<8x128xf32>
    %440 = math.exp %439 : vector<8x128xf32>
    %cst_126 = arith.constant 1.000000e+00 : f32
    %441 = vector.broadcast %cst_126 : f32 to vector<8x128xf32>
    %442 = arith.addf %441, %440 : vector<8x128xf32>
    %443 = arith.divf %441, %442 : vector<8x128xf32>
    %444 = vector.extract_strided_slice %431 {offsets = [0, 256], sizes = [8, 128], strides = [1, 1]} : vector<8x512xf32> to vector<8x128xf32>
    %445 = math.tanh %444 : vector<8x128xf32>
    %446 = vector.extract_strided_slice %431 {offsets = [0, 384], sizes = [8, 128], strides = [1, 1]} : vector<8x512xf32> to vector<8x128xf32>
    %447 = arith.negf %446 : vector<8x128xf32>
    %448 = math.exp %447 : vector<8x128xf32>
    %cst_127 = arith.constant 1.000000e+00 : f32
    %449 = vector.broadcast %cst_127 : f32 to vector<8x128xf32>
    %450 = arith.addf %449, %448 : vector<8x128xf32>
    %451 = arith.divf %449, %450 : vector<8x128xf32>
    %452 = arith.mulf %443, %421 : vector<8x128xf32>
    %453 = arith.mulf %437, %445 : vector<8x128xf32>
    %454 = arith.addf %452, %453 : vector<8x128xf32>
    %455 = math.tanh %454 : vector<8x128xf32>
    %456 = arith.mulf %451, %455 : vector<8x128xf32>
    %c5_i32_128 = arith.constant 5 : i32
    %c8_i32_129 = arith.constant 8 : i32
    %457 = arith.muli %c5_i32_128, %c8_i32_129 : i32
    %458 = tpu.assume_multiple %457, 8 : i32
    %459 = arith.index_cast %458 : i32 to index
    %c0_130 = arith.constant 0 : index
    %460 = vector.load %arg14[%459, %c0_130] : memref<64x512xf32, #tpu.memory_space<vmem>>, vector<8x512xf32>
    %461 = arith.truncf %456 : vector<8x128xf32> to vector<8x128xbf16>
    %c0_131 = arith.constant 0 : index
    %c0_132 = arith.constant 0 : index
    %462 = vector.load %arg4[%c0_131, %c0_132] : memref<128x512xbf16, #tpu.memory_space<vmem>>, vector<128x512xbf16>
    %cst_133 = arith.constant dense<0.000000e+00> : vector<8x512xf32>
    %463 = tpu.matmul %461, %462, %cst_133 {dimension_numbers = #tpu.dot_dimension_numbers<[1], [0], [0], [1], [0, 0, 1, 1], [], []>} : vector<8x128xbf16>, vector<128x512xbf16>, vector<8x512xf32> -> vector<8x512xf32>
    %464 = arith.addf %460, %463 : vector<8x512xf32>
    %465 = vector.extract_strided_slice %464 {offsets = [0, 0], sizes = [8, 128], strides = [1, 1]} : vector<8x512xf32> to vector<8x128xf32>
    %466 = arith.negf %465 : vector<8x128xf32>
    %467 = math.exp %466 : vector<8x128xf32>
    %cst_134 = arith.constant 1.000000e+00 : f32
    %468 = vector.broadcast %cst_134 : f32 to vector<8x128xf32>
    %469 = arith.addf %468, %467 : vector<8x128xf32>
    %470 = arith.divf %468, %469 : vector<8x128xf32>
    %471 = vector.extract_strided_slice %464 {offsets = [0, 128], sizes = [8, 128], strides = [1, 1]} : vector<8x512xf32> to vector<8x128xf32>
    %472 = arith.negf %471 : vector<8x128xf32>
    %473 = math.exp %472 : vector<8x128xf32>
    %cst_135 = arith.constant 1.000000e+00 : f32
    %474 = vector.broadcast %cst_135 : f32 to vector<8x128xf32>
    %475 = arith.addf %474, %473 : vector<8x128xf32>
    %476 = arith.divf %474, %475 : vector<8x128xf32>
    %477 = vector.extract_strided_slice %464 {offsets = [0, 256], sizes = [8, 128], strides = [1, 1]} : vector<8x512xf32> to vector<8x128xf32>
    %478 = math.tanh %477 : vector<8x128xf32>
    %479 = vector.extract_strided_slice %464 {offsets = [0, 384], sizes = [8, 128], strides = [1, 1]} : vector<8x512xf32> to vector<8x128xf32>
    %480 = arith.negf %479 : vector<8x128xf32>
    %481 = math.exp %480 : vector<8x128xf32>
    %cst_136 = arith.constant 1.000000e+00 : f32
    %482 = vector.broadcast %cst_136 : f32 to vector<8x128xf32>
    %483 = arith.addf %482, %481 : vector<8x128xf32>
    %484 = arith.divf %482, %483 : vector<8x128xf32>
    %485 = arith.mulf %476, %454 : vector<8x128xf32>
    %486 = arith.mulf %470, %478 : vector<8x128xf32>
    %487 = arith.addf %485, %486 : vector<8x128xf32>
    %488 = math.tanh %487 : vector<8x128xf32>
    %489 = arith.mulf %484, %488 : vector<8x128xf32>
    %c6_i32_137 = arith.constant 6 : i32
    %c8_i32_138 = arith.constant 8 : i32
    %490 = arith.muli %c6_i32_137, %c8_i32_138 : i32
    %491 = tpu.assume_multiple %490, 8 : i32
    %492 = arith.index_cast %491 : i32 to index
    %c0_139 = arith.constant 0 : index
    %493 = vector.load %arg14[%492, %c0_139] : memref<64x512xf32, #tpu.memory_space<vmem>>, vector<8x512xf32>
    %494 = arith.truncf %489 : vector<8x128xf32> to vector<8x128xbf16>
    %c0_140 = arith.constant 0 : index
    %c0_141 = arith.constant 0 : index
    %495 = vector.load %arg4[%c0_140, %c0_141] : memref<128x512xbf16, #tpu.memory_space<vmem>>, vector<128x512xbf16>
    %cst_142 = arith.constant dense<0.000000e+00> : vector<8x512xf32>
    %496 = tpu.matmul %494, %495, %cst_142 {dimension_numbers = #tpu.dot_dimension_numbers<[1], [0], [0], [1], [0, 0, 1, 1], [], []>} : vector<8x128xbf16>, vector<128x512xbf16>, vector<8x512xf32> -> vector<8x512xf32>
    %497 = arith.addf %493, %496 : vector<8x512xf32>
    %498 = vector.extract_strided_slice %497 {offsets = [0, 0], sizes = [8, 128], strides = [1, 1]} : vector<8x512xf32> to vector<8x128xf32>
    %499 = arith.negf %498 : vector<8x128xf32>
    %500 = math.exp %499 : vector<8x128xf32>
    %cst_143 = arith.constant 1.000000e+00 : f32
    %501 = vector.broadcast %cst_143 : f32 to vector<8x128xf32>
    %502 = arith.addf %501, %500 : vector<8x128xf32>
    %503 = arith.divf %501, %502 : vector<8x128xf32>
    %504 = vector.extract_strided_slice %497 {offsets = [0, 128], sizes = [8, 128], strides = [1, 1]} : vector<8x512xf32> to vector<8x128xf32>
    %505 = arith.negf %504 : vector<8x128xf32>
    %506 = math.exp %505 : vector<8x128xf32>
    %cst_144 = arith.constant 1.000000e+00 : f32
    %507 = vector.broadcast %cst_144 : f32 to vector<8x128xf32>
    %508 = arith.addf %507, %506 : vector<8x128xf32>
    %509 = arith.divf %507, %508 : vector<8x128xf32>
    %510 = vector.extract_strided_slice %497 {offsets = [0, 256], sizes = [8, 128], strides = [1, 1]} : vector<8x512xf32> to vector<8x128xf32>
    %511 = math.tanh %510 : vector<8x128xf32>
    %512 = vector.extract_strided_slice %497 {offsets = [0, 384], sizes = [8, 128], strides = [1, 1]} : vector<8x512xf32> to vector<8x128xf32>
    %513 = arith.negf %512 : vector<8x128xf32>
    %514 = math.exp %513 : vector<8x128xf32>
    %cst_145 = arith.constant 1.000000e+00 : f32
    %515 = vector.broadcast %cst_145 : f32 to vector<8x128xf32>
    %516 = arith.addf %515, %514 : vector<8x128xf32>
    %517 = arith.divf %515, %516 : vector<8x128xf32>
    %518 = arith.mulf %509, %487 : vector<8x128xf32>
    %519 = arith.mulf %503, %511 : vector<8x128xf32>
    %520 = arith.addf %518, %519 : vector<8x128xf32>
    %521 = math.tanh %520 : vector<8x128xf32>
    %522 = arith.mulf %517, %521 : vector<8x128xf32>
    %c7_i32_146 = arith.constant 7 : i32
    %c8_i32_147 = arith.constant 8 : i32
    %523 = arith.muli %c7_i32_146, %c8_i32_147 : i32
    %524 = tpu.assume_multiple %523, 8 : i32
    %525 = arith.index_cast %524 : i32 to index
    %c0_148 = arith.constant 0 : index
    %526 = vector.load %arg14[%525, %c0_148] : memref<64x512xf32, #tpu.memory_space<vmem>>, vector<8x512xf32>
    %527 = arith.truncf %522 : vector<8x128xf32> to vector<8x128xbf16>
    %c0_149 = arith.constant 0 : index
    %c0_150 = arith.constant 0 : index
    %528 = vector.load %arg4[%c0_149, %c0_150] : memref<128x512xbf16, #tpu.memory_space<vmem>>, vector<128x512xbf16>
    %cst_151 = arith.constant dense<0.000000e+00> : vector<8x512xf32>
    %529 = tpu.matmul %527, %528, %cst_151 {dimension_numbers = #tpu.dot_dimension_numbers<[1], [0], [0], [1], [0, 0, 1, 1], [], []>} : vector<8x128xbf16>, vector<128x512xbf16>, vector<8x512xf32> -> vector<8x512xf32>
    %530 = arith.addf %526, %529 : vector<8x512xf32>
    %531 = vector.extract_strided_slice %530 {offsets = [0, 0], sizes = [8, 128], strides = [1, 1]} : vector<8x512xf32> to vector<8x128xf32>
    %532 = arith.negf %531 : vector<8x128xf32>
    %533 = math.exp %532 : vector<8x128xf32>
    %cst_152 = arith.constant 1.000000e+00 : f32
    %534 = vector.broadcast %cst_152 : f32 to vector<8x128xf32>
    %535 = arith.addf %534, %533 : vector<8x128xf32>
    %536 = arith.divf %534, %535 : vector<8x128xf32>
    %537 = vector.extract_strided_slice %530 {offsets = [0, 128], sizes = [8, 128], strides = [1, 1]} : vector<8x512xf32> to vector<8x128xf32>
    %538 = arith.negf %537 : vector<8x128xf32>
    %539 = math.exp %538 : vector<8x128xf32>
    %cst_153 = arith.constant 1.000000e+00 : f32
    %540 = vector.broadcast %cst_153 : f32 to vector<8x128xf32>
    %541 = arith.addf %540, %539 : vector<8x128xf32>
    %542 = arith.divf %540, %541 : vector<8x128xf32>
    %543 = vector.extract_strided_slice %530 {offsets = [0, 256], sizes = [8, 128], strides = [1, 1]} : vector<8x512xf32> to vector<8x128xf32>
    %544 = math.tanh %543 : vector<8x128xf32>
    %545 = vector.extract_strided_slice %530 {offsets = [0, 384], sizes = [8, 128], strides = [1, 1]} : vector<8x512xf32> to vector<8x128xf32>
    %546 = arith.negf %545 : vector<8x128xf32>
    %547 = math.exp %546 : vector<8x128xf32>
    %cst_154 = arith.constant 1.000000e+00 : f32
    %548 = vector.broadcast %cst_154 : f32 to vector<8x128xf32>
    %549 = arith.addf %548, %547 : vector<8x128xf32>
    %550 = arith.divf %548, %549 : vector<8x128xf32>
    %551 = arith.mulf %542, %520 : vector<8x128xf32>
    %552 = arith.mulf %536, %544 : vector<8x128xf32>
    %553 = arith.addf %551, %552 : vector<8x128xf32>
    %554 = math.tanh %553 : vector<8x128xf32>
    %555 = arith.mulf %550, %554 : vector<8x128xf32>
    %c8_i32_155 = arith.constant 8 : i32
    %c0_156 = arith.constant 0 : index
    %c0_157 = arith.constant 0 : index
    %556 = vector.load %arg5[%c0_156, %c0_157] : memref<128x8xf32, #tpu.memory_space<vmem>>, vector<128x8xf32>
    %cst_158 = arith.constant dense<0.000000e+00> : vector<8x8xf32>
    %557 = tpu.matmul %555, %556, %cst_158 {dimension_numbers = #tpu.dot_dimension_numbers<[1], [0], [0], [1], [0, 0, 1, 1], [], []>} : vector<8x128xf32>, vector<128x8xf32>, vector<8x8xf32> -> vector<8x8xf32>
    %c0_159 = arith.constant 0 : index
    %c0_160 = arith.constant 0 : index
    %558 = vector.load %arg6[%c0_159, %c0_160] : memref<1x8xf32, #tpu.memory_space<vmem>>, vector<1x8xf32>
    %559 = vector.broadcast %558 : vector<1x8xf32> to vector<8x8xf32>
    %560 = arith.addf %557, %559 : vector<8x8xf32>
    %cst_161 = arith.constant 0.000000e+00 : f32
    %561 = vector.broadcast %cst_161 : f32 to vector<8x8xf32>
    %562 = arith.maximumf %560, %561 : vector<8x8xf32>
    %c0_162 = arith.constant 0 : index
    %c0_163 = arith.constant 0 : index
    %563 = vector.load %arg7[%c0_162, %c0_163] : memref<8x4xf32, #tpu.memory_space<vmem>>, vector<8x4xf32>
    %cst_164 = arith.constant dense<0.000000e+00> : vector<8x4xf32>
    %564 = tpu.matmul %562, %563, %cst_164 {dimension_numbers = #tpu.dot_dimension_numbers<[1], [0], [0], [1], [0, 0, 1, 1], [], []>} : vector<8x8xf32>, vector<8x4xf32>, vector<8x4xf32> -> vector<8x4xf32>
    %c0_165 = arith.constant 0 : index
    %c0_166 = arith.constant 0 : index
    %565 = vector.load %arg8[%c0_165, %c0_166] : memref<1x4xf32, #tpu.memory_space<vmem>>, vector<1x4xf32>
    %566 = vector.broadcast %565 : vector<1x4xf32> to vector<8x4xf32>
    %567 = arith.addf %564, %566 : vector<8x4xf32>
    %cst_167 = arith.constant 0.000000e+00 : f32
    %568 = vector.broadcast %cst_167 : f32 to vector<8x4xf32>
    %569 = arith.maximumf %567, %568 : vector<8x4xf32>
    %c0_168 = arith.constant 0 : index
    %c0_169 = arith.constant 0 : index
    %570 = vector.load %arg9[%c0_168, %c0_169] : memref<4x2xf32, #tpu.memory_space<vmem>>, vector<4x2xf32>
    %cst_170 = arith.constant dense<0.000000e+00> : vector<8x2xf32>
    %571 = tpu.matmul %569, %570, %cst_170 {dimension_numbers = #tpu.dot_dimension_numbers<[1], [0], [0], [1], [0, 0, 1, 1], [], []>} : vector<8x4xf32>, vector<4x2xf32>, vector<8x2xf32> -> vector<8x2xf32>
    %c0_171 = arith.constant 0 : index
    %c0_172 = arith.constant 0 : index
    %572 = vector.load %arg10[%c0_171, %c0_172] : memref<1x2xf32, #tpu.memory_space<vmem>>, vector<1x2xf32>
    %573 = vector.broadcast %572 : vector<1x2xf32> to vector<8x2xf32>
    %574 = arith.addf %571, %573 : vector<8x2xf32>
    %cst_173 = arith.constant 0.000000e+00 : f32
    %575 = vector.broadcast %cst_173 : f32 to vector<8x2xf32>
    %576 = arith.maximumf %574, %575 : vector<8x2xf32>
    %c0_174 = arith.constant 0 : index
    %c0_175 = arith.constant 0 : index
    %577 = vector.load %arg11[%c0_174, %c0_175] : memref<2x4xf32, #tpu.memory_space<vmem>>, vector<2x4xf32>
    %cst_176 = arith.constant dense<0.000000e+00> : vector<8x4xf32>
    %578 = tpu.matmul %576, %577, %cst_176 {dimension_numbers = #tpu.dot_dimension_numbers<[1], [0], [0], [1], [0, 0, 1, 1], [], []>} : vector<8x2xf32>, vector<2x4xf32>, vector<8x4xf32> -> vector<8x4xf32>
    %c0_177 = arith.constant 0 : index
    %c0_178 = arith.constant 0 : index
    %579 = vector.load %arg12[%c0_177, %c0_178] : memref<1x4xf32, #tpu.memory_space<vmem>>, vector<1x4xf32>
    %580 = vector.broadcast %579 : vector<1x4xf32> to vector<8x4xf32>
    %581 = arith.addf %578, %580 : vector<8x4xf32>
    %c0_179 = arith.constant 0 : index
    %c0_180 = arith.constant 0 : index
    %582 = vector.load %arg13[%c0_179, %c0_180] : memref<8x4xf32, #tpu.memory_space<vmem>>, vector<8x4xf32>
    tpu.vector_store %arg13[%c0_179, %c0_180], %581 {strides = array<i32>} : memref<8x4xf32, #tpu.memory_space<vmem>>, vector<8x4xf32>,
    return
  }
}

</mosaic_0001>

<llo_original>
// kernel: lstm_model_forward.1
$region0: #{lstm_model_forward.1}
  #allocation0 [shape = 'u32[]', space=smem, size = 0x4, offset = 0x4, fixed_abs, tag = 'smem constant byte address 0x4 - core index']
  #allocation1 [shape = 'u32[72,128]{1,0:T(1,128)}', space=vmem, size = 0x9000, scoped, tag = 'internal scratch']
  #allocation2 [shape = 'f32[64,512]{1,0:T(8,128)}', space=vmem, size = 0x20000, scoped, tag = 'scratch operand']
  #allocation3 [shape = 'f32[64,128]{1,0:T(8,128)}', space=vmem, size = 0x8000, scoped, tag = 'scratch operand']
  %s0 = inlined_call_operand.vmem [shape: f32[64,512], index: 0, kind: input, shape index: {}]
  %s1 = inlined_call_operand.vmem [shape: bf16[128,512], index: 1, kind: input, shape index: {}]
  %s2 = inlined_call_operand.hbm [shape: bf16[128,512], index: 2, kind: input, shape index: {}]
  %s3 = inlined_call_operand.vmem [shape: f32[1,512], index: 3, kind: input, shape index: {}]
  %s4 = inlined_call_operand.hbm [shape: bf16[128,512], index: 4, kind: input, shape index: {}]
  %s5 = inlined_call_operand.vmem [shape: f32[128,8], index: 5, kind: input, shape index: {}]
  %s6 = inlined_call_operand.vmem [shape: f32[1,8], index: 6, kind: input, shape index: {}]
  %s7 = inlined_call_operand.vmem [shape: f32[8,4], index: 7, kind: input, shape index: {}]
  %s8 = inlined_call_operand.vmem [shape: f32[1,4], index: 8, kind: input, shape index: {}]
  %s9 = inlined_call_operand.vmem [shape: f32[4,2], index: 9, kind: input, shape index: {}]
  %s10 = inlined_call_operand.vmem [shape: f32[1,2], index: 10, kind: input, shape index: {}]
  %s11 = inlined_call_operand.vmem [shape: f32[2,4], index: 11, kind: input, shape index: {}]
  %s12 = inlined_call_operand.vmem [shape: f32[1,4], index: 12, kind: input, shape index: {}]
  %s13 = inlined_call_operand.vmem [shape: f32[8,4], index: 13, kind: output, shape index: {}]
  %s14 = sld [smem:[#allocation0]]
  $region70: #{lstm_model_forward.1} parent=0
    _
  %s16 = ssub.s32 1, %s14
  %s17 = scalar_select 0, %s16, %s14
  $region1: #{lstm_model_forward.1} parent=0
    #allocation4 [shape = 'u8[131072]{0}', space=vmem, size = 0x20000, scoped, tag = 'input window, operand 2, single buffered']
    #allocation5 [shape = 's32[1]{0}', space=sflag, size = 0x4, scoped, tag = 'scoped memory for lstm_model_forward.1']
    #allocation6 [shape = 'u8[131072]{0}', space=vmem, size = 0x20000, scoped, tag = 'input window, operand 4, single buffered']
    #allocation7 [shape = 's32[1]{0}', space=sflag, size = 0x4, scoped, tag = 'scoped memory for lstm_model_forward.1']
    %18 = vsyncpa [#allocation5], 0
    %19 = vsyncpa [#allocation7], 0
    // Predicated region
    $region2: #{lstm_model_forward.1} parent=1 // pred_check
      _
    $region3: #{lstm_model_forward.1} parent=1 // pred_check_branch
      %21 = sbr.rel (0) target = $region5
    $region4: #{lstm_model_forward.1} parent=1 // pred_region
      _
    $region5: #{lstm_model_forward.1} parent=1 // pred_fallthru
      _
    // Predicated region
    $region6: #{lstm_model_forward.1} parent=1 // pred_check
      _
    $region7: #{lstm_model_forward.1} parent=1 // pred_check_branch
      %23 = sbr.rel (0) target = $region9
    $region8: #{lstm_model_forward.1} parent=1 // pred_region
      _
    $region9: #{lstm_model_forward.1} parent=1 // pred_fallthru
      _
    // Predicated region
    $region10: #{lstm_model_forward.1} parent=1 // pred_check
      _
    $region11: #{lstm_model_forward.1} parent=1 // pred_check_branch
      %25 = sbr.rel (0) target = $region13
    $region12: #{lstm_model_forward.1} parent=1 // pred_region
      %27 = vsyncadd [#allocation5], 0
      %s28 = sshll.u32 %s2, 4
      %s29 = int_to_ptr.hbm [resolvable:$true] %s28
      %s30 = sshll.u32 [#allocation4], 4
      %s31 = int_to_ptr.vmem [resolvable:$true] %s30
      %36 = dma.hbm_to_vmem [thread:$0]  %s29, 4096, %s31, [#allocation5], 256, 256, 16
    $region13: #{lstm_model_forward.1} parent=1 // pred_fallthru
      _
    // Predicated region
    $region14: #{lstm_model_forward.1} parent=1 // pred_check
      _
    $region15: #{lstm_model_forward.1} parent=1 // pred_check_branch
      %38 = sbr.rel (0) target = $region17
    $region16: #{lstm_model_forward.1} parent=1 // pred_region
      _
    $region17: #{lstm_model_forward.1} parent=1 // pred_fallthru
      _
    // Predicated region
    $region18: #{lstm_model_forward.1} parent=1 // pred_check
      _
    $region19: #{lstm_model_forward.1} parent=1 // pred_check_branch
      %40 = sbr.rel (0) target = $region21
    $region20: #{lstm_model_forward.1} parent=1 // pred_region
      %42 = vsyncadd [#allocation7], 0
      %s43 = sshll.u32 %s4, 4
      %s44 = int_to_ptr.hbm [resolvable:$true] %s43
      %s45 = sshll.u32 [#allocation6], 4
      %s46 = int_to_ptr.vmem [resolvable:$true] %s45
      %51 = dma.hbm_to_vmem [thread:$0]  %s44, 4096, %s46, [#allocation7], 256, 256, 16
    $region21: #{lstm_model_forward.1} parent=1 // pred_fallthru
      _
    // Predicated region
    $region22: #{lstm_model_forward.1} parent=1 // pred_check
      _
    $region23: #{lstm_model_forward.1} parent=1 // pred_check_branch
      %53 = sbr.rel (0) target = $region25
    $region24: #{lstm_model_forward.1} parent=1 // pred_region
      _
    $region25: #{lstm_model_forward.1} parent=1 // pred_fallthru
      _
    // Predicated region
    $region26: #{lstm_model_forward.1} parent=1 // pred_check
      _
    $region27: #{lstm_model_forward.1} parent=1 // pred_check_branch
      %55 = sbr.rel (0) target = $region29
    $region28: #{lstm_model_forward.1} parent=1 // pred_region
      _
    $region29: #{lstm_model_forward.1} parent=1 // pred_fallthru
      _
    // Predicated region
    $region30: #{lstm_model_forward.1} parent=1 // pred_check
      _
    $region31: #{lstm_model_forward.1} parent=1 // pred_check_branch
      %57 = sbr.rel (0) target = $region33
    $region32: #{lstm_model_forward.1} parent=1 // pred_region
      _
    $region33: #{lstm_model_forward.1} parent=1 // pred_fallthru
      _
    // Predicated region
    $region34: #{lstm_model_forward.1} parent=1 // pred_check
      _
    $region35: #{lstm_model_forward.1} parent=1 // pred_check_branch
      %59 = sbr.rel (0) target = $region37
    $region36: #{lstm_model_forward.1} parent=1 // pred_region
      _
    $region37: #{lstm_model_forward.1} parent=1 // pred_fallthru
      _
    // Predicated region
    $region38: #{lstm_model_forward.1} parent=1 // pred_check
      _
    $region39: #{lstm_model_forward.1} parent=1 // pred_check_branch
      %61 = sbr.rel (0) target = $region41
    $region40: #{lstm_model_forward.1} parent=1 // pred_region
      _
    $region41: #{lstm_model_forward.1} parent=1 // pred_fallthru
      _
    // Predicated region
    $region42: #{lstm_model_forward.1} parent=1 // pred_check
      _
    $region43: #{lstm_model_forward.1} parent=1 // pred_check_branch
      %63 = sbr.rel (0) target = $region45
    $region44: #{lstm_model_forward.1} parent=1 // pred_region
      _
    $region45: #{lstm_model_forward.1} parent=1 // pred_fallthru
      _
    // Predicated region
    $region46: #{lstm_model_forward.1} parent=1 // pred_check
      _
    $region47: #{lstm_model_forward.1} parent=1 // pred_check_branch
      %65 = sbr.rel (0) target = $region49
    $region48: #{lstm_model_forward.1} parent=1 // pred_region
      _
    $region49: #{lstm_model_forward.1} parent=1 // pred_fallthru
      _
    // Predicated region
    $region50: #{lstm_model_forward.1} parent=1 // pred_check
      _
    $region51: #{lstm_model_forward.1} parent=1 // pred_check_branch
      %67 = sbr.rel (0) target = $region53
    $region52: #{lstm_model_forward.1} parent=1 // pred_region
      _
    $region53: #{lstm_model_forward.1} parent=1 // pred_fallthru
      _
    // Predicated region
    $region54: #{lstm_model_forward.1} parent=1 // pred_check
      _
    $region55: #{lstm_model_forward.1} parent=1 // pred_check_branch
      %69 = sbr.rel (0) target = $region57
    $region56: #{lstm_model_forward.1} parent=1 // pred_region
      %71 = dma.done [#allocation5], 4096
    $region57: #{lstm_model_forward.1} parent=1 // pred_fallthru
      _
    // Predicated region
    $region58: #{lstm_model_forward.1} parent=1 // pred_check
      _
    $region59: #{lstm_model_forward.1} parent=1 // pred_check_branch
      %73 = sbr.rel (0) target = $region61
    $region60: #{lstm_model_forward.1} parent=1 // pred_region
      %75 = dma.done [#allocation7], 4096
    $region61: #{lstm_model_forward.1} parent=1 // pred_fallthru
      _
    %s77 = smul.u32 0, 4
    %s78 = smul.addr %s77, 8
    %s79 = scalar_lea.vmem %s0, %s78
    %v80 = vld [vmem:[%s79] sm:$0xff]
    %v81 = vld [vmem:[%s79 + $0x8] sm:$0xff]
    %v82 = vld [vmem:[%s79 + $0x10] sm:$0xff]
    %v83 = vld [vmem:[%s79 + $0x18] sm:$0xff]
    %v84 = vld [vmem:[%s1] sm:$0xff]
    %v85 = vld [vmem:[%s1 + $0x8] sm:$0xff]
    %v86 = vld [vmem:[%s1 + $0x10] sm:$0xff]
    %v87 = vld [vmem:[%s1 + $0x18] sm:$0xff]
    %v88 = vld [vmem:[%s1 + $0x20] sm:$0xff]
    %v89 = vld [vmem:[%s1 + $0x28] sm:$0xff]
    %v90 = vld [vmem:[%s1 + $0x30] sm:$0xff]
    %v91 = vld [vmem:[%s1 + $0x38] sm:$0xff]
    %v92 = vld [vmem:[%s1 + $0x40] sm:$0xff]
    %v93 = vld [vmem:[%s1 + $0x48] sm:$0xff]
    %v94 = vld [vmem:[%s1 + $0x50] sm:$0xff]
    %v95 = vld [vmem:[%s1 + $0x58] sm:$0xff]
    %v96 = vld [vmem:[%s1 + $0x60] sm:$0xff]
    %v97 = vld [vmem:[%s1 + $0x68] sm:$0xff]
    %v98 = vld [vmem:[%s1 + $0x70] sm:$0xff]
    %v99 = vld [vmem:[%s1 + $0x78] sm:$0xff]
    %v100 = vld [vmem:[%s1 + $0x80] sm:$0xff]
    %v101 = vld [vmem:[%s1 + $0x88] sm:$0xff]
    %v102 = vld [vmem:[%s1 + $0x90] sm:$0xff]
    %v103 = vld [vmem:[%s1 + $0x98] sm:$0xff]
    %v104 = vld [vmem:[%s1 + $0xa0] sm:$0xff]
    %v105 = vld [vmem:[%s1 + $0xa8] sm:$0xff]
    %v106 = vld [vmem:[%s1 + $0xb0] sm:$0xff]
    %v107 = vld [vmem:[%s1 + $0xb8] sm:$0xff]
    %v108 = vld [vmem:[%s1 + $0xc0] sm:$0xff]
    %v109 = vld [vmem:[%s1 + $0xc8] sm:$0xff]
    %v110 = vld [vmem:[%s1 + $0xd0] sm:$0xff]
    %v111 = vld [vmem:[%s1 + $0xd8] sm:$0xff]
    %v112 = vld [vmem:[%s1 + $0xe0] sm:$0xff]
    %v113 = vld [vmem:[%s1 + $0xe8] sm:$0xff]
    %v114 = vld [vmem:[%s1 + $0xf0] sm:$0xff]
    %v115 = vld [vmem:[%s1 + $0xf8] sm:$0xff]
    %v148 = vunpack.c.l.b16 %v84
    %v149 = vunpack.c.h.b16 %v84
    %v150 = vunpack.c.l.b16 %v85
    %v151 = vunpack.c.h.b16 %v85
    %v152 = vunpack.c.l.b16 %v86
    %v153 = vunpack.c.h.b16 %v86
    %v154 = vunpack.c.l.b16 %v87
    %v155 = vunpack.c.h.b16 %v87
    %v156 = vunpack.c.l.b16 %v88
    %v157 = vunpack.c.h.b16 %v88
    %v158 = vunpack.c.l.b16 %v89
    %v159 = vunpack.c.h.b16 %v89
    %v160 = vunpack.c.l.b16 %v90
    %v161 = vunpack.c.h.b16 %v90
    %v162 = vunpack.c.l.b16 %v91
    %v163 = vunpack.c.h.b16 %v91
    %v164 = vunpack.c.l.b16 %v92
    %v165 = vunpack.c.h.b16 %v92
    %v166 = vunpack.c.l.b16 %v93
    %v167 = vunpack.c.h.b16 %v93
    %v168 = vunpack.c.l.b16 %v94
    %v169 = vunpack.c.h.b16 %v94
    %v170 = vunpack.c.l.b16 %v95
    %v171 = vunpack.c.h.b16 %v95
    %v172 = vunpack.c.l.b16 %v96
    %v173 = vunpack.c.h.b16 %v96
    %v174 = vunpack.c.l.b16 %v97
    %v175 = vunpack.c.h.b16 %v97
    %v176 = vunpack.c.l.b16 %v98
    %v177 = vunpack.c.h.b16 %v98
    %v178 = vunpack.c.l.b16 %v99
    %v179 = vunpack.c.h.b16 %v99
    %v180 = vunpack.c.l.b16 %v100
    %v181 = vunpack.c.h.b16 %v100
    %v182 = vunpack.c.l.b16 %v101
    %v183 = vunpack.c.h.b16 %v101
    %v184 = vunpack.c.l.b16 %v102
    %v185 = vunpack.c.h.b16 %v102
    %v186 = vunpack.c.l.b16 %v103
    %v187 = vunpack.c.h.b16 %v103
    %v188 = vunpack.c.l.b16 %v104
    %v189 = vunpack.c.h.b16 %v104
    %v190 = vunpack.c.l.b16 %v105
    %v191 = vunpack.c.h.b16 %v105
    %v192 = vunpack.c.l.b16 %v106
    %v193 = vunpack.c.h.b16 %v106
    %v194 = vunpack.c.l.b16 %v107
    %v195 = vunpack.c.h.b16 %v107
    %v196 = vunpack.c.l.b16 %v108
    %v197 = vunpack.c.h.b16 %v108
    %v198 = vunpack.c.l.b16 %v109
    %v199 = vunpack.c.h.b16 %v109
    %v200 = vunpack.c.l.b16 %v110
    %v201 = vunpack.c.h.b16 %v110
    %v202 = vunpack.c.l.b16 %v111
    %v203 = vunpack.c.h.b16 %v111
    %v204 = vunpack.c.l.b16 %v112
    %v205 = vunpack.c.h.b16 %v112
    %v206 = vunpack.c.l.b16 %v113
    %v207 = vunpack.c.h.b16 %v113
    %v208 = vunpack.c.l.b16 %v114
    %v209 = vunpack.c.h.b16 %v114
    %v210 = vunpack.c.l.b16 %v115
    %v211 = vunpack.c.h.b16 %v115
    %v212 = vpack.c.b16 %v152, %v148
    %v213 = vpack.c.b16 %v153, %v149
    %v214 = vpack.c.b16 %v154, %v150
    %v215 = vpack.c.b16 %v155, %v151
    %v216 = vpack.c.b16 %v160, %v156
    %v217 = vpack.c.b16 %v161, %v157
    %v218 = vpack.c.b16 %v162, %v158
    %v219 = vpack.c.b16 %v163, %v159
    %v220 = vpack.c.b16 %v168, %v164
    %v221 = vpack.c.b16 %v169, %v165
    %v222 = vpack.c.b16 %v170, %v166
    %v223 = vpack.c.b16 %v171, %v167
    %v224 = vpack.c.b16 %v176, %v172
    %v225 = vpack.c.b16 %v177, %v173
    %v226 = vpack.c.b16 %v178, %v174
    %v227 = vpack.c.b16 %v179, %v175
    %v228 = vpack.c.b16 %v184, %v180
    %v229 = vpack.c.b16 %v185, %v181
    %v230 = vpack.c.b16 %v186, %v182
    %v231 = vpack.c.b16 %v187, %v183
    %v232 = vpack.c.b16 %v192, %v188
    %v233 = vpack.c.b16 %v193, %v189
    %v234 = vpack.c.b16 %v194, %v190
    %v235 = vpack.c.b16 %v195, %v191
    %v236 = vpack.c.b16 %v200, %v196
    %v237 = vpack.c.b16 %v201, %v197
    %v238 = vpack.c.b16 %v202, %v198
    %v239 = vpack.c.b16 %v203, %v199
    %v240 = vpack.c.b16 %v208, %v204
    %v241 = vpack.c.b16 %v209, %v205
    %v242 = vpack.c.b16 %v210, %v206
    %v243 = vpack.c.b16 %v211, %v207
    %276 = vmatpush.bf16.msra.mxu0 %v240
    %277 = vmatpush.bf16.msra.mxu0 %v236
    %278 = vmatpush.bf16.msra.mxu0 %v232
    %279 = vmatpush.bf16.msra.mxu0 %v228
    %280 = vmatpush.bf16.msra.mxu0 %v224
    %281 = vmatpush.bf16.msra.mxu0 %v220
    %282 = vmatpush.bf16.msra.mxu0 %v216
    %283 = vmatpush.bf16.msra.mxu0 %v212
    %284 = vmatmul.bf16.gmra.mxu0 0
    %v285 = vpop.f32.mrf.mxu0
    %v286 = vadd.f32 0.0, %v285
    %v287 = vpop.f32.mrf.mxu0
    %288 = vdwg.mxu0
    %289 = vmatpush.bf16.msra.mxu0 %v241
    %290 = vmatpush.bf16.msra.mxu0 %v237
    %291 = vmatpush.bf16.msra.mxu0 %v233
    %292 = vmatpush.bf16.msra.mxu0 %v229
    %293 = vmatpush.bf16.msra.mxu0 %v225
    %294 = vmatpush.bf16.msra.mxu0 %v221
    %295 = vmatpush.bf16.msra.mxu0 %v217
    %296 = vmatpush.bf16.msra.mxu0 %v213
    %297 = vmatmul.bf16.gmra.mxu0 0
    %v298 = vpop.f32.mrf.mxu0
    %v299 = vadd.f32 0.0, %v298
    %v300 = vpop.f32.mrf.mxu0
    %301 = vdwg.mxu0
    %302 = vmatpush.bf16.msra.mxu0 %v242
    %303 = vmatpush.bf16.msra.mxu0 %v238
    %304 = vmatpush.bf16.msra.mxu0 %v234
    %305 = vmatpush.bf16.msra.mxu0 %v230
    %306 = vmatpush.bf16.msra.mxu0 %v226
    %307 = vmatpush.bf16.msra.mxu0 %v222
    %308 = vmatpush.bf16.msra.mxu0 %v218
    %309 = vmatpush.bf16.msra.mxu0 %v214
    %310 = vmatmul.bf16.gmra.mxu0 0
    %v311 = vpop.f32.mrf.mxu0
    %v312 = vadd.f32 0.0, %v311
    %v313 = vpop.f32.mrf.mxu0
    %314 = vdwg.mxu0
    %315 = vmatpush.bf16.msra.mxu0 %v243
    %316 = vmatpush.bf16.msra.mxu0 %v239
    %317 = vmatpush.bf16.msra.mxu0 %v235
    %318 = vmatpush.bf16.msra.mxu0 %v231
    %319 = vmatpush.bf16.msra.mxu0 %v227
    %320 = vmatpush.bf16.msra.mxu0 %v223
    %321 = vmatpush.bf16.msra.mxu0 %v219
    %322 = vmatpush.bf16.msra.mxu0 %v215
    %323 = vmatmul.bf16.gmra.mxu0 0
    %v324 = vpop.f32.mrf.mxu0
    %v325 = vadd.f32 0.0, %v324
    %v326 = vpop.f32.mrf.mxu0
    %327 = vdwg.mxu0
    %v328 = vadd.f32 %v80, %v286
    %v329 = vadd.f32 %v81, %v299
    %v330 = vadd.f32 %v82, %v312
    %v331 = vadd.f32 %v83, %v325
    %v332 = vxor.u32 %v328, 2147483648
    %v333 = vmul.f32 %v332, 1.442695
    %v334 = vpow.pop %v333
    %v335 = vadd.f32 %v334, 1.0
    %v336 = vrcp.pop %v335
    %v337 = vmul.f32 %v335, %v336
    %v338 = vsub.f32 1.0, %v337
    %v339 = vmul.f32 %v336, %v338
    %v340 = vadd.f32 %v336, %v339
    %vm341 = vweird.f32 %v335
    %vm342 = vweird.f32 %v336
    %vm343 = vmor %vm341, %vm342
    %v344 = vsel %vm343, %v336, %v340
    %v345 = vand.u32 2147483647, %v335
    %vm346 = vcmp.eq.f32.partialorder %v345, 8.507059e+37
    %v347 = vand.u32 %v335, 2147483648
    %v348 = vor.u32 1.1754944e-38, %v347
    %v349 = vsel %vm346, %v348, %v344
    %v350 = vmul.f32 1.0, %v349
    %v351 = vxor.u32 %v329, 2147483648
    %v352 = vmul.f32 %v351, 1.442695
    %v353 = vpow.pop %v352
    %v354 = vadd.f32 %v353, 1.0
    %v355 = vrcp.pop %v354
    %v356 = vmul.f32 %v354, %v355
    %v357 = vsub.f32 1.0, %v356
    %v358 = vmul.f32 %v355, %v357
    %v359 = vadd.f32 %v355, %v358
    %vm360 = vweird.f32 %v354
    %vm361 = vweird.f32 %v355
    %vm362 = vmor %vm360, %vm361
    %v363 = vsel %vm362, %v355, %v359
    %v364 = vand.u32 2147483647, %v354
    %vm365 = vcmp.eq.f32.partialorder %v364, 8.507059e+37
    %v366 = vand.u32 %v354, 2147483648
    %v367 = vor.u32 1.1754944e-38, %v366
    %v368 = vsel %vm365, %v367, %v363
    %v369 = vmul.f32 1.0, %v368
    %v370 = vtanh.pop %v330
    %v371 = vxor.u32 %v331, 2147483648
    %v372 = vmul.f32 %v371, 1.442695
    %v373 = vpow.pop %v372
    %v374 = vadd.f32 %v373, 1.0
    %v375 = vrcp.pop %v374
    %v376 = vmul.f32 %v374, %v375
    %v377 = vsub.f32 1.0, %v376
    %v378 = vmul.f32 %v375, %v377
    %v379 = vadd.f32 %v375, %v378
    %vm380 = vweird.f32 %v374
    %vm381 = vweird.f32 %v375
    %vm382 = vmor %vm380, %vm381
    %v383 = vsel %vm382, %v375, %v379
    %v384 = vand.u32 2147483647, %v374
    %vm385 = vcmp.eq.f32.partialorder %v384, 8.507059e+37
    %v386 = vand.u32 %v374, 2147483648
    %v387 = vor.u32 1.1754944e-38, %v386
    %v388 = vsel %vm385, %v387, %v383
    %v389 = vmul.f32 1.0, %v388
    %v390 = vmul.f32 %v369, 0.0
    %v391 = vmul.f32 %v350, %v370
    %v392 = vadd.f32 %v390, %v391
    %v393 = vtanh.pop %v392
    %v394 = vmul.f32 %v389, %v393
    %395 = vst [vmem:[#allocation3] sm:$0xff] %v394
    %s396 = smul.u32 1, 4
    %s397 = smul.addr %s396, 8
    %s398 = scalar_lea.vmem %s0, %s397
    %v399 = vld [vmem:[%s398] sm:$0xff]
    %v400 = vld [vmem:[%s398 + $0x8] sm:$0xff]
    %v401 = vld [vmem:[%s398 + $0x10] sm:$0xff]
    %v402 = vld [vmem:[%s398 + $0x18] sm:$0xff]
    %v403 = vpack.c.bf16 %v394, %v394
    %v404 = vld [vmem:[%s1] sm:$0xff]
    %v405 = vld [vmem:[%s1 + $0x8] sm:$0xff]
    %v406 = vld [vmem:[%s1 + $0x10] sm:$0xff]
    %v407 = vld [vmem:[%s1 + $0x18] sm:$0xff]
    %v408 = vld [vmem:[%s1 + $0x20] sm:$0xff]
    %v409 = vld [vmem:[%s1 + $0x28] sm:$0xff]
    %v410 = vld [vmem:[%s1 + $0x30] sm:$0xff]
    %v411 = vld [vmem:[%s1 + $0x38] sm:$0xff]
    %v412 = vld [vmem:[%s1 + $0x40] sm:$0xff]
    %v413 = vld [vmem:[%s1 + $0x48] sm:$0xff]
    %v414 = vld [vmem:[%s1 + $0x50] sm:$0xff]
    %v415 = vld [vmem:[%s1 + $0x58] sm:$0xff]
    %v416 = vld [vmem:[%s1 + $0x60] sm:$0xff]
    %v417 = vld [vmem:[%s1 + $0x68] sm:$0xff]
    %v418 = vld [vmem:[%s1 + $0x70] sm:$0xff]
    %v419 = vld [vmem:[%s1 + $0x78] sm:$0xff]
    %v420 = vld [vmem:[%s1 + $0x80] sm:$0xff]
    %v421 = vld [vmem:[%s1 + $0x88] sm:$0xff]
    %v422 = vld [vmem:[%s1 + $0x90] sm:$0xff]
    %v423 = vld [vmem:[%s1 + $0x98] sm:$0xff]
    %v424 = vld [vmem:[%s1 + $0xa0] sm:$0xff]
    %v425 = vld [vmem:[%s1 + $0xa8] sm:$0xff]
    %v426 = vld [vmem:[%s1 + $0xb0] sm:$0xff]
    %v427 = vld [vmem:[%s1 + $0xb8] sm:$0xff]
    %v428 = vld [vmem:[%s1 + $0xc0] sm:$0xff]
    %v429 = vld [vmem:[%s1 + $0xc8] sm:$0xff]
    %v430 = vld [vmem:[%s1 + $0xd0] sm:$0xff]
    %v431 = vld [vmem:[%s1 + $0xd8] sm:$0xff]
    %v432 = vld [vmem:[%s1 + $0xe0] sm:$0xff]
    %v433 = vld [vmem:[%s1 + $0xe8] sm:$0xff]
    %v434 = vld [vmem:[%s1 + $0xf0] sm:$0xff]
    %v435 = vld [vmem:[%s1 + $0xf8] sm:$0xff]
    %v468 = vunpack.c.l.b16 %v404
    %v469 = vunpack.c.h.b16 %v404
    %v470 = vunpack.c.l.b16 %v405
    %v471 = vunpack.c.h.b16 %v405
    %v472 = vunpack.c.l.b16 %v406
    %v473 = vunpack.c.h.b16 %v406
    %v474 = vunpack.c.l.b16 %v407
    %v475 = vunpack.c.h.b16 %v407
    %v476 = vunpack.c.l.b16 %v408
    %v477 = vunpack.c.h.b16 %v408
    %v478 = vunpack.c.l.b16 %v409
    %v479 = vunpack.c.h.b16 %v409
    %v480 = vunpack.c.l.b16 %v410
    %v481 = vunpack.c.h.b16 %v410
    %v482 = vunpack.c.l.b16 %v411
    %v483 = vunpack.c.h.b16 %v411
    %v484 = vunpack.c.l.b16 %v412
    %v485 = vunpack.c.h.b16 %v412
    %v486 = vunpack.c.l.b16 %v413
    %v487 = vunpack.c.h.b16 %v413
    %v488 = vunpack.c.l.b16 %v414
    %v489 = vunpack.c.h.b16 %v414
    %v490 = vunpack.c.l.b16 %v415
    %v491 = vunpack.c.h.b16 %v415
    %v492 = vunpack.c.l.b16 %v416
    %v493 = vunpack.c.h.b16 %v416
    %v494 = vunpack.c.l.b16 %v417
    %v495 = vunpack.c.h.b16 %v417
    %v496 = vunpack.c.l.b16 %v418
    %v497 = vunpack.c.h.b16 %v418
    %v498 = vunpack.c.l.b16 %v419
    %v499 = vunpack.c.h.b16 %v419
    %v500 = vunpack.c.l.b16 %v420
    %v501 = vunpack.c.h.b16 %v420
    %v502 = vunpack.c.l.b16 %v421
    %v503 = vunpack.c.h.b16 %v421
    %v504 = vunpack.c.l.b16 %v422
    %v505 = vunpack.c.h.b16 %v422
    %v506 = vunpack.c.l.b16 %v423
    %v507 = vunpack.c.h.b16 %v423
    %v508 = vunpack.c.l.b16 %v424
    %v509 = vunpack.c.h.b16 %v424
    %v510 = vunpack.c.l.b16 %v425
    %v511 = vunpack.c.h.b16 %v425
    %v512 = vunpack.c.l.b16 %v426
    %v513 = vunpack.c.h.b16 %v426
    %v514 = vunpack.c.l.b16 %v427
    %v515 = vunpack.c.h.b16 %v427
    %v516 = vunpack.c.l.b16 %v428
    %v517 = vunpack.c.h.b16 %v428
    %v518 = vunpack.c.l.b16 %v429
    %v519 = vunpack.c.h.b16 %v429
    %v520 = vunpack.c.l.b16 %v430
    %v521 = vunpack.c.h.b16 %v430
    %v522 = vunpack.c.l.b16 %v431
    %v523 = vunpack.c.h.b16 %v431
    %v524 = vunpack.c.l.b16 %v432
    %v525 = vunpack.c.h.b16 %v432
    %v526 = vunpack.c.l.b16 %v433
    %v527 = vunpack.c.h.b16 %v433
    %v528 = vunpack.c.l.b16 %v434
    %v529 = vunpack.c.h.b16 %v434
    %v530 = vunpack.c.l.b16 %v435
    %v531 = vunpack.c.h.b16 %v435
    %v532 = vpack.c.b16 %v472, %v468
    %v533 = vpack.c.b16 %v473, %v469
    %v534 = vpack.c.b16 %v474, %v470
    %v535 = vpack.c.b16 %v475, %v471
    %v536 = vpack.c.b16 %v480, %v476
    %v537 = vpack.c.b16 %v481, %v477
    %v538 = vpack.c.b16 %v482, %v478
    %v539 = vpack.c.b16 %v483, %v479
    %v540 = vpack.c.b16 %v488, %v484
    %v541 = vpack.c.b16 %v489, %v485
    %v542 = vpack.c.b16 %v490, %v486
    %v543 = vpack.c.b16 %v491, %v487
    %v544 = vpack.c.b16 %v496, %v492
    %v545 = vpack.c.b16 %v497, %v493
    %v546 = vpack.c.b16 %v498, %v494
    %v547 = vpack.c.b16 %v499, %v495
    %v548 = vpack.c.b16 %v504, %v500
    %v549 = vpack.c.b16 %v505, %v501
    %v550 = vpack.c.b16 %v506, %v502
    %v551 = vpack.c.b16 %v507, %v503
    %v552 = vpack.c.b16 %v512, %v508
    %v553 = vpack.c.b16 %v513, %v509
    %v554 = vpack.c.b16 %v514, %v510
    %v555 = vpack.c.b16 %v515, %v511
    %v556 = vpack.c.b16 %v520, %v516
    %v557 = vpack.c.b16 %v521, %v517
    %v558 = vpack.c.b16 %v522, %v518
    %v559 = vpack.c.b16 %v523, %v519
    %v560 = vpack.c.b16 %v528, %v524
    %v561 = vpack.c.b16 %v529, %v525
    %v562 = vpack.c.b16 %v530, %v526
    %v563 = vpack.c.b16 %v531, %v527
    %596 = vmatpush.bf16.msra.mxu0 %v560
    %597 = vmatpush.bf16.msra.mxu0 %v556
    %598 = vmatpush.bf16.msra.mxu0 %v552
    %599 = vmatpush.bf16.msra.mxu0 %v548
    %600 = vmatpush.bf16.msra.mxu0 %v544
    %601 = vmatpush.bf16.msra.mxu0 %v540
    %602 = vmatpush.bf16.msra.mxu0 %v536
    %603 = vmatpush.bf16.msra.mxu0 %v532
    %604 = vmatmul.bf16.gmra.mxu0 %v403
    %v605 = vpop.f32.mrf.mxu0
    %v606 = vadd.f32 0.0, %v605
    %v607 = vpop.f32.mrf.mxu0
    %608 = vdwg.mxu0
    %609 = vmatpush.bf16.msra.mxu0 %v561
    %610 = vmatpush.bf16.msra.mxu0 %v557
    %611 = vmatpush.bf16.msra.mxu0 %v553
    %612 = vmatpush.bf16.msra.mxu0 %v549
    %613 = vmatpush.bf16.msra.mxu0 %v545
    %614 = vmatpush.bf16.msra.mxu0 %v541
    %615 = vmatpush.bf16.msra.mxu0 %v537
    %616 = vmatpush.bf16.msra.mxu0 %v533
    %617 = vmatmul.bf16.gmra.mxu0 %v403
    %v618 = vpop.f32.mrf.mxu0
    %v619 = vadd.f32 0.0, %v618
    %v620 = vpop.f32.mrf.mxu0
    %621 = vdwg.mxu0
    %622 = vmatpush.bf16.msra.mxu0 %v562
    %623 = vmatpush.bf16.msra.mxu0 %v558
    %624 = vmatpush.bf16.msra.mxu0 %v554
    %625 = vmatpush.bf16.msra.mxu0 %v550
    %626 = vmatpush.bf16.msra.mxu0 %v546
    %627 = vmatpush.bf16.msra.mxu0 %v542
    %628 = vmatpush.bf16.msra.mxu0 %v538
    %629 = vmatpush.bf16.msra.mxu0 %v534
    %630 = vmatmul.bf16.gmra.mxu0 %v403
    %v631 = vpop.f32.mrf.mxu0
    %v632 = vadd.f32 0.0, %v631
    %v633 = vpop.f32.mrf.mxu0
    %634 = vdwg.mxu0
    %635 = vmatpush.bf16.msra.mxu0 %v563
    %636 = vmatpush.bf16.msra.mxu0 %v559
    %637 = vmatpush.bf16.msra.mxu0 %v555
    %638 = vmatpush.bf16.msra.mxu0 %v551
    %639 = vmatpush.bf16.msra.mxu0 %v547
    %640 = vmatpush.bf16.msra.mxu0 %v543
    %641 = vmatpush.bf16.msra.mxu0 %v539
    %642 = vmatpush.bf16.msra.mxu0 %v535
    %643 = vmatmul.bf16.gmra.mxu0 %v403
    %v644 = vpop.f32.mrf.mxu0
    %v645 = vadd.f32 0.0, %v644
    %v646 = vpop.f32.mrf.mxu0
    %647 = vdwg.mxu0
    %v648 = vadd.f32 %v399, %v606
    %v649 = vadd.f32 %v400, %v619
    %v650 = vadd.f32 %v401, %v632
    %v651 = vadd.f32 %v402, %v645
    %v652 = vxor.u32 %v648, 2147483648
    %v653 = vmul.f32 %v652, 1.442695
    %v654 = vpow.pop %v653
    %v655 = vadd.f32 %v654, 1.0
    %v656 = vrcp.pop %v655
    %v657 = vmul.f32 %v655, %v656
    %v658 = vsub.f32 1.0, %v657
    %v659 = vmul.f32 %v656, %v658
    %v660 = vadd.f32 %v656, %v659
    %vm661 = vweird.f32 %v655
    %vm662 = vweird.f32 %v656
    %vm663 = vmor %vm661, %vm662
    %v664 = vsel %vm663, %v656, %v660
    %v665 = vand.u32 2147483647, %v655
    %vm666 = vcmp.eq.f32.partialorder %v665, 8.507059e+37
    %v667 = vand.u32 %v655, 2147483648
    %v668 = vor.u32 1.1754944e-38, %v667
    %v669 = vsel %vm666, %v668, %v664
    %v670 = vmul.f32 1.0, %v669
    %v671 = vxor.u32 %v649, 2147483648
    %v672 = vmul.f32 %v671, 1.442695
    %v673 = vpow.pop %v672
    %v674 = vadd.f32 %v673, 1.0
    %v675 = vrcp.pop %v674
    %v676 = vmul.f32 %v674, %v675
    %v677 = vsub.f32 1.0, %v676
    %v678 = vmul.f32 %v675, %v677
    %v679 = vadd.f32 %v675, %v678
    %vm680 = vweird.f32 %v674
    %vm681 = vweird.f32 %v675
    %vm682 = vmor %vm680, %vm681
    %v683 = vsel %vm682, %v675, %v679
    %v684 = vand.u32 2147483647, %v674
    %vm685 = vcmp.eq.f32.partialorder %v684, 8.507059e+37
    %v686 = vand.u32 %v674, 2147483648
    %v687 = vor.u32 1.1754944e-38, %v686
    %v688 = vsel %vm685, %v687, %v683
    %v689 = vmul.f32 1.0, %v688
    %v690 = vtanh.pop %v650
    %v691 = vxor.u32 %v651, 2147483648
    %v692 = vmul.f32 %v691, 1.442695
    %v693 = vpow.pop %v692
    %v694 = vadd.f32 %v693, 1.0
    %v695 = vrcp.pop %v694
    %v696 = vmul.f32 %v694, %v695
    %v697 = vsub.f32 1.0, %v696
    %v698 = vmul.f32 %v695, %v697
    %v699 = vadd.f32 %v695, %v698
    %vm700 = vweird.f32 %v694
    %vm701 = vweird.f32 %v695
    %vm702 = vmor %vm700, %vm701
    %v703 = vsel %vm702, %v695, %v699
    %v704 = vand.u32 2147483647, %v694
    %vm705 = vcmp.eq.f32.partialorder %v704, 8.507059e+37
    %v706 = vand.u32 %v694, 2147483648
    %v707 = vor.u32 1.1754944e-38, %v706
    %v708 = vsel %vm705, %v707, %v703
    %v709 = vmul.f32 1.0, %v708
    %v710 = vmul.f32 %v689, %v392
    %v711 = vmul.f32 %v670, %v690
    %v712 = vadd.f32 %v710, %v711
    %v713 = vtanh.pop %v712
    %v714 = vmul.f32 %v709, %v713
    %s715 = scalar_lea.vmem [#allocation3], 8
    %716 = vst [vmem:[%s715] sm:$0xff] %v714
    %s717 = smul.u32 2, 4
    %s718 = smul.addr %s717, 8
    %s719 = scalar_lea.vmem %s0, %s718
    %v720 = vld [vmem:[%s719] sm:$0xff]
    %v721 = vld [vmem:[%s719 + $0x8] sm:$0xff]
    %v722 = vld [vmem:[%s719 + $0x10] sm:$0xff]
    %v723 = vld [vmem:[%s719 + $0x18] sm:$0xff]
    %v724 = vpack.c.bf16 %v714, %v714
    %v725 = vld [vmem:[%s1] sm:$0xff]
    %v726 = vld [vmem:[%s1 + $0x8] sm:$0xff]
    %v727 = vld [vmem:[%s1 + $0x10] sm:$0xff]
    %v728 = vld [vmem:[%s1 + $0x18] sm:$0xff]
    %v729 = vld [vmem:[%s1 + $0x20] sm:$0xff]
    %v730 = vld [vmem:[%s1 + $0x28] sm:$0xff]
    %v731 = vld [vmem:[%s1 + $0x30] sm:$0xff]
    %v732 = vld [vmem:[%s1 + $0x38] sm:$0xff]
    %v733 = vld [vmem:[%s1 + $0x40] sm:$0xff]
    %v734 = vld [vmem:[%s1 + $0x48] sm:$0xff]
    %v735 = vld [vmem:[%s1 + $0x50] sm:$0xff]
    %v736 = vld [vmem:[%s1 + $0x58] sm:$0xff]
    %v737 = vld [vmem:[%s1 + $0x60] sm:$0xff]
    %v738 = vld [vmem:[%s1 + $0x68] sm:$0xff]
    %v739 = vld [vmem:[%s1 + $0x70] sm:$0xff]
    %v740 = vld [vmem:[%s1 + $0x78] sm:$0xff]
    %v741 = vld [vmem:[%s1 + $0x80] sm:$0xff]
    %v742 = vld [vmem:[%s1 + $0x88] sm:$0xff]
    %v743 = vld [vmem:[%s1 + $0x90] sm:$0xff]
    %v744 = vld [vmem:[%s1 + $0x98] sm:$0xff]
    %v745 = vld [vmem:[%s1 + $0xa0] sm:$0xff]
    %v746 = vld [vmem:[%s1 + $0xa8] sm:$0xff]
    %v747 = vld [vmem:[%s1 + $0xb0] sm:$0xff]
    %v748 = vld [vmem:[%s1 + $0xb8] sm:$0xff]
    %v749 = vld [vmem:[%s1 + $0xc0] sm:$0xff]
    %v750 = vld [vmem:[%s1 + $0xc8] sm:$0xff]
    %v751 = vld [vmem:[%s1 + $0xd0] sm:$0xff]
    %v752 = vld [vmem:[%s1 + $0xd8] sm:$0xff]
    %v753 = vld [vmem:[%s1 + $0xe0] sm:$0xff]
    %v754 = vld [vmem:[%s1 + $0xe8] sm:$0xff]
    %v755 = vld [vmem:[%s1 + $0xf0] sm:$0xff]
    %v756 = vld [vmem:[%s1 + $0xf8] sm:$0xff]
    %v789 = vunpack.c.l.b16 %v725
    %v790 = vunpack.c.h.b16 %v725
    %v791 = vunpack.c.l.b16 %v726
    %v792 = vunpack.c.h.b16 %v726
    %v793 = vunpack.c.l.b16 %v727
    %v794 = vunpack.c.h.b16 %v727
    %v795 = vunpack.c.l.b16 %v728
    %v796 = vunpack.c.h.b16 %v728
    %v797 = vunpack.c.l.b16 %v729
    %v798 = vunpack.c.h.b16 %v729
    %v799 = vunpack.c.l.b16 %v730
    %v800 = vunpack.c.h.b16 %v730
    %v801 = vunpack.c.l.b16 %v731
    %v802 = vunpack.c.h.b16 %v731
    %v803 = vunpack.c.l.b16 %v732
    %v804 = vunpack.c.h.b16 %v732
    %v805 = vunpack.c.l.b16 %v733
    %v806 = vunpack.c.h.b16 %v733
    %v807 = vunpack.c.l.b16 %v734
    %v808 = vunpack.c.h.b16 %v734
    %v809 = vunpack.c.l.b16 %v735
    %v810 = vunpack.c.h.b16 %v735
    %v811 = vunpack.c.l.b16 %v736
    %v812 = vunpack.c.h.b16 %v736
    %v813 = vunpack.c.l.b16 %v737
    %v814 = vunpack.c.h.b16 %v737
    %v815 = vunpack.c.l.b16 %v738
    %v816 = vunpack.c.h.b16 %v738
    %v817 = vunpack.c.l.b16 %v739
    %v818 = vunpack.c.h.b16 %v739
    %v819 = vunpack.c.l.b16 %v740
    %v820 = vunpack.c.h.b16 %v740
    %v821 = vunpack.c.l.b16 %v741
    %v822 = vunpack.c.h.b16 %v741
    %v823 = vunpack.c.l.b16 %v742
    %v824 = vunpack.c.h.b16 %v742
    %v825 = vunpack.c.l.b16 %v743
    %v826 = vunpack.c.h.b16 %v743
    %v827 = vunpack.c.l.b16 %v744
    %v828 = vunpack.c.h.b16 %v744
    %v829 = vunpack.c.l.b16 %v745
    %v830 = vunpack.c.h.b16 %v745
    %v831 = vunpack.c.l.b16 %v746
    %v832 = vunpack.c.h.b16 %v746
    %v833 = vunpack.c.l.b16 %v747
    %v834 = vunpack.c.h.b16 %v747
    %v835 = vunpack.c.l.b16 %v748
    %v836 = vunpack.c.h.b16 %v748
    %v837 = vunpack.c.l.b16 %v749
    %v838 = vunpack.c.h.b16 %v749
    %v839 = vunpack.c.l.b16 %v750
    %v840 = vunpack.c.h.b16 %v750
    %v841 = vunpack.c.l.b16 %v751
    %v842 = vunpack.c.h.b16 %v751
    %v843 = vunpack.c.l.b16 %v752
    %v844 = vunpack.c.h.b16 %v752
    %v845 = vunpack.c.l.b16 %v753
    %v846 = vunpack.c.h.b16 %v753
    %v847 = vunpack.c.l.b16 %v754
    %v848 = vunpack.c.h.b16 %v754
    %v849 = vunpack.c.l.b16 %v755
    %v850 = vunpack.c.h.b16 %v755
    %v851 = vunpack.c.l.b16 %v756
    %v852 = vunpack.c.h.b16 %v756
    %v853 = vpack.c.b16 %v793, %v789
    %v854 = vpack.c.b16 %v794, %v790
    %v855 = vpack.c.b16 %v795, %v791
    %v856 = vpack.c.b16 %v796, %v792
    %v857 = vpack.c.b16 %v801, %v797
    %v858 = vpack.c.b16 %v802, %v798
    %v859 = vpack.c.b16 %v803, %v799
    %v860 = vpack.c.b16 %v804, %v800
    %v861 = vpack.c.b16 %v809, %v805
    %v862 = vpack.c.b16 %v810, %v806
    %v863 = vpack.c.b16 %v811, %v807
    %v864 = vpack.c.b16 %v812, %v808
    %v865 = vpack.c.b16 %v817, %v813
    %v866 = vpack.c.b16 %v818, %v814
    %v867 = vpack.c.b16 %v819, %v815
    %v868 = vpack.c.b16 %v820, %v816
    %v869 = vpack.c.b16 %v825, %v821
    %v870 = vpack.c.b16 %v826, %v822
    %v871 = vpack.c.b16 %v827, %v823
    %v872 = vpack.c.b16 %v828, %v824
    %v873 = vpack.c.b16 %v833, %v829
    %v874 = vpack.c.b16 %v834, %v830
    %v875 = vpack.c.b16 %v835, %v831
    %v876 = vpack.c.b16 %v836, %v832
    %v877 = vpack.c.b16 %v841, %v837
    %v878 = vpack.c.b16 %v842, %v838
    %v879 = vpack.c.b16 %v843, %v839
    %v880 = vpack.c.b16 %v844, %v840
    %v881 = vpack.c.b16 %v849, %v845
    %v882 = vpack.c.b16 %v850, %v846
    %v883 = vpack.c.b16 %v851, %v847
    %v884 = vpack.c.b16 %v852, %v848
    %917 = vmatpush.bf16.msra.mxu0 %v881
    %918 = vmatpush.bf16.msra.mxu0 %v877
    %919 = vmatpush.bf16.msra.mxu0 %v873
    %920 = vmatpush.bf16.msra.mxu0 %v869
    %921 = vmatpush.bf16.msra.mxu0 %v865
    %922 = vmatpush.bf16.msra.mxu0 %v861
    %923 = vmatpush.bf16.msra.mxu0 %v857
    %924 = vmatpush.bf16.msra.mxu0 %v853
    %925 = vmatmul.bf16.gmra.mxu0 %v724
    %v926 = vpop.f32.mrf.mxu0
    %v927 = vadd.f32 0.0, %v926
    %v928 = vpop.f32.mrf.mxu0
    %929 = vdwg.mxu0
    %930 = vmatpush.bf16.msra.mxu0 %v882
    %931 = vmatpush.bf16.msra.mxu0 %v878
    %932 = vmatpush.bf16.msra.mxu0 %v874
    %933 = vmatpush.bf16.msra.mxu0 %v870
    %934 = vmatpush.bf16.msra.mxu0 %v866
    %935 = vmatpush.bf16.msra.mxu0 %v862
    %936 = vmatpush.bf16.msra.mxu0 %v858
    %937 = vmatpush.bf16.msra.mxu0 %v854
    %938 = vmatmul.bf16.gmra.mxu0 %v724
    %v939 = vpop.f32.mrf.mxu0
    %v940 = vadd.f32 0.0, %v939
    %v941 = vpop.f32.mrf.mxu0
    %942 = vdwg.mxu0
    %943 = vmatpush.bf16.msra.mxu0 %v883
    %944 = vmatpush.bf16.msra.mxu0 %v879
    %945 = vmatpush.bf16.msra.mxu0 %v875
    %946 = vmatpush.bf16.msra.mxu0 %v871
    %947 = vmatpush.bf16.msra.mxu0 %v867
    %948 = vmatpush.bf16.msra.mxu0 %v863
    %949 = vmatpush.bf16.msra.mxu0 %v859
    %950 = vmatpush.bf16.msra.mxu0 %v855
    %951 = vmatmul.bf16.gmra.mxu0 %v724
    %v952 = vpop.f32.mrf.mxu0
    %v953 = vadd.f32 0.0, %v952
    %v954 = vpop.f32.mrf.mxu0
    %955 = vdwg.mxu0
    %956 = vmatpush.bf16.msra.mxu0 %v884
    %957 = vmatpush.bf16.msra.mxu0 %v880
    %958 = vmatpush.bf16.msra.mxu0 %v876
    %959 = vmatpush.bf16.msra.mxu0 %v872
    %960 = vmatpush.bf16.msra.mxu0 %v868
    %961 = vmatpush.bf16.msra.mxu0 %v864
    %962 = vmatpush.bf16.msra.mxu0 %v860
    %963 = vmatpush.bf16.msra.mxu0 %v856
    %964 = vmatmul.bf16.gmra.mxu0 %v724
    %v965 = vpop.f32.mrf.mxu0
    %v966 = vadd.f32 0.0, %v965
    %v967 = vpop.f32.mrf.mxu0
    %968 = vdwg.mxu0
    %v969 = vadd.f32 %v720, %v927
    %v970 = vadd.f32 %v721, %v940
    %v971 = vadd.f32 %v722, %v953
    %v972 = vadd.f32 %v723, %v966
    %v973 = vxor.u32 %v969, 2147483648
    %v974 = vmul.f32 %v973, 1.442695
    %v975 = vpow.pop %v974
    %v976 = vadd.f32 %v975, 1.0
    %v977 = vrcp.pop %v976
    %v978 = vmul.f32 %v976, %v977
    %v979 = vsub.f32 1.0, %v978
    %v980 = vmul.f32 %v977, %v979
    %v981 = vadd.f32 %v977, %v980
    %vm982 = vweird.f32 %v976
    %vm983 = vweird.f32 %v977
    %vm984 = vmor %vm982, %vm983
    %v985 = vsel %vm984, %v977, %v981
    %v986 = vand.u32 2147483647, %v976
    %vm987 = vcmp.eq.f32.partialorder %v986, 8.507059e+37
    %v988 = vand.u32 %v976, 2147483648
    %v989 = vor.u32 1.1754944e-38, %v988
    %v990 = vsel %vm987, %v989, %v985
    %v991 = vmul.f32 1.0, %v990
    %v992 = vxor.u32 %v970, 2147483648
    %v993 = vmul.f32 %v992, 1.442695
    %v994 = vpow.pop %v993
    %v995 = vadd.f32 %v994, 1.0
    %v996 = vrcp.pop %v995
    %v997 = vmul.f32 %v995, %v996
    %v998 = vsub.f32 1.0, %v997
    %v999 = vmul.f32 %v996, %v998
    %v1000 = vadd.f32 %v996, %v999
    %vm1001 = vweird.f32 %v995
    %vm1002 = vweird.f32 %v996
    %vm1003 = vmor %vm1001, %vm1002
    %v1004 = vsel %vm1003, %v996, %v1000
    %v1005 = vand.u32 2147483647, %v995
    %vm1006 = vcmp.eq.f32.partialorder %v1005, 8.507059e+37
    %v1007 = vand.u32 %v995, 2147483648
    %v1008 = vor.u32 1.1754944e-38, %v1007
    %v1009 = vsel %vm1006, %v1008, %v1004
    %v1010 = vmul.f32 1.0, %v1009
    %v1011 = vtanh.pop %v971
    %v1012 = vxor.u32 %v972, 2147483648
    %v1013 = vmul.f32 %v1012, 1.442695
    %v1014 = vpow.pop %v1013
    %v1015 = vadd.f32 %v1014, 1.0
    %v1016 = vrcp.pop %v1015
    %v1017 = vmul.f32 %v1015, %v1016
    %v1018 = vsub.f32 1.0, %v1017
    %v1019 = vmul.f32 %v1016, %v1018
    %v1020 = vadd.f32 %v1016, %v1019
    %vm1021 = vweird.f32 %v1015
    %vm1022 = vweird.f32 %v1016
    %vm1023 = vmor %vm1021, %vm1022
    %v1024 = vsel %vm1023, %v1016, %v1020
    %v1025 = vand.u32 2147483647, %v1015
    %vm1026 = vcmp.eq.f32.partialorder %v1025, 8.507059e+37
    %v1027 = vand.u32 %v1015, 2147483648
    %v1028 = vor.u32 1.1754944e-38, %v1027
    %v1029 = vsel %vm1026, %v1028, %v1024
    %v1030 = vmul.f32 1.0, %v1029
    %v1031 = vmul.f32 %v1010, %v712
    %v1032 = vmul.f32 %v991, %v1011
    %v1033 = vadd.f32 %v1031, %v1032
    %v1034 = vtanh.pop %v1033
    %v1035 = vmul.f32 %v1030, %v1034
    %s1036 = scalar_lea.vmem [#allocation3], 16
    %1037 = vst [vmem:[%s1036] sm:$0xff] %v1035
    %s1038 = smul.u32 3, 4
    %s1039 = smul.addr %s1038, 8
    %s1040 = scalar_lea.vmem %s0, %s1039
    %v1041 = vld [vmem:[%s1040] sm:$0xff]
    %v1042 = vld [vmem:[%s1040 + $0x8] sm:$0xff]
    %v1043 = vld [vmem:[%s1040 + $0x10] sm:$0xff]
    %v1044 = vld [vmem:[%s1040 + $0x18] sm:$0xff]
    %v1045 = vpack.c.bf16 %v1035, %v1035
    %v1046 = vld [vmem:[%s1] sm:$0xff]
    %v1047 = vld [vmem:[%s1 + $0x8] sm:$0xff]
    %v1048 = vld [vmem:[%s1 + $0x10] sm:$0xff]
    %v1049 = vld [vmem:[%s1 + $0x18] sm:$0xff]
    %v1050 = vld [vmem:[%s1 + $0x20] sm:$0xff]
    %v1051 = vld [vmem:[%s1 + $0x28] sm:$0xff]
    %v1052 = vld [vmem:[%s1 + $0x30] sm:$0xff]
    %v1053 = vld [vmem:[%s1 + $0x38] sm:$0xff]
    %v1054 = vld [vmem:[%s1 + $0x40] sm:$0xff]
    %v1055 = vld [vmem:[%s1 + $0x48] sm:$0xff]
    %v1056 = vld [vmem:[%s1 + $0x50] sm:$0xff]
    %v1057 = vld [vmem:[%s1 + $0x58] sm:$0xff]
    %v1058 = vld [vmem:[%s1 + $0x60] sm:$0xff]
    %v1059 = vld [vmem:[%s1 + $0x68] sm:$0xff]
    %v1060 = vld [vmem:[%s1 + $0x70] sm:$0xff]
    %v1061 = vld [vmem:[%s1 + $0x78] sm:$0xff]
    %v1062 = vld [vmem:[%s1 + $0x80] sm:$0xff]
    %v1063 = vld [vmem:[%s1 + $0x88] sm:$0xff]
    %v1064 = vld [vmem:[%s1 + $0x90] sm:$0xff]
    %v1065 = vld [vmem:[%s1 + $0x98] sm:$0xff]
    %v1066 = vld [vmem:[%s1 + $0xa0] sm:$0xff]
    %v1067 = vld [vmem:[%s1 + $0xa8] sm:$0xff]
    %v1068 = vld [vmem:[%s1 + $0xb0] sm:$0xff]
    %v1069 = vld [vmem:[%s1 + $0xb8] sm:$0xff]
    %v1070 = vld [vmem:[%s1 + $0xc0] sm:$0xff]
    %v1071 = vld [vmem:[%s1 + $0xc8] sm:$0xff]
    %v1072 = vld [vmem:[%s1 + $0xd0] sm:$0xff]
    %v1073 = vld [vmem:[%s1 + $0xd8] sm:$0xff]
    %v1074 = vld [vmem:[%s1 + $0xe0] sm:$0xff]
    %v1075 = vld [vmem:[%s1 + $0xe8] sm:$0xff]
    %v1076 = vld [vmem:[%s1 + $0xf0] sm:$0xff]
    %v1077 = vld [vmem:[%s1 + $0xf8] sm:$0xff]
    %v1110 = vunpack.c.l.b16 %v1046
    %v1111 = vunpack.c.h.b16 %v1046
    %v1112 = vunpack.c.l.b16 %v1047
    %v1113 = vunpack.c.h.b16 %v1047
    %v1114 = vunpack.c.l.b16 %v1048
    %v1115 = vunpack.c.h.b16 %v1048
    %v1116 = vunpack.c.l.b16 %v1049
    %v1117 = vunpack.c.h.b16 %v1049
    %v1118 = vunpack.c.l.b16 %v1050
    %v1119 = vunpack.c.h.b16 %v1050
    %v1120 = vunpack.c.l.b16 %v1051
    %v1121 = vunpack.c.h.b16 %v1051
    %v1122 = vunpack.c.l.b16 %v1052
    %v1123 = vunpack.c.h.b16 %v1052
    %v1124 = vunpack.c.l.b16 %v1053
    %v1125 = vunpack.c.h.b16 %v1053
    %v1126 = vunpack.c.l.b16 %v1054
    %v1127 = vunpack.c.h.b16 %v1054
    %v1128 = vunpack.c.l.b16 %v1055
    %v1129 = vunpack.c.h.b16 %v1055
    %v1130 = vunpack.c.l.b16 %v1056
    %v1131 = vunpack.c.h.b16 %v1056
    %v1132 = vunpack.c.l.b16 %v1057
    %v1133 = vunpack.c.h.b16 %v1057
    %v1134 = vunpack.c.l.b16 %v1058
    %v1135 = vunpack.c.h.b16 %v1058
    %v1136 = vunpack.c.l.b16 %v1059
    %v1137 = vunpack.c.h.b16 %v1059
    %v1138 = vunpack.c.l.b16 %v1060
    %v1139 = vunpack.c.h.b16 %v1060
    %v1140 = vunpack.c.l.b16 %v1061
    %v1141 = vunpack.c.h.b16 %v1061
    %v1142 = vunpack.c.l.b16 %v1062
    %v1143 = vunpack.c.h.b16 %v1062
    %v1144 = vunpack.c.l.b16 %v1063
    %v1145 = vunpack.c.h.b16 %v1063
    %v1146 = vunpack.c.l.b16 %v1064
    %v1147 = vunpack.c.h.b16 %v1064
    %v1148 = vunpack.c.l.b16 %v1065
    %v1149 = vunpack.c.h.b16 %v1065
    %v1150 = vunpack.c.l.b16 %v1066
    %v1151 = vunpack.c.h.b16 %v1066
    %v1152 = vunpack.c.l.b16 %v1067
    %v1153 = vunpack.c.h.b16 %v1067
    %v1154 = vunpack.c.l.b16 %v1068
    %v1155 = vunpack.c.h.b16 %v1068
    %v1156 = vunpack.c.l.b16 %v1069
    %v1157 = vunpack.c.h.b16 %v1069
    %v1158 = vunpack.c.l.b16 %v1070
    %v1159 = vunpack.c.h.b16 %v1070
    %v1160 = vunpack.c.l.b16 %v1071
    %v1161 = vunpack.c.h.b16 %v1071
    %v1162 = vunpack.c.l.b16 %v1072
    %v1163 = vunpack.c.h.b16 %v1072
    %v1164 = vunpack.c.l.b16 %v1073
    %v1165 = vunpack.c.h.b16 %v1073
    %v1166 = vunpack.c.l.b16 %v1074
    %v1167 = vunpack.c.h.b16 %v1074
    %v1168 = vunpack.c.l.b16 %v1075
    %v1169 = vunpack.c.h.b16 %v1075
    %v1170 = vunpack.c.l.b16 %v1076
    %v1171 = vunpack.c.h.b16 %v1076
    %v1172 = vunpack.c.l.b16 %v1077
    %v1173 = vunpack.c.h.b16 %v1077
    %v1174 = vpack.c.b16 %v1114, %v1110
    %v1175 = vpack.c.b16 %v1115, %v1111
    %v1176 = vpack.c.b16 %v1116, %v1112
    %v1177 = vpack.c.b16 %v1117, %v1113
    %v1178 = vpack.c.b16 %v1122, %v1118
    %v1179 = vpack.c.b16 %v1123, %v1119
    %v1180 = vpack.c.b16 %v1124, %v1120
    %v1181 = vpack.c.b16 %v1125, %v1121
    %v1182 = vpack.c.b16 %v1130, %v1126
    %v1183 = vpack.c.b16 %v1131, %v1127
    %v1184 = vpack.c.b16 %v1132, %v1128
    %v1185 = vpack.c.b16 %v1133, %v1129
    %v1186 = vpack.c.b16 %v1138, %v1134
    %v1187 = vpack.c.b16 %v1139, %v1135
    %v1188 = vpack.c.b16 %v1140, %v1136
    %v1189 = vpack.c.b16 %v1141, %v1137
    %v1190 = vpack.c.b16 %v1146, %v1142
    %v1191 = vpack.c.b16 %v1147, %v1143
    %v1192 = vpack.c.b16 %v1148, %v1144
    %v1193 = vpack.c.b16 %v1149, %v1145
    %v1194 = vpack.c.b16 %v1154, %v1150
    %v1195 = vpack.c.b16 %v1155, %v1151
    %v1196 = vpack.c.b16 %v1156, %v1152
    %v1197 = vpack.c.b16 %v1157, %v1153
    %v1198 = vpack.c.b16 %v1162, %v1158
    %v1199 = vpack.c.b16 %v1163, %v1159
    %v1200 = vpack.c.b16 %v1164, %v1160
    %v1201 = vpack.c.b16 %v1165, %v1161
    %v1202 = vpack.c.b16 %v1170, %v1166
    %v1203 = vpack.c.b16 %v1171, %v1167
    %v1204 = vpack.c.b16 %v1172, %v1168
    %v1205 = vpack.c.b16 %v1173, %v1169
    %1238 = vmatpush.bf16.msra.mxu0 %v1202
    %1239 = vmatpush.bf16.msra.mxu0 %v1198
    %1240 = vmatpush.bf16.msra.mxu0 %v1194
    %1241 = vmatpush.bf16.msra.mxu0 %v1190
    %1242 = vmatpush.bf16.msra.mxu0 %v1186
    %1243 = vmatpush.bf16.msra.mxu0 %v1182
    %1244 = vmatpush.bf16.msra.mxu0 %v1178
    %1245 = vmatpush.bf16.msra.mxu0 %v1174
    %1246 = vmatmul.bf16.gmra.mxu0 %v1045
    %v1247 = vpop.f32.mrf.mxu0
    %v1248 = vadd.f32 0.0, %v1247
    %v1249 = vpop.f32.mrf.mxu0
    %1250 = vdwg.mxu0
    %1251 = vmatpush.bf16.msra.mxu0 %v1203
    %1252 = vmatpush.bf16.msra.mxu0 %v1199
    %1253 = vmatpush.bf16.msra.mxu0 %v1195
    %1254 = vmatpush.bf16.msra.mxu0 %v1191
    %1255 = vmatpush.bf16.msra.mxu0 %v1187
    %1256 = vmatpush.bf16.msra.mxu0 %v1183
    %1257 = vmatpush.bf16.msra.mxu0 %v1179
    %1258 = vmatpush.bf16.msra.mxu0 %v1175
    %1259 = vmatmul.bf16.gmra.mxu0 %v1045
    %v1260 = vpop.f32.mrf.mxu0
    %v1261 = vadd.f32 0.0, %v1260
    %v1262 = vpop.f32.mrf.mxu0
    %1263 = vdwg.mxu0
    %1264 = vmatpush.bf16.msra.mxu0 %v1204
    %1265 = vmatpush.bf16.msra.mxu0 %v1200
    %1266 = vmatpush.bf16.msra.mxu0 %v1196
    %1267 = vmatpush.bf16.msra.mxu0 %v1192
    %1268 = vmatpush.bf16.msra.mxu0 %v1188
    %1269 = vmatpush.bf16.msra.mxu0 %v1184
    %1270 = vmatpush.bf16.msra.mxu0 %v1180
    %1271 = vmatpush.bf16.msra.mxu0 %v1176
    %1272 = vmatmul.bf16.gmra.mxu0 %v1045
    %v1273 = vpop.f32.mrf.mxu0
    %v1274 = vadd.f32 0.0, %v1273
    %v1275 = vpop.f32.mrf.mxu0
    %1276 = vdwg.mxu0
    %1277 = vmatpush.bf16.msra.mxu0 %v1205
    %1278 = vmatpush.bf16.msra.mxu0 %v1201
    %1279 = vmatpush.bf16.msra.mxu0 %v1197
    %1280 = vmatpush.bf16.msra.mxu0 %v1193
    %1281 = vmatpush.bf16.msra.mxu0 %v1189
    %1282 = vmatpush.bf16.msra.mxu0 %v1185
    %1283 = vmatpush.bf16.msra.mxu0 %v1181
    %1284 = vmatpush.bf16.msra.mxu0 %v1177
    %1285 = vmatmul.bf16.gmra.mxu0 %v1045
    %v1286 = vpop.f32.mrf.mxu0
    %v1287 = vadd.f32 0.0, %v1286
    %v1288 = vpop.f32.mrf.mxu0
    %1289 = vdwg.mxu0
    %v1290 = vadd.f32 %v1041, %v1248
    %v1291 = vadd.f32 %v1042, %v1261
    %v1292 = vadd.f32 %v1043, %v1274
    %v1293 = vadd.f32 %v1044, %v1287
    %v1294 = vxor.u32 %v1290, 2147483648
    %v1295 = vmul.f32 %v1294, 1.442695
    %v1296 = vpow.pop %v1295
    %v1297 = vadd.f32 %v1296, 1.0
    %v1298 = vrcp.pop %v1297
    %v1299 = vmul.f32 %v1297, %v1298
    %v1300 = vsub.f32 1.0, %v1299
    %v1301 = vmul.f32 %v1298, %v1300
    %v1302 = vadd.f32 %v1298, %v1301
    %vm1303 = vweird.f32 %v1297
    %vm1304 = vweird.f32 %v1298
    %vm1305 = vmor %vm1303, %vm1304
    %v1306 = vsel %vm1305, %v1298, %v1302
    %v1307 = vand.u32 2147483647, %v1297
    %vm1308 = vcmp.eq.f32.partialorder %v1307, 8.507059e+37
    %v1309 = vand.u32 %v1297, 2147483648
    %v1310 = vor.u32 1.1754944e-38, %v1309
    %v1311 = vsel %vm1308, %v1310, %v1306
    %v1312 = vmul.f32 1.0, %v1311
    %v1313 = vxor.u32 %v1291, 2147483648
    %v1314 = vmul.f32 %v1313, 1.442695
    %v1315 = vpow.pop %v1314
    %v1316 = vadd.f32 %v1315, 1.0
    %v1317 = vrcp.pop %v1316
    %v1318 = vmul.f32 %v1316, %v1317
    %v1319 = vsub.f32 1.0, %v1318
    %v1320 = vmul.f32 %v1317, %v1319
    %v1321 = vadd.f32 %v1317, %v1320
    %vm1322 = vweird.f32 %v1316
    %vm1323 = vweird.f32 %v1317
    %vm1324 = vmor %vm1322, %vm1323
    %v1325 = vsel %vm1324, %v1317, %v1321
    %v1326 = vand.u32 2147483647, %v1316
    %vm1327 = vcmp.eq.f32.partialorder %v1326, 8.507059e+37
    %v1328 = vand.u32 %v1316, 2147483648
    %v1329 = vor.u32 1.1754944e-38, %v1328
    %v1330 = vsel %vm1327, %v1329, %v1325
    %v1331 = vmul.f32 1.0, %v1330
    %v1332 = vtanh.pop %v1292
    %v1333 = vxor.u32 %v1293, 2147483648
    %v1334 = vmul.f32 %v1333, 1.442695
    %v1335 = vpow.pop %v1334
    %v1336 = vadd.f32 %v1335, 1.0
    %v1337 = vrcp.pop %v1336
    %v1338 = vmul.f32 %v1336, %v1337
    %v1339 = vsub.f32 1.0, %v1338
    %v1340 = vmul.f32 %v1337, %v1339
    %v1341 = vadd.f32 %v1337, %v1340
    %vm1342 = vweird.f32 %v1336
    %vm1343 = vweird.f32 %v1337
    %vm1344 = vmor %vm1342, %vm1343
    %v1345 = vsel %vm1344, %v1337, %v1341
    %v1346 = vand.u32 2147483647, %v1336
    %vm1347 = vcmp.eq.f32.partialorder %v1346, 8.507059e+37
    %v1348 = vand.u32 %v1336, 2147483648
    %v1349 = vor.u32 1.1754944e-38, %v1348
    %v1350 = vsel %vm1347, %v1349, %v1345
    %v1351 = vmul.f32 1.0, %v1350
    %v1352 = vmul.f32 %v1331, %v1033
    %v1353 = vmul.f32 %v1312, %v1332
    %v1354 = vadd.f32 %v1352, %v1353
    %v1355 = vtanh.pop %v1354
    %v1356 = vmul.f32 %v1351, %v1355
    %s1357 = scalar_lea.vmem [#allocation3], 24
    %1358 = vst [vmem:[%s1357] sm:$0xff] %v1356
    %s1359 = smul.u32 4, 4
    %s1360 = smul.addr %s1359, 8
    %s1361 = scalar_lea.vmem %s0, %s1360
    %v1362 = vld [vmem:[%s1361] sm:$0xff]
    %v1363 = vld [vmem:[%s1361 + $0x8] sm:$0xff]
    %v1364 = vld [vmem:[%s1361 + $0x10] sm:$0xff]
    %v1365 = vld [vmem:[%s1361 + $0x18] sm:$0xff]
    %v1366 = vpack.c.bf16 %v1356, %v1356
    %v1367 = vld [vmem:[%s1] sm:$0xff]
    %v1368 = vld [vmem:[%s1 + $0x8] sm:$0xff]
    %v1369 = vld [vmem:[%s1 + $0x10] sm:$0xff]
    %v1370 = vld [vmem:[%s1 + $0x18] sm:$0xff]
    %v1371 = vld [vmem:[%s1 + $0x20] sm:$0xff]
    %v1372 = vld [vmem:[%s1 + $0x28] sm:$0xff]
    %v1373 = vld [vmem:[%s1 + $0x30] sm:$0xff]
    %v1374 = vld [vmem:[%s1 + $0x38] sm:$0xff]
    %v1375 = vld [vmem:[%s1 + $0x40] sm:$0xff]
    %v1376 = vld [vmem:[%s1 + $0x48] sm:$0xff]
    %v1377 = vld [vmem:[%s1 + $0x50] sm:$0xff]
    %v1378 = vld [vmem:[%s1 + $0x58] sm:$0xff]
    %v1379 = vld [vmem:[%s1 + $0x60] sm:$0xff]
    %v1380 = vld [vmem:[%s1 + $0x68] sm:$0xff]
    %v1381 = vld [vmem:[%s1 + $0x70] sm:$0xff]
    %v1382 = vld [vmem:[%s1 + $0x78] sm:$0xff]
    %v1383 = vld [vmem:[%s1 + $0x80] sm:$0xff]
    %v1384 = vld [vmem:[%s1 + $0x88] sm:$0xff]
    %v1385 = vld [vmem:[%s1 + $0x90] sm:$0xff]
    %v1386 = vld [vmem:[%s1 + $0x98] sm:$0xff]
    %v1387 = vld [vmem:[%s1 + $0xa0] sm:$0xff]
    %v1388 = vld [vmem:[%s1 + $0xa8] sm:$0xff]
    %v1389 = vld [vmem:[%s1 + $0xb0] sm:$0xff]
    %v1390 = vld [vmem:[%s1 + $0xb8] sm:$0xff]
    %v1391 = vld [vmem:[%s1 + $0xc0] sm:$0xff]
    %v1392 = vld [vmem:[%s1 + $0xc8] sm:$0xff]
    %v1393 = vld [vmem:[%s1 + $0xd0] sm:$0xff]
    %v1394 = vld [vmem:[%s1 + $0xd8] sm:$0xff]
    %v1395 = vld [vmem:[%s1 + $0xe0] sm:$0xff]
    %v1396 = vld [vmem:[%s1 + $0xe8] sm:$0xff]
    %v1397 = vld [vmem:[%s1 + $0xf0] sm:$0xff]
    %v1398 = vld [vmem:[%s1 + $0xf8] sm:$0xff]
    %v1431 = vunpack.c.l.b16 %v1367
    %v1432 = vunpack.c.h.b16 %v1367
    %v1433 = vunpack.c.l.b16 %v1368
    %v1434 = vunpack.c.h.b16 %v1368
    %v1435 = vunpack.c.l.b16 %v1369
    %v1436 = vunpack.c.h.b16 %v1369
    %v1437 = vunpack.c.l.b16 %v1370
    %v1438 = vunpack.c.h.b16 %v1370
    %v1439 = vunpack.c.l.b16 %v1371
    %v1440 = vunpack.c.h.b16 %v1371
    %v1441 = vunpack.c.l.b16 %v1372
    %v1442 = vunpack.c.h.b16 %v1372
    %v1443 = vunpack.c.l.b16 %v1373
    %v1444 = vunpack.c.h.b16 %v1373
    %v1445 = vunpack.c.l.b16 %v1374
    %v1446 = vunpack.c.h.b16 %v1374
    %v1447 = vunpack.c.l.b16 %v1375
    %v1448 = vunpack.c.h.b16 %v1375
    %v1449 = vunpack.c.l.b16 %v1376
    %v1450 = vunpack.c.h.b16 %v1376
    %v1451 = vunpack.c.l.b16 %v1377
    %v1452 = vunpack.c.h.b16 %v1377
    %v1453 = vunpack.c.l.b16 %v1378
    %v1454 = vunpack.c.h.b16 %v1378
    %v1455 = vunpack.c.l.b16 %v1379
    %v1456 = vunpack.c.h.b16 %v1379
    %v1457 = vunpack.c.l.b16 %v1380
    %v1458 = vunpack.c.h.b16 %v1380
    %v1459 = vunpack.c.l.b16 %v1381
    %v1460 = vunpack.c.h.b16 %v1381
    %v1461 = vunpack.c.l.b16 %v1382
    %v1462 = vunpack.c.h.b16 %v1382
    %v1463 = vunpack.c.l.b16 %v1383
    %v1464 = vunpack.c.h.b16 %v1383
    %v1465 = vunpack.c.l.b16 %v1384
    %v1466 = vunpack.c.h.b16 %v1384
    %v1467 = vunpack.c.l.b16 %v1385
    %v1468 = vunpack.c.h.b16 %v1385
    %v1469 = vunpack.c.l.b16 %v1386
    %v1470 = vunpack.c.h.b16 %v1386
    %v1471 = vunpack.c.l.b16 %v1387
    %v1472 = vunpack.c.h.b16 %v1387
    %v1473 = vunpack.c.l.b16 %v1388
    %v1474 = vunpack.c.h.b16 %v1388
    %v1475 = vunpack.c.l.b16 %v1389
    %v1476 = vunpack.c.h.b16 %v1389
    %v1477 = vunpack.c.l.b16 %v1390
    %v1478 = vunpack.c.h.b16 %v1390
    %v1479 = vunpack.c.l.b16 %v1391
    %v1480 = vunpack.c.h.b16 %v1391
    %v1481 = vunpack.c.l.b16 %v1392
    %v1482 = vunpack.c.h.b16 %v1392
    %v1483 = vunpack.c.l.b16 %v1393
    %v1484 = vunpack.c.h.b16 %v1393
    %v1485 = vunpack.c.l.b16 %v1394
    %v1486 = vunpack.c.h.b16 %v1394
    %v1487 = vunpack.c.l.b16 %v1395
    %v1488 = vunpack.c.h.b16 %v1395
    %v1489 = vunpack.c.l.b16 %v1396
    %v1490 = vunpack.c.h.b16 %v1396
    %v1491 = vunpack.c.l.b16 %v1397
    %v1492 = vunpack.c.h.b16 %v1397
    %v1493 = vunpack.c.l.b16 %v1398
    %v1494 = vunpack.c.h.b16 %v1398
    %v1495 = vpack.c.b16 %v1435, %v1431
    %v1496 = vpack.c.b16 %v1436, %v1432
    %v1497 = vpack.c.b16 %v1437, %v1433
    %v1498 = vpack.c.b16 %v1438, %v1434
    %v1499 = vpack.c.b16 %v1443, %v1439
    %v1500 = vpack.c.b16 %v1444, %v1440
    %v1501 = vpack.c.b16 %v1445, %v1441
    %v1502 = vpack.c.b16 %v1446, %v1442
    %v1503 = vpack.c.b16 %v1451, %v1447
    %v1504 = vpack.c.b16 %v1452, %v1448
    %v1505 = vpack.c.b16 %v1453, %v1449
    %v1506 = vpack.c.b16 %v1454, %v1450
    %v1507 = vpack.c.b16 %v1459, %v1455
    %v1508 = vpack.c.b16 %v1460, %v1456
    %v1509 = vpack.c.b16 %v1461, %v1457
    %v1510 = vpack.c.b16 %v1462, %v1458
    %v1511 = vpack.c.b16 %v1467, %v1463
    %v1512 = vpack.c.b16 %v1468, %v1464
    %v1513 = vpack.c.b16 %v1469, %v1465
    %v1514 = vpack.c.b16 %v1470, %v1466
    %v1515 = vpack.c.b16 %v1475, %v1471
    %v1516 = vpack.c.b16 %v1476, %v1472
    %v1517 = vpack.c.b16 %v1477, %v1473
    %v1518 = vpack.c.b16 %v1478, %v1474
    %v1519 = vpack.c.b16 %v1483, %v1479
    %v1520 = vpack.c.b16 %v1484, %v1480
    %v1521 = vpack.c.b16 %v1485, %v1481
    %v1522 = vpack.c.b16 %v1486, %v1482
    %v1523 = vpack.c.b16 %v1491, %v1487
    %v1524 = vpack.c.b16 %v1492, %v1488
    %v1525 = vpack.c.b16 %v1493, %v1489
    %v1526 = vpack.c.b16 %v1494, %v1490
    %1559 = vmatpush.bf16.msra.mxu0 %v1523
    %1560 = vmatpush.bf16.msra.mxu0 %v1519
    %1561 = vmatpush.bf16.msra.mxu0 %v1515
    %1562 = vmatpush.bf16.msra.mxu0 %v1511
    %1563 = vmatpush.bf16.msra.mxu0 %v1507
    %1564 = vmatpush.bf16.msra.mxu0 %v1503
    %1565 = vmatpush.bf16.msra.mxu0 %v1499
    %1566 = vmatpush.bf16.msra.mxu0 %v1495
    %1567 = vmatmul.bf16.gmra.mxu0 %v1366
    %v1568 = vpop.f32.mrf.mxu0
    %v1569 = vadd.f32 0.0, %v1568
    %v1570 = vpop.f32.mrf.mxu0
    %1571 = vdwg.mxu0
    %1572 = vmatpush.bf16.msra.mxu0 %v1524
    %1573 = vmatpush.bf16.msra.mxu0 %v1520
    %1574 = vmatpush.bf16.msra.mxu0 %v1516
    %1575 = vmatpush.bf16.msra.mxu0 %v1512
    %1576 = vmatpush.bf16.msra.mxu0 %v1508
    %1577 = vmatpush.bf16.msra.mxu0 %v1504
    %1578 = vmatpush.bf16.msra.mxu0 %v1500
    %1579 = vmatpush.bf16.msra.mxu0 %v1496
    %1580 = vmatmul.bf16.gmra.mxu0 %v1366
    %v1581 = vpop.f32.mrf.mxu0
    %v1582 = vadd.f32 0.0, %v1581
    %v1583 = vpop.f32.mrf.mxu0
    %1584 = vdwg.mxu0
    %1585 = vmatpush.bf16.msra.mxu0 %v1525
    %1586 = vmatpush.bf16.msra.mxu0 %v1521
    %1587 = vmatpush.bf16.msra.mxu0 %v1517
    %1588 = vmatpush.bf16.msra.mxu0 %v1513
    %1589 = vmatpush.bf16.msra.mxu0 %v1509
    %1590 = vmatpush.bf16.msra.mxu0 %v1505
    %1591 = vmatpush.bf16.msra.mxu0 %v1501
    %1592 = vmatpush.bf16.msra.mxu0 %v1497
    %1593 = vmatmul.bf16.gmra.mxu0 %v1366
    %v1594 = vpop.f32.mrf.mxu0
    %v1595 = vadd.f32 0.0, %v1594
    %v1596 = vpop.f32.mrf.mxu0
    %1597 = vdwg.mxu0
    %1598 = vmatpush.bf16.msra.mxu0 %v1526
    %1599 = vmatpush.bf16.msra.mxu0 %v1522
    %1600 = vmatpush.bf16.msra.mxu0 %v1518
    %1601 = vmatpush.bf16.msra.mxu0 %v1514
    %1602 = vmatpush.bf16.msra.mxu0 %v1510
    %1603 = vmatpush.bf16.msra.mxu0 %v1506
    %1604 = vmatpush.bf16.msra.mxu0 %v1502
    %1605 = vmatpush.bf16.msra.mxu0 %v1498
    %1606 = vmatmul.bf16.gmra.mxu0 %v1366
    %v1607 = vpop.f32.mrf.mxu0
    %v1608 = vadd.f32 0.0, %v1607
    %v1609 = vpop.f32.mrf.mxu0
    %1610 = vdwg.mxu0
    %v1611 = vadd.f32 %v1362, %v1569
    %v1612 = vadd.f32 %v1363, %v1582
    %v1613 = vadd.f32 %v1364, %v1595
    %v1614 = vadd.f32 %v1365, %v1608
    %v1615 = vxor.u32 %v1611, 2147483648
    %v1616 = vmul.f32 %v1615, 1.442695
    %v1617 = vpow.pop %v1616
    %v1618 = vadd.f32 %v1617, 1.0
    %v1619 = vrcp.pop %v1618
    %v1620 = vmul.f32 %v1618, %v1619
    %v1621 = vsub.f32 1.0, %v1620
    %v1622 = vmul.f32 %v1619, %v1621
    %v1623 = vadd.f32 %v1619, %v1622
    %vm1624 = vweird.f32 %v1618
    %vm1625 = vweird.f32 %v1619
    %vm1626 = vmor %vm1624, %vm1625
    %v1627 = vsel %vm1626, %v1619, %v1623
    %v1628 = vand.u32 2147483647, %v1618
    %vm1629 = vcmp.eq.f32.partialorder %v1628, 8.507059e+37
    %v1630 = vand.u32 %v1618, 2147483648
    %v1631 = vor.u32 1.1754944e-38, %v1630
    %v1632 = vsel %vm1629, %v1631, %v1627
    %v1633 = vmul.f32 1.0, %v1632
    %v1634 = vxor.u32 %v1612, 2147483648
    %v1635 = vmul.f32 %v1634, 1.442695
    %v1636 = vpow.pop %v1635
    %v1637 = vadd.f32 %v1636, 1.0
    %v1638 = vrcp.pop %v1637
    %v1639 = vmul.f32 %v1637, %v1638
    %v1640 = vsub.f32 1.0, %v1639
    %v1641 = vmul.f32 %v1638, %v1640
    %v1642 = vadd.f32 %v1638, %v1641
    %vm1643 = vweird.f32 %v1637
    %vm1644 = vweird.f32 %v1638
    %vm1645 = vmor %vm1643, %vm1644
    %v1646 = vsel %vm1645, %v1638, %v1642
    %v1647 = vand.u32 2147483647, %v1637
    %vm1648 = vcmp.eq.f32.partialorder %v1647, 8.507059e+37
    %v1649 = vand.u32 %v1637, 2147483648
    %v1650 = vor.u32 1.1754944e-38, %v1649
    %v1651 = vsel %vm1648, %v1650, %v1646
    %v1652 = vmul.f32 1.0, %v1651
    %v1653 = vtanh.pop %v1613
    %v1654 = vxor.u32 %v1614, 2147483648
    %v1655 = vmul.f32 %v1654, 1.442695
    %v1656 = vpow.pop %v1655
    %v1657 = vadd.f32 %v1656, 1.0
    %v1658 = vrcp.pop %v1657
    %v1659 = vmul.f32 %v1657, %v1658
    %v1660 = vsub.f32 1.0, %v1659
    %v1661 = vmul.f32 %v1658, %v1660
    %v1662 = vadd.f32 %v1658, %v1661
    %vm1663 = vweird.f32 %v1657
    %vm1664 = vweird.f32 %v1658
    %vm1665 = vmor %vm1663, %vm1664
    %v1666 = vsel %vm1665, %v1658, %v1662
    %v1667 = vand.u32 2147483647, %v1657
    %vm1668 = vcmp.eq.f32.partialorder %v1667, 8.507059e+37
    %v1669 = vand.u32 %v1657, 2147483648
    %v1670 = vor.u32 1.1754944e-38, %v1669
    %v1671 = vsel %vm1668, %v1670, %v1666
    %v1672 = vmul.f32 1.0, %v1671
    %v1673 = vmul.f32 %v1652, %v1354
    %v1674 = vmul.f32 %v1633, %v1653
    %v1675 = vadd.f32 %v1673, %v1674
    %v1676 = vtanh.pop %v1675
    %v1677 = vmul.f32 %v1672, %v1676
    %s1678 = scalar_lea.vmem [#allocation3], 32
    %1679 = vst [vmem:[%s1678] sm:$0xff] %v1677
    %s1680 = smul.u32 5, 4
    %s1681 = smul.addr %s1680, 8
    %s1682 = scalar_lea.vmem %s0, %s1681
    %v1683 = vld [vmem:[%s1682] sm:$0xff]
    %v1684 = vld [vmem:[%s1682 + $0x8] sm:$0xff]
    %v1685 = vld [vmem:[%s1682 + $0x10] sm:$0xff]
    %v1686 = vld [vmem:[%s1682 + $0x18] sm:$0xff]
    %v1687 = vpack.c.bf16 %v1677, %v1677
    %v1688 = vld [vmem:[%s1] sm:$0xff]
    %v1689 = vld [vmem:[%s1 + $0x8] sm:$0xff]
    %v1690 = vld [vmem:[%s1 + $0x10] sm:$0xff]
    %v1691 = vld [vmem:[%s1 + $0x18] sm:$0xff]
    %v1692 = vld [vmem:[%s1 + $0x20] sm:$0xff]
    %v1693 = vld [vmem:[%s1 + $0x28] sm:$0xff]
    %v1694 = vld [vmem:[%s1 + $0x30] sm:$0xff]
    %v1695 = vld [vmem:[%s1 + $0x38] sm:$0xff]
    %v1696 = vld [vmem:[%s1 + $0x40] sm:$0xff]
    %v1697 = vld [vmem:[%s1 + $0x48] sm:$0xff]
    %v1698 = vld [vmem:[%s1 + $0x50] sm:$0xff]
    %v1699 = vld [vmem:[%s1 + $0x58] sm:$0xff]
    %v1700 = vld [vmem:[%s1 + $0x60] sm:$0xff]
    %v1701 = vld [vmem:[%s1 + $0x68] sm:$0xff]
    %v1702 = vld [vmem:[%s1 + $0x70] sm:$0xff]
    %v1703 = vld [vmem:[%s1 + $0x78] sm:$0xff]
    %v1704 = vld [vmem:[%s1 + $0x80] sm:$0xff]
    %v1705 = vld [vmem:[%s1 + $0x88] sm:$0xff]
    %v1706 = vld [vmem:[%s1 + $0x90] sm:$0xff]
    %v1707 = vld [vmem:[%s1 + $0x98] sm:$0xff]
    %v1708 = vld [vmem:[%s1 + $0xa0] sm:$0xff]
    %v1709 = vld [vmem:[%s1 + $0xa8] sm:$0xff]
    %v1710 = vld [vmem:[%s1 + $0xb0] sm:$0xff]
    %v1711 = vld [vmem:[%s1 + $0xb8] sm:$0xff]
    %v1712 = vld [vmem:[%s1 + $0xc0] sm:$0xff]
    %v1713 = vld [vmem:[%s1 + $0xc8] sm:$0xff]
    %v1714 = vld [vmem:[%s1 + $0xd0] sm:$0xff]
    %v1715 = vld [vmem:[%s1 + $0xd8] sm:$0xff]
    %v1716 = vld [vmem:[%s1 + $0xe0] sm:$0xff]
    %v1717 = vld [vmem:[%s1 + $0xe8] sm:$0xff]
    %v1718 = vld [vmem:[%s1 + $0xf0] sm:$0xff]
    %v1719 = vld [vmem:[%s1 + $0xf8] sm:$0xff]
    %v1752 = vunpack.c.l.b16 %v1688
    %v1753 = vunpack.c.h.b16 %v1688
    %v1754 = vunpack.c.l.b16 %v1689
    %v1755 = vunpack.c.h.b16 %v1689
    %v1756 = vunpack.c.l.b16 %v1690
    %v1757 = vunpack.c.h.b16 %v1690
    %v1758 = vunpack.c.l.b16 %v1691
    %v1759 = vunpack.c.h.b16 %v1691
    %v1760 = vunpack.c.l.b16 %v1692
    %v1761 = vunpack.c.h.b16 %v1692
    %v1762 = vunpack.c.l.b16 %v1693
    %v1763 = vunpack.c.h.b16 %v1693
    %v1764 = vunpack.c.l.b16 %v1694
    %v1765 = vunpack.c.h.b16 %v1694
    %v1766 = vunpack.c.l.b16 %v1695
    %v1767 = vunpack.c.h.b16 %v1695
    %v1768 = vunpack.c.l.b16 %v1696
    %v1769 = vunpack.c.h.b16 %v1696
    %v1770 = vunpack.c.l.b16 %v1697
    %v1771 = vunpack.c.h.b16 %v1697
    %v1772 = vunpack.c.l.b16 %v1698
    %v1773 = vunpack.c.h.b16 %v1698
    %v1774 = vunpack.c.l.b16 %v1699
    %v1775 = vunpack.c.h.b16 %v1699
    %v1776 = vunpack.c.l.b16 %v1700
    %v1777 = vunpack.c.h.b16 %v1700
    %v1778 = vunpack.c.l.b16 %v1701
    %v1779 = vunpack.c.h.b16 %v1701
    %v1780 = vunpack.c.l.b16 %v1702
    %v1781 = vunpack.c.h.b16 %v1702
    %v1782 = vunpack.c.l.b16 %v1703
    %v1783 = vunpack.c.h.b16 %v1703
    %v1784 = vunpack.c.l.b16 %v1704
    %v1785 = vunpack.c.h.b16 %v1704
    %v1786 = vunpack.c.l.b16 %v1705
    %v1787 = vunpack.c.h.b16 %v1705
    %v1788 = vunpack.c.l.b16 %v1706
    %v1789 = vunpack.c.h.b16 %v1706
    %v1790 = vunpack.c.l.b16 %v1707
    %v1791 = vunpack.c.h.b16 %v1707
    %v1792 = vunpack.c.l.b16 %v1708
    %v1793 = vunpack.c.h.b16 %v1708
    %v1794 = vunpack.c.l.b16 %v1709
    %v1795 = vunpack.c.h.b16 %v1709
    %v1796 = vunpack.c.l.b16 %v1710
    %v1797 = vunpack.c.h.b16 %v1710
    %v1798 = vunpack.c.l.b16 %v1711
    %v1799 = vunpack.c.h.b16 %v1711
    %v1800 = vunpack.c.l.b16 %v1712
    %v1801 = vunpack.c.h.b16 %v1712
    %v1802 = vunpack.c.l.b16 %v1713
    %v1803 = vunpack.c.h.b16 %v1713
    %v1804 = vunpack.c.l.b16 %v1714
    %v1805 = vunpack.c.h.b16 %v1714
    %v1806 = vunpack.c.l.b16 %v1715
    %v1807 = vunpack.c.h.b16 %v1715
    %v1808 = vunpack.c.l.b16 %v1716
    %v1809 = vunpack.c.h.b16 %v1716
    %v1810 = vunpack.c.l.b16 %v1717
    %v1811 = vunpack.c.h.b16 %v1717
    %v1812 = vunpack.c.l.b16 %v1718
    %v1813 = vunpack.c.h.b16 %v1718
    %v1814 = vunpack.c.l.b16 %v1719
    %v1815 = vunpack.c.h.b16 %v1719
    %v1816 = vpack.c.b16 %v1756, %v1752
    %v1817 = vpack.c.b16 %v1757, %v1753
    %v1818 = vpack.c.b16 %v1758, %v1754
    %v1819 = vpack.c.b16 %v1759, %v1755
    %v1820 = vpack.c.b16 %v1764, %v1760
    %v1821 = vpack.c.b16 %v1765, %v1761
    %v1822 = vpack.c.b16 %v1766, %v1762
    %v1823 = vpack.c.b16 %v1767, %v1763
    %v1824 = vpack.c.b16 %v1772, %v1768
    %v1825 = vpack.c.b16 %v1773, %v1769
    %v1826 = vpack.c.b16 %v1774, %v1770
    %v1827 = vpack.c.b16 %v1775, %v1771
    %v1828 = vpack.c.b16 %v1780, %v1776
    %v1829 = vpack.c.b16 %v1781, %v1777
    %v1830 = vpack.c.b16 %v1782, %v1778
    %v1831 = vpack.c.b16 %v1783, %v1779
    %v1832 = vpack.c.b16 %v1788, %v1784
    %v1833 = vpack.c.b16 %v1789, %v1785
    %v1834 = vpack.c.b16 %v1790, %v1786
    %v1835 = vpack.c.b16 %v1791, %v1787
    %v1836 = vpack.c.b16 %v1796, %v1792
    %v1837 = vpack.c.b16 %v1797, %v1793
    %v1838 = vpack.c.b16 %v1798, %v1794
    %v1839 = vpack.c.b16 %v1799, %v1795
    %v1840 = vpack.c.b16 %v1804, %v1800
    %v1841 = vpack.c.b16 %v1805, %v1801
    %v1842 = vpack.c.b16 %v1806, %v1802
    %v1843 = vpack.c.b16 %v1807, %v1803
    %v1844 = vpack.c.b16 %v1812, %v1808
    %v1845 = vpack.c.b16 %v1813, %v1809
    %v1846 = vpack.c.b16 %v1814, %v1810
    %v1847 = vpack.c.b16 %v1815, %v1811
    %1880 = vmatpush.bf16.msra.mxu0 %v1844
    %1881 = vmatpush.bf16.msra.mxu0 %v1840
    %1882 = vmatpush.bf16.msra.mxu0 %v1836
    %1883 = vmatpush.bf16.msra.mxu0 %v1832
    %1884 = vmatpush.bf16.msra.mxu0 %v1828
    %1885 = vmatpush.bf16.msra.mxu0 %v1824
    %1886 = vmatpush.bf16.msra.mxu0 %v1820
    %1887 = vmatpush.bf16.msra.mxu0 %v1816
    %1888 = vmatmul.bf16.gmra.mxu0 %v1687
    %v1889 = vpop.f32.mrf.mxu0
    %v1890 = vadd.f32 0.0, %v1889
    %v1891 = vpop.f32.mrf.mxu0
    %1892 = vdwg.mxu0
    %1893 = vmatpush.bf16.msra.mxu0 %v1845
    %1894 = vmatpush.bf16.msra.mxu0 %v1841
    %1895 = vmatpush.bf16.msra.mxu0 %v1837
    %1896 = vmatpush.bf16.msra.mxu0 %v1833
    %1897 = vmatpush.bf16.msra.mxu0 %v1829
    %1898 = vmatpush.bf16.msra.mxu0 %v1825
    %1899 = vmatpush.bf16.msra.mxu0 %v1821
    %1900 = vmatpush.bf16.msra.mxu0 %v1817
    %1901 = vmatmul.bf16.gmra.mxu0 %v1687
    %v1902 = vpop.f32.mrf.mxu0
    %v1903 = vadd.f32 0.0, %v1902
    %v1904 = vpop.f32.mrf.mxu0
    %1905 = vdwg.mxu0
    %1906 = vmatpush.bf16.msra.mxu0 %v1846
    %1907 = vmatpush.bf16.msra.mxu0 %v1842
    %1908 = vmatpush.bf16.msra.mxu0 %v1838
    %1909 = vmatpush.bf16.msra.mxu0 %v1834
    %1910 = vmatpush.bf16.msra.mxu0 %v1830
    %1911 = vmatpush.bf16.msra.mxu0 %v1826
    %1912 = vmatpush.bf16.msra.mxu0 %v1822
    %1913 = vmatpush.bf16.msra.mxu0 %v1818
    %1914 = vmatmul.bf16.gmra.mxu0 %v1687
    %v1915 = vpop.f32.mrf.mxu0
    %v1916 = vadd.f32 0.0, %v1915
    %v1917 = vpop.f32.mrf.mxu0
    %1918 = vdwg.mxu0
    %1919 = vmatpush.bf16.msra.mxu0 %v1847
    %1920 = vmatpush.bf16.msra.mxu0 %v1843
    %1921 = vmatpush.bf16.msra.mxu0 %v1839
    %1922 = vmatpush.bf16.msra.mxu0 %v1835
    %1923 = vmatpush.bf16.msra.mxu0 %v1831
    %1924 = vmatpush.bf16.msra.mxu0 %v1827
    %1925 = vmatpush.bf16.msra.mxu0 %v1823
    %1926 = vmatpush.bf16.msra.mxu0 %v1819
    %1927 = vmatmul.bf16.gmra.mxu0 %v1687
    %v1928 = vpop.f32.mrf.mxu0
    %v1929 = vadd.f32 0.0, %v1928
    %v1930 = vpop.f32.mrf.mxu0
    %1931 = vdwg.mxu0
    %v1932 = vadd.f32 %v1683, %v1890
    %v1933 = vadd.f32 %v1684, %v1903
    %v1934 = vadd.f32 %v1685, %v1916
    %v1935 = vadd.f32 %v1686, %v1929
    %v1936 = vxor.u32 %v1932, 2147483648
    %v1937 = vmul.f32 %v1936, 1.442695
    %v1938 = vpow.pop %v1937
    %v1939 = vadd.f32 %v1938, 1.0
    %v1940 = vrcp.pop %v1939
    %v1941 = vmul.f32 %v1939, %v1940
    %v1942 = vsub.f32 1.0, %v1941
    %v1943 = vmul.f32 %v1940, %v1942
    %v1944 = vadd.f32 %v1940, %v1943
    %vm1945 = vweird.f32 %v1939
    %vm1946 = vweird.f32 %v1940
    %vm1947 = vmor %vm1945, %vm1946
    %v1948 = vsel %vm1947, %v1940, %v1944
    %v1949 = vand.u32 2147483647, %v1939
    %vm1950 = vcmp.eq.f32.partialorder %v1949, 8.507059e+37
    %v1951 = vand.u32 %v1939, 2147483648
    %v1952 = vor.u32 1.1754944e-38, %v1951
    %v1953 = vsel %vm1950, %v1952, %v1948
    %v1954 = vmul.f32 1.0, %v1953
    %v1955 = vxor.u32 %v1933, 2147483648
    %v1956 = vmul.f32 %v1955, 1.442695
    %v1957 = vpow.pop %v1956
    %v1958 = vadd.f32 %v1957, 1.0
    %v1959 = vrcp.pop %v1958
    %v1960 = vmul.f32 %v1958, %v1959
    %v1961 = vsub.f32 1.0, %v1960
    %v1962 = vmul.f32 %v1959, %v1961
    %v1963 = vadd.f32 %v1959, %v1962
    %vm1964 = vweird.f32 %v1958
    %vm1965 = vweird.f32 %v1959
    %vm1966 = vmor %vm1964, %vm1965
    %v1967 = vsel %vm1966, %v1959, %v1963
    %v1968 = vand.u32 2147483647, %v1958
    %vm1969 = vcmp.eq.f32.partialorder %v1968, 8.507059e+37
    %v1970 = vand.u32 %v1958, 2147483648
    %v1971 = vor.u32 1.1754944e-38, %v1970
    %v1972 = vsel %vm1969, %v1971, %v1967
    %v1973 = vmul.f32 1.0, %v1972
    %v1974 = vtanh.pop %v1934
    %v1975 = vxor.u32 %v1935, 2147483648
    %v1976 = vmul.f32 %v1975, 1.442695
    %v1977 = vpow.pop %v1976
    %v1978 = vadd.f32 %v1977, 1.0
    %v1979 = vrcp.pop %v1978
    %v1980 = vmul.f32 %v1978, %v1979
    %v1981 = vsub.f32 1.0, %v1980
    %v1982 = vmul.f32 %v1979, %v1981
    %v1983 = vadd.f32 %v1979, %v1982
    %vm1984 = vweird.f32 %v1978
    %vm1985 = vweird.f32 %v1979
    %vm1986 = vmor %vm1984, %vm1985
    %v1987 = vsel %vm1986, %v1979, %v1983
    %v1988 = vand.u32 2147483647, %v1978
    %vm1989 = vcmp.eq.f32.partialorder %v1988, 8.507059e+37
    %v1990 = vand.u32 %v1978, 2147483648
    %v1991 = vor.u32 1.1754944e-38, %v1990
    %v1992 = vsel %vm1989, %v1991, %v1987
    %v1993 = vmul.f32 1.0, %v1992
    %v1994 = vmul.f32 %v1973, %v1675
    %v1995 = vmul.f32 %v1954, %v1974
    %v1996 = vadd.f32 %v1994, %v1995
    %v1997 = vtanh.pop %v1996
    %v1998 = vmul.f32 %v1993, %v1997
    %s1999 = scalar_lea.vmem [#allocation3], 40
    %2000 = vst [vmem:[%s1999] sm:$0xff] %v1998
    %s2001 = smul.u32 6, 4
    %s2002 = smul.addr %s2001, 8
    %s2003 = scalar_lea.vmem %s0, %s2002
    %v2004 = vld [vmem:[%s2003] sm:$0xff]
    %v2005 = vld [vmem:[%s2003 + $0x8] sm:$0xff]
    %v2006 = vld [vmem:[%s2003 + $0x10] sm:$0xff]
    %v2007 = vld [vmem:[%s2003 + $0x18] sm:$0xff]
    %v2008 = vpack.c.bf16 %v1998, %v1998
    %v2009 = vld [vmem:[%s1] sm:$0xff]
    %v2010 = vld [vmem:[%s1 + $0x8] sm:$0xff]
    %v2011 = vld [vmem:[%s1 + $0x10] sm:$0xff]
    %v2012 = vld [vmem:[%s1 + $0x18] sm:$0xff]
    %v2013 = vld [vmem:[%s1 + $0x20] sm:$0xff]
    %v2014 = vld [vmem:[%s1 + $0x28] sm:$0xff]
    %v2015 = vld [vmem:[%s1 + $0x30] sm:$0xff]
    %v2016 = vld [vmem:[%s1 + $0x38] sm:$0xff]
    %v2017 = vld [vmem:[%s1 + $0x40] sm:$0xff]
    %v2018 = vld [vmem:[%s1 + $0x48] sm:$0xff]
    %v2019 = vld [vmem:[%s1 + $0x50] sm:$0xff]
    %v2020 = vld [vmem:[%s1 + $0x58] sm:$0xff]
    %v2021 = vld [vmem:[%s1 + $0x60] sm:$0xff]
    %v2022 = vld [vmem:[%s1 + $0x68] sm:$0xff]
    %v2023 = vld [vmem:[%s1 + $0x70] sm:$0xff]
    %v2024 = vld [vmem:[%s1 + $0x78] sm:$0xff]
    %v2025 = vld [vmem:[%s1 + $0x80] sm:$0xff]
    %v2026 = vld [vmem:[%s1 + $0x88] sm:$0xff]
    %v2027 = vld [vmem:[%s1 + $0x90] sm:$0xff]
    %v2028 = vld [vmem:[%s1 + $0x98] sm:$0xff]
    %v2029 = vld [vmem:[%s1 + $0xa0] sm:$0xff]
    %v2030 = vld [vmem:[%s1 + $0xa8] sm:$0xff]
    %v2031 = vld [vmem:[%s1 + $0xb0] sm:$0xff]
    %v2032 = vld [vmem:[%s1 + $0xb8] sm:$0xff]
    %v2033 = vld [vmem:[%s1 + $0xc0] sm:$0xff]
    %v2034 = vld [vmem:[%s1 + $0xc8] sm:$0xff]
    %v2035 = vld [vmem:[%s1 + $0xd0] sm:$0xff]
    %v2036 = vld [vmem:[%s1 + $0xd8] sm:$0xff]
    %v2037 = vld [vmem:[%s1 + $0xe0] sm:$0xff]
    %v2038 = vld [vmem:[%s1 + $0xe8] sm:$0xff]
    %v2039 = vld [vmem:[%s1 + $0xf0] sm:$0xff]
    %v2040 = vld [vmem:[%s1 + $0xf8] sm:$0xff]
    %v2073 = vunpack.c.l.b16 %v2009
    %v2074 = vunpack.c.h.b16 %v2009
    %v2075 = vunpack.c.l.b16 %v2010
    %v2076 = vunpack.c.h.b16 %v2010
    %v2077 = vunpack.c.l.b16 %v2011
    %v2078 = vunpack.c.h.b16 %v2011
    %v2079 = vunpack.c.l.b16 %v2012
    %v2080 = vunpack.c.h.b16 %v2012
    %v2081 = vunpack.c.l.b16 %v2013
    %v2082 = vunpack.c.h.b16 %v2013
    %v2083 = vunpack.c.l.b16 %v2014
    %v2084 = vunpack.c.h.b16 %v2014
    %v2085 = vunpack.c.l.b16 %v2015
    %v2086 = vunpack.c.h.b16 %v2015
    %v2087 = vunpack.c.l.b16 %v2016
    %v2088 = vunpack.c.h.b16 %v2016
    %v2089 = vunpack.c.l.b16 %v2017
    %v2090 = vunpack.c.h.b16 %v2017
    %v2091 = vunpack.c.l.b16 %v2018
    %v2092 = vunpack.c.h.b16 %v2018
    %v2093 = vunpack.c.l.b16 %v2019
    %v2094 = vunpack.c.h.b16 %v2019
    %v2095 = vunpack.c.l.b16 %v2020
    %v2096 = vunpack.c.h.b16 %v2020
    %v2097 = vunpack.c.l.b16 %v2021
    %v2098 = vunpack.c.h.b16 %v2021
    %v2099 = vunpack.c.l.b16 %v2022
    %v2100 = vunpack.c.h.b16 %v2022
    %v2101 = vunpack.c.l.b16 %v2023
    %v2102 = vunpack.c.h.b16 %v2023
    %v2103 = vunpack.c.l.b16 %v2024
    %v2104 = vunpack.c.h.b16 %v2024
    %v2105 = vunpack.c.l.b16 %v2025
    %v2106 = vunpack.c.h.b16 %v2025
    %v2107 = vunpack.c.l.b16 %v2026
    %v2108 = vunpack.c.h.b16 %v2026
    %v2109 = vunpack.c.l.b16 %v2027
    %v2110 = vunpack.c.h.b16 %v2027
    %v2111 = vunpack.c.l.b16 %v2028
    %v2112 = vunpack.c.h.b16 %v2028
    %v2113 = vunpack.c.l.b16 %v2029
    %v2114 = vunpack.c.h.b16 %v2029
    %v2115 = vunpack.c.l.b16 %v2030
    %v2116 = vunpack.c.h.b16 %v2030
    %v2117 = vunpack.c.l.b16 %v2031
    %v2118 = vunpack.c.h.b16 %v2031
    %v2119 = vunpack.c.l.b16 %v2032
    %v2120 = vunpack.c.h.b16 %v2032
    %v2121 = vunpack.c.l.b16 %v2033
    %v2122 = vunpack.c.h.b16 %v2033
    %v2123 = vunpack.c.l.b16 %v2034
    %v2124 = vunpack.c.h.b16 %v2034
    %v2125 = vunpack.c.l.b16 %v2035
    %v2126 = vunpack.c.h.b16 %v2035
    %v2127 = vunpack.c.l.b16 %v2036
    %v2128 = vunpack.c.h.b16 %v2036
    %v2129 = vunpack.c.l.b16 %v2037
    %v2130 = vunpack.c.h.b16 %v2037
    %v2131 = vunpack.c.l.b16 %v2038
    %v2132 = vunpack.c.h.b16 %v2038
    %v2133 = vunpack.c.l.b16 %v2039
    %v2134 = vunpack.c.h.b16 %v2039
    %v2135 = vunpack.c.l.b16 %v2040
    %v2136 = vunpack.c.h.b16 %v2040
    %v2137 = vpack.c.b16 %v2077, %v2073
    %v2138 = vpack.c.b16 %v2078, %v2074
    %v2139 = vpack.c.b16 %v2079, %v2075
    %v2140 = vpack.c.b16 %v2080, %v2076
    %v2141 = vpack.c.b16 %v2085, %v2081
    %v2142 = vpack.c.b16 %v2086, %v2082
    %v2143 = vpack.c.b16 %v2087, %v2083
    %v2144 = vpack.c.b16 %v2088, %v2084
    %v2145 = vpack.c.b16 %v2093, %v2089
    %v2146 = vpack.c.b16 %v2094, %v2090
    %v2147 = vpack.c.b16 %v2095, %v2091
    %v2148 = vpack.c.b16 %v2096, %v2092
    %v2149 = vpack.c.b16 %v2101, %v2097
    %v2150 = vpack.c.b16 %v2102, %v2098
    %v2151 = vpack.c.b16 %v2103, %v2099
    %v2152 = vpack.c.b16 %v2104, %v2100
    %v2153 = vpack.c.b16 %v2109, %v2105
    %v2154 = vpack.c.b16 %v2110, %v2106
    %v2155 = vpack.c.b16 %v2111, %v2107
    %v2156 = vpack.c.b16 %v2112, %v2108
    %v2157 = vpack.c.b16 %v2117, %v2113
    %v2158 = vpack.c.b16 %v2118, %v2114
    %v2159 = vpack.c.b16 %v2119, %v2115
    %v2160 = vpack.c.b16 %v2120, %v2116
    %v2161 = vpack.c.b16 %v2125, %v2121
    %v2162 = vpack.c.b16 %v2126, %v2122
    %v2163 = vpack.c.b16 %v2127, %v2123
    %v2164 = vpack.c.b16 %v2128, %v2124
    %v2165 = vpack.c.b16 %v2133, %v2129
    %v2166 = vpack.c.b16 %v2134, %v2130
    %v2167 = vpack.c.b16 %v2135, %v2131
    %v2168 = vpack.c.b16 %v2136, %v2132
    %2201 = vmatpush.bf16.msra.mxu0 %v2165
    %2202 = vmatpush.bf16.msra.mxu0 %v2161
    %2203 = vmatpush.bf16.msra.mxu0 %v2157
    %2204 = vmatpush.bf16.msra.mxu0 %v2153
    %2205 = vmatpush.bf16.msra.mxu0 %v2149
    %2206 = vmatpush.bf16.msra.mxu0 %v2145
    %2207 = vmatpush.bf16.msra.mxu0 %v2141
    %2208 = vmatpush.bf16.msra.mxu0 %v2137
    %2209 = vmatmul.bf16.gmra.mxu0 %v2008
    %v2210 = vpop.f32.mrf.mxu0
    %v2211 = vadd.f32 0.0, %v2210
    %v2212 = vpop.f32.mrf.mxu0
    %2213 = vdwg.mxu0
    %2214 = vmatpush.bf16.msra.mxu0 %v2166
    %2215 = vmatpush.bf16.msra.mxu0 %v2162
    %2216 = vmatpush.bf16.msra.mxu0 %v2158
    %2217 = vmatpush.bf16.msra.mxu0 %v2154
    %2218 = vmatpush.bf16.msra.mxu0 %v2150
    %2219 = vmatpush.bf16.msra.mxu0 %v2146
    %2220 = vmatpush.bf16.msra.mxu0 %v2142
    %2221 = vmatpush.bf16.msra.mxu0 %v2138
    %2222 = vmatmul.bf16.gmra.mxu0 %v2008
    %v2223 = vpop.f32.mrf.mxu0
    %v2224 = vadd.f32 0.0, %v2223
    %v2225 = vpop.f32.mrf.mxu0
    %2226 = vdwg.mxu0
    %2227 = vmatpush.bf16.msra.mxu0 %v2167
    %2228 = vmatpush.bf16.msra.mxu0 %v2163
    %2229 = vmatpush.bf16.msra.mxu0 %v2159
    %2230 = vmatpush.bf16.msra.mxu0 %v2155
    %2231 = vmatpush.bf16.msra.mxu0 %v2151
    %2232 = vmatpush.bf16.msra.mxu0 %v2147
    %2233 = vmatpush.bf16.msra.mxu0 %v2143
    %2234 = vmatpush.bf16.msra.mxu0 %v2139
    %2235 = vmatmul.bf16.gmra.mxu0 %v2008
    %v2236 = vpop.f32.mrf.mxu0
    %v2237 = vadd.f32 0.0, %v2236
    %v2238 = vpop.f32.mrf.mxu0
    %2239 = vdwg.mxu0
    %2240 = vmatpush.bf16.msra.mxu0 %v2168
    %2241 = vmatpush.bf16.msra.mxu0 %v2164
    %2242 = vmatpush.bf16.msra.mxu0 %v2160
    %2243 = vmatpush.bf16.msra.mxu0 %v2156
    %2244 = vmatpush.bf16.msra.mxu0 %v2152
    %2245 = vmatpush.bf16.msra.mxu0 %v2148
    %2246 = vmatpush.bf16.msra.mxu0 %v2144
    %2247 = vmatpush.bf16.msra.mxu0 %v2140
    %2248 = vmatmul.bf16.gmra.mxu0 %v2008
    %v2249 = vpop.f32.mrf.mxu0
    %v2250 = vadd.f32 0.0, %v2249
    %v2251 = vpop.f32.mrf.mxu0
    %2252 = vdwg.mxu0
    %v2253 = vadd.f32 %v2004, %v2211
    %v2254 = vadd.f32 %v2005, %v2224
    %v2255 = vadd.f32 %v2006, %v2237
    %v2256 = vadd.f32 %v2007, %v2250
    %v2257 = vxor.u32 %v2253, 2147483648
    %v2258 = vmul.f32 %v2257, 1.442695
    %v2259 = vpow.pop %v2258
    %v2260 = vadd.f32 %v2259, 1.0
    %v2261 = vrcp.pop %v2260
    %v2262 = vmul.f32 %v2260, %v2261
    %v2263 = vsub.f32 1.0, %v2262
    %v2264 = vmul.f32 %v2261, %v2263
    %v2265 = vadd.f32 %v2261, %v2264
    %vm2266 = vweird.f32 %v2260
    %vm2267 = vweird.f32 %v2261
    %vm2268 = vmor %vm2266, %vm2267
    %v2269 = vsel %vm2268, %v2261, %v2265
    %v2270 = vand.u32 2147483647, %v2260
    %vm2271 = vcmp.eq.f32.partialorder %v2270, 8.507059e+37
    %v2272 = vand.u32 %v2260, 2147483648
    %v2273 = vor.u32 1.1754944e-38, %v2272
    %v2274 = vsel %vm2271, %v2273, %v2269
    %v2275 = vmul.f32 1.0, %v2274
    %v2276 = vxor.u32 %v2254, 2147483648
    %v2277 = vmul.f32 %v2276, 1.442695
    %v2278 = vpow.pop %v2277
    %v2279 = vadd.f32 %v2278, 1.0
    %v2280 = vrcp.pop %v2279
    %v2281 = vmul.f32 %v2279, %v2280
    %v2282 = vsub.f32 1.0, %v2281
    %v2283 = vmul.f32 %v2280, %v2282
    %v2284 = vadd.f32 %v2280, %v2283
    %vm2285 = vweird.f32 %v2279
    %vm2286 = vweird.f32 %v2280
    %vm2287 = vmor %vm2285, %vm2286
    %v2288 = vsel %vm2287, %v2280, %v2284
    %v2289 = vand.u32 2147483647, %v2279
    %vm2290 = vcmp.eq.f32.partialorder %v2289, 8.507059e+37
    %v2291 = vand.u32 %v2279, 2147483648
    %v2292 = vor.u32 1.1754944e-38, %v2291
    %v2293 = vsel %vm2290, %v2292, %v2288
    %v2294 = vmul.f32 1.0, %v2293
    %v2295 = vtanh.pop %v2255
    %v2296 = vxor.u32 %v2256, 2147483648
    %v2297 = vmul.f32 %v2296, 1.442695
    %v2298 = vpow.pop %v2297
    %v2299 = vadd.f32 %v2298, 1.0
    %v2300 = vrcp.pop %v2299
    %v2301 = vmul.f32 %v2299, %v2300
    %v2302 = vsub.f32 1.0, %v2301
    %v2303 = vmul.f32 %v2300, %v2302
    %v2304 = vadd.f32 %v2300, %v2303
    %vm2305 = vweird.f32 %v2299
    %vm2306 = vweird.f32 %v2300
    %vm2307 = vmor %vm2305, %vm2306
    %v2308 = vsel %vm2307, %v2300, %v2304
    %v2309 = vand.u32 2147483647, %v2299
    %vm2310 = vcmp.eq.f32.partialorder %v2309, 8.507059e+37
    %v2311 = vand.u32 %v2299, 2147483648
    %v2312 = vor.u32 1.1754944e-38, %v2311
    %v2313 = vsel %vm2310, %v2312, %v2308
    %v2314 = vmul.f32 1.0, %v2313
    %v2315 = vmul.f32 %v2294, %v1996
    %v2316 = vmul.f32 %v2275, %v2295
    %v2317 = vadd.f32 %v2315, %v2316
    %v2318 = vtanh.pop %v2317
    %v2319 = vmul.f32 %v2314, %v2318
    %s2320 = scalar_lea.vmem [#allocation3], 48
    %2321 = vst [vmem:[%s2320] sm:$0xff] %v2319
    %s2322 = smul.u32 7, 4
    %s2323 = smul.addr %s2322, 8
    %s2324 = scalar_lea.vmem %s0, %s2323
    %v2325 = vld [vmem:[%s2324] sm:$0xff]
    %v2326 = vld [vmem:[%s2324 + $0x8] sm:$0xff]
    %v2327 = vld [vmem:[%s2324 + $0x10] sm:$0xff]
    %v2328 = vld [vmem:[%s2324 + $0x18] sm:$0xff]
    %v2329 = vpack.c.bf16 %v2319, %v2319
    %v2330 = vld [vmem:[%s1] sm:$0xff]
    %v2331 = vld [vmem:[%s1 + $0x8] sm:$0xff]
    %v2332 = vld [vmem:[%s1 + $0x10] sm:$0xff]
    %v2333 = vld [vmem:[%s1 + $0x18] sm:$0xff]
    %v2334 = vld [vmem:[%s1 + $0x20] sm:$0xff]
    %v2335 = vld [vmem:[%s1 + $0x28] sm:$0xff]
    %v2336 = vld [vmem:[%s1 + $0x30] sm:$0xff]
    %v2337 = vld [vmem:[%s1 + $0x38] sm:$0xff]
    %v2338 = vld [vmem:[%s1 + $0x40] sm:$0xff]
    %v2339 = vld [vmem:[%s1 + $0x48] sm:$0xff]
    %v2340 = vld [vmem:[%s1 + $0x50] sm:$0xff]
    %v2341 = vld [vmem:[%s1 + $0x58] sm:$0xff]
    %v2342 = vld [vmem:[%s1 + $0x60] sm:$0xff]
    %v2343 = vld [vmem:[%s1 + $0x68] sm:$0xff]
    %v2344 = vld [vmem:[%s1 + $0x70] sm:$0xff]
    %v2345 = vld [vmem:[%s1 + $0x78] sm:$0xff]
    %v2346 = vld [vmem:[%s1 + $0x80] sm:$0xff]
    %v2347 = vld [vmem:[%s1 + $0x88] sm:$0xff]
    %v2348 = vld [vmem:[%s1 + $0x90] sm:$0xff]
    %v2349 = vld [vmem:[%s1 + $0x98] sm:$0xff]
    %v2350 = vld [vmem:[%s1 + $0xa0] sm:$0xff]
    %v2351 = vld [vmem:[%s1 + $0xa8] sm:$0xff]
    %v2352 = vld [vmem:[%s1 + $0xb0] sm:$0xff]
    %v2353 = vld [vmem:[%s1 + $0xb8] sm:$0xff]
    %v2354 = vld [vmem:[%s1 + $0xc0] sm:$0xff]
    %v2355 = vld [vmem:[%s1 + $0xc8] sm:$0xff]
    %v2356 = vld [vmem:[%s1 + $0xd0] sm:$0xff]
    %v2357 = vld [vmem:[%s1 + $0xd8] sm:$0xff]
    %v2358 = vld [vmem:[%s1 + $0xe0] sm:$0xff]
    %v2359 = vld [vmem:[%s1 + $0xe8] sm:$0xff]
    %v2360 = vld [vmem:[%s1 + $0xf0] sm:$0xff]
    %v2361 = vld [vmem:[%s1 + $0xf8] sm:$0xff]
    %v2394 = vunpack.c.l.b16 %v2330
    %v2395 = vunpack.c.h.b16 %v2330
    %v2396 = vunpack.c.l.b16 %v2331
    %v2397 = vunpack.c.h.b16 %v2331
    %v2398 = vunpack.c.l.b16 %v2332
    %v2399 = vunpack.c.h.b16 %v2332
    %v2400 = vunpack.c.l.b16 %v2333
    %v2401 = vunpack.c.h.b16 %v2333
    %v2402 = vunpack.c.l.b16 %v2334
    %v2403 = vunpack.c.h.b16 %v2334
    %v2404 = vunpack.c.l.b16 %v2335
    %v2405 = vunpack.c.h.b16 %v2335
    %v2406 = vunpack.c.l.b16 %v2336
    %v2407 = vunpack.c.h.b16 %v2336
    %v2408 = vunpack.c.l.b16 %v2337
    %v2409 = vunpack.c.h.b16 %v2337
    %v2410 = vunpack.c.l.b16 %v2338
    %v2411 = vunpack.c.h.b16 %v2338
    %v2412 = vunpack.c.l.b16 %v2339
    %v2413 = vunpack.c.h.b16 %v2339
    %v2414 = vunpack.c.l.b16 %v2340
    %v2415 = vunpack.c.h.b16 %v2340
    %v2416 = vunpack.c.l.b16 %v2341
    %v2417 = vunpack.c.h.b16 %v2341
    %v2418 = vunpack.c.l.b16 %v2342
    %v2419 = vunpack.c.h.b16 %v2342
    %v2420 = vunpack.c.l.b16 %v2343
    %v2421 = vunpack.c.h.b16 %v2343
    %v2422 = vunpack.c.l.b16 %v2344
    %v2423 = vunpack.c.h.b16 %v2344
    %v2424 = vunpack.c.l.b16 %v2345
    %v2425 = vunpack.c.h.b16 %v2345
    %v2426 = vunpack.c.l.b16 %v2346
    %v2427 = vunpack.c.h.b16 %v2346
    %v2428 = vunpack.c.l.b16 %v2347
    %v2429 = vunpack.c.h.b16 %v2347
    %v2430 = vunpack.c.l.b16 %v2348
    %v2431 = vunpack.c.h.b16 %v2348
    %v2432 = vunpack.c.l.b16 %v2349
    %v2433 = vunpack.c.h.b16 %v2349
    %v2434 = vunpack.c.l.b16 %v2350
    %v2435 = vunpack.c.h.b16 %v2350
    %v2436 = vunpack.c.l.b16 %v2351
    %v2437 = vunpack.c.h.b16 %v2351
    %v2438 = vunpack.c.l.b16 %v2352
    %v2439 = vunpack.c.h.b16 %v2352
    %v2440 = vunpack.c.l.b16 %v2353
    %v2441 = vunpack.c.h.b16 %v2353
    %v2442 = vunpack.c.l.b16 %v2354
    %v2443 = vunpack.c.h.b16 %v2354
    %v2444 = vunpack.c.l.b16 %v2355
    %v2445 = vunpack.c.h.b16 %v2355
    %v2446 = vunpack.c.l.b16 %v2356
    %v2447 = vunpack.c.h.b16 %v2356
    %v2448 = vunpack.c.l.b16 %v2357
    %v2449 = vunpack.c.h.b16 %v2357
    %v2450 = vunpack.c.l.b16 %v2358
    %v2451 = vunpack.c.h.b16 %v2358
    %v2452 = vunpack.c.l.b16 %v2359
    %v2453 = vunpack.c.h.b16 %v2359
    %v2454 = vunpack.c.l.b16 %v2360
    %v2455 = vunpack.c.h.b16 %v2360
    %v2456 = vunpack.c.l.b16 %v2361
    %v2457 = vunpack.c.h.b16 %v2361
    %v2458 = vpack.c.b16 %v2398, %v2394
    %v2459 = vpack.c.b16 %v2399, %v2395
    %v2460 = vpack.c.b16 %v2400, %v2396
    %v2461 = vpack.c.b16 %v2401, %v2397
    %v2462 = vpack.c.b16 %v2406, %v2402
    %v2463 = vpack.c.b16 %v2407, %v2403
    %v2464 = vpack.c.b16 %v2408, %v2404
    %v2465 = vpack.c.b16 %v2409, %v2405
    %v2466 = vpack.c.b16 %v2414, %v2410
    %v2467 = vpack.c.b16 %v2415, %v2411
    %v2468 = vpack.c.b16 %v2416, %v2412
    %v2469 = vpack.c.b16 %v2417, %v2413
    %v2470 = vpack.c.b16 %v2422, %v2418
    %v2471 = vpack.c.b16 %v2423, %v2419
    %v2472 = vpack.c.b16 %v2424, %v2420
    %v2473 = vpack.c.b16 %v2425, %v2421
    %v2474 = vpack.c.b16 %v2430, %v2426
    %v2475 = vpack.c.b16 %v2431, %v2427
    %v2476 = vpack.c.b16 %v2432, %v2428
    %v2477 = vpack.c.b16 %v2433, %v2429
    %v2478 = vpack.c.b16 %v2438, %v2434
    %v2479 = vpack.c.b16 %v2439, %v2435
    %v2480 = vpack.c.b16 %v2440, %v2436
    %v2481 = vpack.c.b16 %v2441, %v2437
    %v2482 = vpack.c.b16 %v2446, %v2442
    %v2483 = vpack.c.b16 %v2447, %v2443
    %v2484 = vpack.c.b16 %v2448, %v2444
    %v2485 = vpack.c.b16 %v2449, %v2445
    %v2486 = vpack.c.b16 %v2454, %v2450
    %v2487 = vpack.c.b16 %v2455, %v2451
    %v2488 = vpack.c.b16 %v2456, %v2452
    %v2489 = vpack.c.b16 %v2457, %v2453
    %2522 = vmatpush.bf16.msra.mxu0 %v2486
    %2523 = vmatpush.bf16.msra.mxu0 %v2482
    %2524 = vmatpush.bf16.msra.mxu0 %v2478
    %2525 = vmatpush.bf16.msra.mxu0 %v2474
    %2526 = vmatpush.bf16.msra.mxu0 %v2470
    %2527 = vmatpush.bf16.msra.mxu0 %v2466
    %2528 = vmatpush.bf16.msra.mxu0 %v2462
    %2529 = vmatpush.bf16.msra.mxu0 %v2458
    %2530 = vmatmul.bf16.gmra.mxu0 %v2329
    %v2531 = vpop.f32.mrf.mxu0
    %v2532 = vadd.f32 0.0, %v2531
    %v2533 = vpop.f32.mrf.mxu0
    %2534 = vdwg.mxu0
    %2535 = vmatpush.bf16.msra.mxu0 %v2487
    %2536 = vmatpush.bf16.msra.mxu0 %v2483
    %2537 = vmatpush.bf16.msra.mxu0 %v2479
    %2538 = vmatpush.bf16.msra.mxu0 %v2475
    %2539 = vmatpush.bf16.msra.mxu0 %v2471
    %2540 = vmatpush.bf16.msra.mxu0 %v2467
    %2541 = vmatpush.bf16.msra.mxu0 %v2463
    %2542 = vmatpush.bf16.msra.mxu0 %v2459
    %2543 = vmatmul.bf16.gmra.mxu0 %v2329
    %v2544 = vpop.f32.mrf.mxu0
    %v2545 = vadd.f32 0.0, %v2544
    %v2546 = vpop.f32.mrf.mxu0
    %2547 = vdwg.mxu0
    %2548 = vmatpush.bf16.msra.mxu0 %v2488
    %2549 = vmatpush.bf16.msra.mxu0 %v2484
    %2550 = vmatpush.bf16.msra.mxu0 %v2480
    %2551 = vmatpush.bf16.msra.mxu0 %v2476
    %2552 = vmatpush.bf16.msra.mxu0 %v2472
    %2553 = vmatpush.bf16.msra.mxu0 %v2468
    %2554 = vmatpush.bf16.msra.mxu0 %v2464
    %2555 = vmatpush.bf16.msra.mxu0 %v2460
    %2556 = vmatmul.bf16.gmra.mxu0 %v2329
    %v2557 = vpop.f32.mrf.mxu0
    %v2558 = vadd.f32 0.0, %v2557
    %v2559 = vpop.f32.mrf.mxu0
    %2560 = vdwg.mxu0
    %2561 = vmatpush.bf16.msra.mxu0 %v2489
    %2562 = vmatpush.bf16.msra.mxu0 %v2485
    %2563 = vmatpush.bf16.msra.mxu0 %v2481
    %2564 = vmatpush.bf16.msra.mxu0 %v2477
    %2565 = vmatpush.bf16.msra.mxu0 %v2473
    %2566 = vmatpush.bf16.msra.mxu0 %v2469
    %2567 = vmatpush.bf16.msra.mxu0 %v2465
    %2568 = vmatpush.bf16.msra.mxu0 %v2461
    %2569 = vmatmul.bf16.gmra.mxu0 %v2329
    %v2570 = vpop.f32.mrf.mxu0
    %v2571 = vadd.f32 0.0, %v2570
    %v2572 = vpop.f32.mrf.mxu0
    %2573 = vdwg.mxu0
    %v2574 = vadd.f32 %v2325, %v2532
    %v2575 = vadd.f32 %v2326, %v2545
    %v2576 = vadd.f32 %v2327, %v2558
    %v2577 = vadd.f32 %v2328, %v2571
    %v2578 = vxor.u32 %v2574, 2147483648
    %v2579 = vmul.f32 %v2578, 1.442695
    %v2580 = vpow.pop %v2579
    %v2581 = vadd.f32 %v2580, 1.0
    %v2582 = vrcp.pop %v2581
    %v2583 = vmul.f32 %v2581, %v2582
    %v2584 = vsub.f32 1.0, %v2583
    %v2585 = vmul.f32 %v2582, %v2584
    %v2586 = vadd.f32 %v2582, %v2585
    %vm2587 = vweird.f32 %v2581
    %vm2588 = vweird.f32 %v2582
    %vm2589 = vmor %vm2587, %vm2588
    %v2590 = vsel %vm2589, %v2582, %v2586
    %v2591 = vand.u32 2147483647, %v2581
    %vm2592 = vcmp.eq.f32.partialorder %v2591, 8.507059e+37
    %v2593 = vand.u32 %v2581, 2147483648
    %v2594 = vor.u32 1.1754944e-38, %v2593
    %v2595 = vsel %vm2592, %v2594, %v2590
    %v2596 = vmul.f32 1.0, %v2595
    %v2597 = vxor.u32 %v2575, 2147483648
    %v2598 = vmul.f32 %v2597, 1.442695
    %v2599 = vpow.pop %v2598
    %v2600 = vadd.f32 %v2599, 1.0
    %v2601 = vrcp.pop %v2600
    %v2602 = vmul.f32 %v2600, %v2601
    %v2603 = vsub.f32 1.0, %v2602
    %v2604 = vmul.f32 %v2601, %v2603
    %v2605 = vadd.f32 %v2601, %v2604
    %vm2606 = vweird.f32 %v2600
    %vm2607 = vweird.f32 %v2601
    %vm2608 = vmor %vm2606, %vm2607
    %v2609 = vsel %vm2608, %v2601, %v2605
    %v2610 = vand.u32 2147483647, %v2600
    %vm2611 = vcmp.eq.f32.partialorder %v2610, 8.507059e+37
    %v2612 = vand.u32 %v2600, 2147483648
    %v2613 = vor.u32 1.1754944e-38, %v2612
    %v2614 = vsel %vm2611, %v2613, %v2609
    %v2615 = vmul.f32 1.0, %v2614
    %v2616 = vtanh.pop %v2576
    %v2617 = vxor.u32 %v2577, 2147483648
    %v2618 = vmul.f32 %v2617, 1.442695
    %v2619 = vpow.pop %v2618
    %v2620 = vadd.f32 %v2619, 1.0
    %v2621 = vrcp.pop %v2620
    %v2622 = vmul.f32 %v2620, %v2621
    %v2623 = vsub.f32 1.0, %v2622
    %v2624 = vmul.f32 %v2621, %v2623
    %v2625 = vadd.f32 %v2621, %v2624
    %vm2626 = vweird.f32 %v2620
    %vm2627 = vweird.f32 %v2621
    %vm2628 = vmor %vm2626, %vm2627
    %v2629 = vsel %vm2628, %v2621, %v2625
    %v2630 = vand.u32 2147483647, %v2620
    %vm2631 = vcmp.eq.f32.partialorder %v2630, 8.507059e+37
    %v2632 = vand.u32 %v2620, 2147483648
    %v2633 = vor.u32 1.1754944e-38, %v2632
    %v2634 = vsel %vm2631, %v2633, %v2629
    %v2635 = vmul.f32 1.0, %v2634
    %v2636 = vmul.f32 %v2615, %v2317
    %v2637 = vmul.f32 %v2596, %v2616
    %v2638 = vadd.f32 %v2636, %v2637
    %v2639 = vtanh.pop %v2638
    %v2640 = vmul.f32 %v2635, %v2639
    %s2641 = scalar_lea.vmem [#allocation3], 56
    %2642 = vst [vmem:[%s2641] sm:$0xff] %v2640
    %v2643 = vld [vmem:[#allocation3] sm:$0xff]
    %v2644 = vld [vmem:[#allocation3 + $0x8] sm:$0xff]
    %v2645 = vld [vmem:[#allocation3 + $0x10] sm:$0xff]
    %v2646 = vld [vmem:[#allocation3 + $0x18] sm:$0xff]
    %v2647 = vld [vmem:[#allocation3 + $0x20] sm:$0xff]
    %v2648 = vld [vmem:[#allocation3 + $0x28] sm:$0xff]
    %v2649 = vld [vmem:[#allocation3 + $0x30] sm:$0xff]
    %v2650 = vld [vmem:[#allocation3 + $0x38] sm:$0xff]
    %v2651 = vpack.c.bf16 %v2644, %v2643
    %v2652 = vpack.c.bf16 %v2646, %v2645
    %v2653 = vpack.c.bf16 %v2648, %v2647
    %v2654 = vpack.c.bf16 %v2650, %v2649
    %v2655 = vld [vmem:[#allocation4] sm:$0xff]
    %v2656 = vld [vmem:[#allocation4 + $0x8] sm:$0xff]
    %v2657 = vld [vmem:[#allocation4 + $0x10] sm:$0xff]
    %v2658 = vld [vmem:[#allocation4 + $0x18] sm:$0xff]
    %v2659 = vld [vmem:[#allocation4 + $0x20] sm:$0xff]
    %v2660 = vld [vmem:[#allocation4 + $0x28] sm:$0xff]
    %v2661 = vld [vmem:[#allocation4 + $0x30] sm:$0xff]
    %v2662 = vld [vmem:[#allocation4 + $0x38] sm:$0xff]
    %v2663 = vld [vmem:[#allocation4 + $0x40] sm:$0xff]
    %v2664 = vld [vmem:[#allocation4 + $0x48] sm:$0xff]
    %v2665 = vld [vmem:[#allocation4 + $0x50] sm:$0xff]
    %v2666 = vld [vmem:[#allocation4 + $0x58] sm:$0xff]
    %v2667 = vld [vmem:[#allocation4 + $0x60] sm:$0xff]
    %v2668 = vld [vmem:[#allocation4 + $0x68] sm:$0xff]
    %v2669 = vld [vmem:[#allocation4 + $0x70] sm:$0xff]
    %v2670 = vld [vmem:[#allocation4 + $0x78] sm:$0xff]
    %v2671 = vld [vmem:[#allocation4 + $0x80] sm:$0xff]
    %v2672 = vld [vmem:[#allocation4 + $0x88] sm:$0xff]
    %v2673 = vld [vmem:[#allocation4 + $0x90] sm:$0xff]
    %v2674 = vld [vmem:[#allocation4 + $0x98] sm:$0xff]
    %v2675 = vld [vmem:[#allocation4 + $0xa0] sm:$0xff]
    %v2676 = vld [vmem:[#allocation4 + $0xa8] sm:$0xff]
    %v2677 = vld [vmem:[#allocation4 + $0xb0] sm:$0xff]
    %v2678 = vld [vmem:[#allocation4 + $0xb8] sm:$0xff]
    %v2679 = vld [vmem:[#allocation4 + $0xc0] sm:$0xff]
    %v2680 = vld [vmem:[#allocation4 + $0xc8] sm:$0xff]
    %v2681 = vld [vmem:[#allocation4 + $0xd0] sm:$0xff]
    %v2682 = vld [vmem:[#allocation4 + $0xd8] sm:$0xff]
    %v2683 = vld [vmem:[#allocation4 + $0xe0] sm:$0xff]
    %v2684 = vld [vmem:[#allocation4 + $0xe8] sm:$0xff]
    %v2685 = vld [vmem:[#allocation4 + $0xf0] sm:$0xff]
    %v2686 = vld [vmem:[#allocation4 + $0xf8] sm:$0xff]
    %v2687 = vld [vmem:[%s3] sm:$0xf]
    %v2689 = vperm.slane %v2687, 0
    %v2690 = vperm.slane %v2687, 1
    %v2691 = vperm.slane %v2687, 2
    %v2692 = vperm.slane %v2687, 3
    %v2729 = vunpack.c.l.b16 %v2655
    %v2730 = vunpack.c.h.b16 %v2655
    %v2731 = vunpack.c.l.b16 %v2656
    %v2732 = vunpack.c.h.b16 %v2656
    %v2733 = vunpack.c.l.b16 %v2657
    %v2734 = vunpack.c.h.b16 %v2657
    %v2735 = vunpack.c.l.b16 %v2658
    %v2736 = vunpack.c.h.b16 %v2658
    %v2737 = vunpack.c.l.b16 %v2659
    %v2738 = vunpack.c.h.b16 %v2659
    %v2739 = vunpack.c.l.b16 %v2660
    %v2740 = vunpack.c.h.b16 %v2660
    %v2741 = vunpack.c.l.b16 %v2661
    %v2742 = vunpack.c.h.b16 %v2661
    %v2743 = vunpack.c.l.b16 %v2662
    %v2744 = vunpack.c.h.b16 %v2662
    %v2745 = vunpack.c.l.b16 %v2663
    %v2746 = vunpack.c.h.b16 %v2663
    %v2747 = vunpack.c.l.b16 %v2664
    %v2748 = vunpack.c.h.b16 %v2664
    %v2749 = vunpack.c.l.b16 %v2665
    %v2750 = vunpack.c.h.b16 %v2665
    %v2751 = vunpack.c.l.b16 %v2666
    %v2752 = vunpack.c.h.b16 %v2666
    %v2753 = vunpack.c.l.b16 %v2667
    %v2754 = vunpack.c.h.b16 %v2667
    %v2755 = vunpack.c.l.b16 %v2668
    %v2756 = vunpack.c.h.b16 %v2668
    %v2757 = vunpack.c.l.b16 %v2669
    %v2758 = vunpack.c.h.b16 %v2669
    %v2759 = vunpack.c.l.b16 %v2670
    %v2760 = vunpack.c.h.b16 %v2670
    %v2761 = vunpack.c.l.b16 %v2671
    %v2762 = vunpack.c.h.b16 %v2671
    %v2763 = vunpack.c.l.b16 %v2672
    %v2764 = vunpack.c.h.b16 %v2672
    %v2765 = vunpack.c.l.b16 %v2673
    %v2766 = vunpack.c.h.b16 %v2673
    %v2767 = vunpack.c.l.b16 %v2674
    %v2768 = vunpack.c.h.b16 %v2674
    %v2769 = vunpack.c.l.b16 %v2675
    %v2770 = vunpack.c.h.b16 %v2675
    %v2771 = vunpack.c.l.b16 %v2676
    %v2772 = vunpack.c.h.b16 %v2676
    %v2773 = vunpack.c.l.b16 %v2677
    %v2774 = vunpack.c.h.b16 %v2677
    %v2775 = vunpack.c.l.b16 %v2678
    %v2776 = vunpack.c.h.b16 %v2678
    %v2777 = vunpack.c.l.b16 %v2679
    %v2778 = vunpack.c.h.b16 %v2679
    %v2779 = vunpack.c.l.b16 %v2680
    %v2780 = vunpack.c.h.b16 %v2680
    %v2781 = vunpack.c.l.b16 %v2681
    %v2782 = vunpack.c.h.b16 %v2681
    %v2783 = vunpack.c.l.b16 %v2682
    %v2784 = vunpack.c.h.b16 %v2682
    %v2785 = vunpack.c.l.b16 %v2683
    %v2786 = vunpack.c.h.b16 %v2683
    %v2787 = vunpack.c.l.b16 %v2684
    %v2788 = vunpack.c.h.b16 %v2684
    %v2789 = vunpack.c.l.b16 %v2685
    %v2790 = vunpack.c.h.b16 %v2685
    %v2791 = vunpack.c.l.b16 %v2686
    %v2792 = vunpack.c.h.b16 %v2686
    %v2793 = vpack.c.b16 %v2733, %v2729
    %v2794 = vpack.c.b16 %v2734, %v2730
    %v2795 = vpack.c.b16 %v2735, %v2731
    %v2796 = vpack.c.b16 %v2736, %v2732
    %v2797 = vpack.c.b16 %v2741, %v2737
    %v2798 = vpack.c.b16 %v2742, %v2738
    %v2799 = vpack.c.b16 %v2743, %v2739
    %v2800 = vpack.c.b16 %v2744, %v2740
    %v2801 = vpack.c.b16 %v2749, %v2745
    %v2802 = vpack.c.b16 %v2750, %v2746
    %v2803 = vpack.c.b16 %v2751, %v2747
    %v2804 = vpack.c.b16 %v2752, %v2748
    %v2805 = vpack.c.b16 %v2757, %v2753
    %v2806 = vpack.c.b16 %v2758, %v2754
    %v2807 = vpack.c.b16 %v2759, %v2755
    %v2808 = vpack.c.b16 %v2760, %v2756
    %v2809 = vpack.c.b16 %v2765, %v2761
    %v2810 = vpack.c.b16 %v2766, %v2762
    %v2811 = vpack.c.b16 %v2767, %v2763
    %v2812 = vpack.c.b16 %v2768, %v2764
    %v2813 = vpack.c.b16 %v2773, %v2769
    %v2814 = vpack.c.b16 %v2774, %v2770
    %v2815 = vpack.c.b16 %v2775, %v2771
    %v2816 = vpack.c.b16 %v2776, %v2772
    %v2817 = vpack.c.b16 %v2781, %v2777
    %v2818 = vpack.c.b16 %v2782, %v2778
    %v2819 = vpack.c.b16 %v2783, %v2779
    %v2820 = vpack.c.b16 %v2784, %v2780
    %v2821 = vpack.c.b16 %v2789, %v2785
    %v2822 = vpack.c.b16 %v2790, %v2786
    %v2823 = vpack.c.b16 %v2791, %v2787
    %v2824 = vpack.c.b16 %v2792, %v2788
    %2857 = vmatpush.bf16.msra.mxu0 %v2821
    %2858 = vmatpush.bf16.msra.mxu0 %v2817
    %2859 = vmatpush.bf16.msra.mxu0 %v2813
    %2860 = vmatpush.bf16.msra.mxu0 %v2809
    %2861 = vmatpush.bf16.msra.mxu0 %v2805
    %2862 = vmatpush.bf16.msra.mxu0 %v2801
    %2863 = vmatpush.bf16.msra.mxu0 %v2797
    %2864 = vmatpush.bf16.msra.mxu0 %v2793
    %2865 = vmatmul.bf16.gmra.mxu0 %v2651
    %v2866 = vpop.f32.mrf.mxu0
    %v2867 = vadd.f32 %v2689, %v2866
    %v2868 = vpop.f32.mrf.mxu0
    %v2869 = vadd.f32 %v2689, %v2868
    %2870 = vmatmul.bf16.gmra.mxu0 %v2652
    %v2871 = vpop.f32.mrf.mxu0
    %v2872 = vadd.f32 %v2689, %v2871
    %v2873 = vpop.f32.mrf.mxu0
    %v2874 = vadd.f32 %v2689, %v2873
    %2875 = vmatmul.bf16.gmra.mxu0 %v2653
    %v2876 = vpop.f32.mrf.mxu0
    %v2877 = vadd.f32 %v2689, %v2876
    %v2878 = vpop.f32.mrf.mxu0
    %v2879 = vadd.f32 %v2689, %v2878
    %2880 = vmatmul.bf16.gmra.mxu0 %v2654
    %v2881 = vpop.f32.mrf.mxu0
    %v2882 = vadd.f32 %v2689, %v2881
    %v2883 = vpop.f32.mrf.mxu0
    %v2884 = vadd.f32 %v2689, %v2883
    %2885 = vdwg.mxu0
    %2886 = vmatpush.bf16.msra.mxu0 %v2822
    %2887 = vmatpush.bf16.msra.mxu0 %v2818
    %2888 = vmatpush.bf16.msra.mxu0 %v2814
    %2889 = vmatpush.bf16.msra.mxu0 %v2810
    %2890 = vmatpush.bf16.msra.mxu0 %v2806
    %2891 = vmatpush.bf16.msra.mxu0 %v2802
    %2892 = vmatpush.bf16.msra.mxu0 %v2798
    %2893 = vmatpush.bf16.msra.mxu0 %v2794
    %2894 = vmatmul.bf16.gmra.mxu0 %v2651
    %v2895 = vpop.f32.mrf.mxu0
    %v2896 = vadd.f32 %v2690, %v2895
    %v2897 = vpop.f32.mrf.mxu0
    %v2898 = vadd.f32 %v2690, %v2897
    %2899 = vmatmul.bf16.gmra.mxu0 %v2652
    %v2900 = vpop.f32.mrf.mxu0
    %v2901 = vadd.f32 %v2690, %v2900
    %v2902 = vpop.f32.mrf.mxu0
    %v2903 = vadd.f32 %v2690, %v2902
    %2904 = vmatmul.bf16.gmra.mxu0 %v2653
    %v2905 = vpop.f32.mrf.mxu0
    %v2906 = vadd.f32 %v2690, %v2905
    %v2907 = vpop.f32.mrf.mxu0
    %v2908 = vadd.f32 %v2690, %v2907
    %2909 = vmatmul.bf16.gmra.mxu0 %v2654
    %v2910 = vpop.f32.mrf.mxu0
    %v2911 = vadd.f32 %v2690, %v2910
    %v2912 = vpop.f32.mrf.mxu0
    %v2913 = vadd.f32 %v2690, %v2912
    %2914 = vdwg.mxu0
    %2915 = vmatpush.bf16.msra.mxu0 %v2823
    %2916 = vmatpush.bf16.msra.mxu0 %v2819
    %2917 = vmatpush.bf16.msra.mxu0 %v2815
    %2918 = vmatpush.bf16.msra.mxu0 %v2811
    %2919 = vmatpush.bf16.msra.mxu0 %v2807
    %2920 = vmatpush.bf16.msra.mxu0 %v2803
    %2921 = vmatpush.bf16.msra.mxu0 %v2799
    %2922 = vmatpush.bf16.msra.mxu0 %v2795
    %2923 = vmatmul.bf16.gmra.mxu0 %v2651
    %v2924 = vpop.f32.mrf.mxu0
    %v2925 = vadd.f32 %v2691, %v2924
    %v2926 = vpop.f32.mrf.mxu0
    %v2927 = vadd.f32 %v2691, %v2926
    %2928 = vmatmul.bf16.gmra.mxu0 %v2652
    %v2929 = vpop.f32.mrf.mxu0
    %v2930 = vadd.f32 %v2691, %v2929
    %v2931 = vpop.f32.mrf.mxu0
    %v2932 = vadd.f32 %v2691, %v2931
    %2933 = vmatmul.bf16.gmra.mxu0 %v2653
    %v2934 = vpop.f32.mrf.mxu0
    %v2935 = vadd.f32 %v2691, %v2934
    %v2936 = vpop.f32.mrf.mxu0
    %v2937 = vadd.f32 %v2691, %v2936
    %2938 = vmatmul.bf16.gmra.mxu0 %v2654
    %v2939 = vpop.f32.mrf.mxu0
    %v2940 = vadd.f32 %v2691, %v2939
    %v2941 = vpop.f32.mrf.mxu0
    %v2942 = vadd.f32 %v2691, %v2941
    %2943 = vdwg.mxu0
    %2944 = vmatpush.bf16.msra.mxu0 %v2824
    %2945 = vmatpush.bf16.msra.mxu0 %v2820
    %2946 = vmatpush.bf16.msra.mxu0 %v2816
    %2947 = vmatpush.bf16.msra.mxu0 %v2812
    %2948 = vmatpush.bf16.msra.mxu0 %v2808
    %2949 = vmatpush.bf16.msra.mxu0 %v2804
    %2950 = vmatpush.bf16.msra.mxu0 %v2800
    %2951 = vmatpush.bf16.msra.mxu0 %v2796
    %2952 = vmatmul.bf16.gmra.mxu0 %v2651
    %v2953 = vpop.f32.mrf.mxu0
    %v2954 = vadd.f32 %v2692, %v2953
    %v2955 = vpop.f32.mrf.mxu0
    %v2956 = vadd.f32 %v2692, %v2955
    %2957 = vmatmul.bf16.gmra.mxu0 %v2652
    %v2958 = vpop.f32.mrf.mxu0
    %v2959 = vadd.f32 %v2692, %v2958
    %v2960 = vpop.f32.mrf.mxu0
    %v2961 = vadd.f32 %v2692, %v2960
    %2962 = vmatmul.bf16.gmra.mxu0 %v2653
    %v2963 = vpop.f32.mrf.mxu0
    %v2964 = vadd.f32 %v2692, %v2963
    %v2965 = vpop.f32.mrf.mxu0
    %v2966 = vadd.f32 %v2692, %v2965
    %2967 = vmatmul.bf16.gmra.mxu0 %v2654
    %v2968 = vpop.f32.mrf.mxu0
    %v2969 = vadd.f32 %v2692, %v2968
    %v2970 = vpop.f32.mrf.mxu0
    %v2971 = vadd.f32 %v2692, %v2970
    %2972 = vdwg.mxu0
    %2973 = vst [vmem:[#allocation2] sm:$0xff] %v2867
    %2974 = vst [vmem:[#allocation2 + $0x8] sm:$0xff] %v2896
    %2975 = vst [vmem:[#allocation2 + $0x10] sm:$0xff] %v2925
    %2976 = vst [vmem:[#allocation2 + $0x18] sm:$0xff] %v2954
    %2977 = vst [vmem:[#allocation2 + $0x20] sm:$0xff] %v2869
    %2978 = vst [vmem:[#allocation2 + $0x28] sm:$0xff] %v2898
    %2979 = vst [vmem:[#allocation2 + $0x30] sm:$0xff] %v2927
    %2980 = vst [vmem:[#allocation2 + $0x38] sm:$0xff] %v2956
    %2981 = vst [vmem:[#allocation2 + $0x40] sm:$0xff] %v2872
    %2982 = vst [vmem:[#allocation2 + $0x48] sm:$0xff] %v2901
    %2983 = vst [vmem:[#allocation2 + $0x50] sm:$0xff] %v2930
    %2984 = vst [vmem:[#allocation2 + $0x58] sm:$0xff] %v2959
    %2985 = vst [vmem:[#allocation2 + $0x60] sm:$0xff] %v2874
    %2986 = vst [vmem:[#allocation2 + $0x68] sm:$0xff] %v2903
    %2987 = vst [vmem:[#allocation2 + $0x70] sm:$0xff] %v2932
    %2988 = vst [vmem:[#allocation2 + $0x78] sm:$0xff] %v2961
    %2989 = vst [vmem:[#allocation2 + $0x80] sm:$0xff] %v2877
    %2990 = vst [vmem:[#allocation2 + $0x88] sm:$0xff] %v2906
    %2991 = vst [vmem:[#allocation2 + $0x90] sm:$0xff] %v2935
    %2992 = vst [vmem:[#allocation2 + $0x98] sm:$0xff] %v2964
    %2993 = vst [vmem:[#allocation2 + $0xa0] sm:$0xff] %v2879
    %2994 = vst [vmem:[#allocation2 + $0xa8] sm:$0xff] %v2908
    %2995 = vst [vmem:[#allocation2 + $0xb0] sm:$0xff] %v2937
    %2996 = vst [vmem:[#allocation2 + $0xb8] sm:$0xff] %v2966
    %2997 = vst [vmem:[#allocation2 + $0xc0] sm:$0xff] %v2882
    %2998 = vst [vmem:[#allocation2 + $0xc8] sm:$0xff] %v2911
    %2999 = vst [vmem:[#allocation2 + $0xd0] sm:$0xff] %v2940
    %3000 = vst [vmem:[#allocation2 + $0xd8] sm:$0xff] %v2969
    %3001 = vst [vmem:[#allocation2 + $0xe0] sm:$0xff] %v2884
    %3002 = vst [vmem:[#allocation2 + $0xe8] sm:$0xff] %v2913
    %3003 = vst [vmem:[#allocation2 + $0xf0] sm:$0xff] %v2942
    %3004 = vst [vmem:[#allocation2 + $0xf8] sm:$0xff] %v2971
    %s3005 = smul.addr %s77, 8
    %s3006 = scalar_lea.vmem [#allocation2], %s3005
    %v3007 = vld [vmem:[%s3006] sm:$0xff]
    %v3008 = vld [vmem:[%s3006 + $0x8] sm:$0xff]
    %v3009 = vld [vmem:[%s3006 + $0x10] sm:$0xff]
    %v3010 = vld [vmem:[%s3006 + $0x18] sm:$0xff]
    %v3011 = vld [vmem:[#allocation6] sm:$0xff]
    %v3012 = vld [vmem:[#allocation6 + $0x8] sm:$0xff]
    %v3013 = vld [vmem:[#allocation6 + $0x10] sm:$0xff]
    %v3014 = vld [vmem:[#allocation6 + $0x18] sm:$0xff]
    %v3015 = vld [vmem:[#allocation6 + $0x20] sm:$0xff]
    %v3016 = vld [vmem:[#allocation6 + $0x28] sm:$0xff]
    %v3017 = vld [vmem:[#allocation6 + $0x30] sm:$0xff]
    %v3018 = vld [vmem:[#allocation6 + $0x38] sm:$0xff]
    %v3019 = vld [vmem:[#allocation6 + $0x40] sm:$0xff]
    %v3020 = vld [vmem:[#allocation6 + $0x48] sm:$0xff]
    %v3021 = vld [vmem:[#allocation6 + $0x50] sm:$0xff]
    %v3022 = vld [vmem:[#allocation6 + $0x58] sm:$0xff]
    %v3023 = vld [vmem:[#allocation6 + $0x60] sm:$0xff]
    %v3024 = vld [vmem:[#allocation6 + $0x68] sm:$0xff]
    %v3025 = vld [vmem:[#allocation6 + $0x70] sm:$0xff]
    %v3026 = vld [vmem:[#allocation6 + $0x78] sm:$0xff]
    %v3027 = vld [vmem:[#allocation6 + $0x80] sm:$0xff]
    %v3028 = vld [vmem:[#allocation6 + $0x88] sm:$0xff]
    %v3029 = vld [vmem:[#allocation6 + $0x90] sm:$0xff]
    %v3030 = vld [vmem:[#allocation6 + $0x98] sm:$0xff]
    %v3031 = vld [vmem:[#allocation6 + $0xa0] sm:$0xff]
    %v3032 = vld [vmem:[#allocation6 + $0xa8] sm:$0xff]
    %v3033 = vld [vmem:[#allocation6 + $0xb0] sm:$0xff]
    %v3034 = vld [vmem:[#allocation6 + $0xb8] sm:$0xff]
    %v3035 = vld [vmem:[#allocation6 + $0xc0] sm:$0xff]
    %v3036 = vld [vmem:[#allocation6 + $0xc8] sm:$0xff]
    %v3037 = vld [vmem:[#allocation6 + $0xd0] sm:$0xff]
    %v3038 = vld [vmem:[#allocation6 + $0xd8] sm:$0xff]
    %v3039 = vld [vmem:[#allocation6 + $0xe0] sm:$0xff]
    %v3040 = vld [vmem:[#allocation6 + $0xe8] sm:$0xff]
    %v3041 = vld [vmem:[#allocation6 + $0xf0] sm:$0xff]
    %v3042 = vld [vmem:[#allocation6 + $0xf8] sm:$0xff]
    %v3075 = vunpack.c.l.b16 %v3011
    %v3076 = vunpack.c.h.b16 %v3011
    %v3077 = vunpack.c.l.b16 %v3012
    %v3078 = vunpack.c.h.b16 %v3012
    %v3079 = vunpack.c.l.b16 %v3013
    %v3080 = vunpack.c.h.b16 %v3013
    %v3081 = vunpack.c.l.b16 %v3014
    %v3082 = vunpack.c.h.b16 %v3014
    %v3083 = vunpack.c.l.b16 %v3015
    %v3084 = vunpack.c.h.b16 %v3015
    %v3085 = vunpack.c.l.b16 %v3016
    %v3086 = vunpack.c.h.b16 %v3016
    %v3087 = vunpack.c.l.b16 %v3017
    %v3088 = vunpack.c.h.b16 %v3017
    %v3089 = vunpack.c.l.b16 %v3018
    %v3090 = vunpack.c.h.b16 %v3018
    %v3091 = vunpack.c.l.b16 %v3019
    %v3092 = vunpack.c.h.b16 %v3019
    %v3093 = vunpack.c.l.b16 %v3020
    %v3094 = vunpack.c.h.b16 %v3020
    %v3095 = vunpack.c.l.b16 %v3021
    %v3096 = vunpack.c.h.b16 %v3021
    %v3097 = vunpack.c.l.b16 %v3022
    %v3098 = vunpack.c.h.b16 %v3022
    %v3099 = vunpack.c.l.b16 %v3023
    %v3100 = vunpack.c.h.b16 %v3023
    %v3101 = vunpack.c.l.b16 %v3024
    %v3102 = vunpack.c.h.b16 %v3024
    %v3103 = vunpack.c.l.b16 %v3025
    %v3104 = vunpack.c.h.b16 %v3025
    %v3105 = vunpack.c.l.b16 %v3026
    %v3106 = vunpack.c.h.b16 %v3026
    %v3107 = vunpack.c.l.b16 %v3027
    %v3108 = vunpack.c.h.b16 %v3027
    %v3109 = vunpack.c.l.b16 %v3028
    %v3110 = vunpack.c.h.b16 %v3028
    %v3111 = vunpack.c.l.b16 %v3029
    %v3112 = vunpack.c.h.b16 %v3029
    %v3113 = vunpack.c.l.b16 %v3030
    %v3114 = vunpack.c.h.b16 %v3030
    %v3115 = vunpack.c.l.b16 %v3031
    %v3116 = vunpack.c.h.b16 %v3031
    %v3117 = vunpack.c.l.b16 %v3032
    %v3118 = vunpack.c.h.b16 %v3032
    %v3119 = vunpack.c.l.b16 %v3033
    %v3120 = vunpack.c.h.b16 %v3033
    %v3121 = vunpack.c.l.b16 %v3034
    %v3122 = vunpack.c.h.b16 %v3034
    %v3123 = vunpack.c.l.b16 %v3035
    %v3124 = vunpack.c.h.b16 %v3035
    %v3125 = vunpack.c.l.b16 %v3036
    %v3126 = vunpack.c.h.b16 %v3036
    %v3127 = vunpack.c.l.b16 %v3037
    %v3128 = vunpack.c.h.b16 %v3037
    %v3129 = vunpack.c.l.b16 %v3038
    %v3130 = vunpack.c.h.b16 %v3038
    %v3131 = vunpack.c.l.b16 %v3039
    %v3132 = vunpack.c.h.b16 %v3039
    %v3133 = vunpack.c.l.b16 %v3040
    %v3134 = vunpack.c.h.b16 %v3040
    %v3135 = vunpack.c.l.b16 %v3041
    %v3136 = vunpack.c.h.b16 %v3041
    %v3137 = vunpack.c.l.b16 %v3042
    %v3138 = vunpack.c.h.b16 %v3042
    %v3139 = vpack.c.b16 %v3079, %v3075
    %v3140 = vpack.c.b16 %v3080, %v3076
    %v3141 = vpack.c.b16 %v3081, %v3077
    %v3142 = vpack.c.b16 %v3082, %v3078
    %v3143 = vpack.c.b16 %v3087, %v3083
    %v3144 = vpack.c.b16 %v3088, %v3084
    %v3145 = vpack.c.b16 %v3089, %v3085
    %v3146 = vpack.c.b16 %v3090, %v3086
    %v3147 = vpack.c.b16 %v3095, %v3091
    %v3148 = vpack.c.b16 %v3096, %v3092
    %v3149 = vpack.c.b16 %v3097, %v3093
    %v3150 = vpack.c.b16 %v3098, %v3094
    %v3151 = vpack.c.b16 %v3103, %v3099
    %v3152 = vpack.c.b16 %v3104, %v3100
    %v3153 = vpack.c.b16 %v3105, %v3101
    %v3154 = vpack.c.b16 %v3106, %v3102
    %v3155 = vpack.c.b16 %v3111, %v3107
    %v3156 = vpack.c.b16 %v3112, %v3108
    %v3157 = vpack.c.b16 %v3113, %v3109
    %v3158 = vpack.c.b16 %v3114, %v3110
    %v3159 = vpack.c.b16 %v3119, %v3115
    %v3160 = vpack.c.b16 %v3120, %v3116
    %v3161 = vpack.c.b16 %v3121, %v3117
    %v3162 = vpack.c.b16 %v3122, %v3118
    %v3163 = vpack.c.b16 %v3127, %v3123
    %v3164 = vpack.c.b16 %v3128, %v3124
    %v3165 = vpack.c.b16 %v3129, %v3125
    %v3166 = vpack.c.b16 %v3130, %v3126
    %v3167 = vpack.c.b16 %v3135, %v3131
    %v3168 = vpack.c.b16 %v3136, %v3132
    %v3169 = vpack.c.b16 %v3137, %v3133
    %v3170 = vpack.c.b16 %v3138, %v3134
    %3203 = vmatpush.bf16.msra.mxu0 %v3167
    %3204 = vmatpush.bf16.msra.mxu0 %v3163
    %3205 = vmatpush.bf16.msra.mxu0 %v3159
    %3206 = vmatpush.bf16.msra.mxu0 %v3155
    %3207 = vmatpush.bf16.msra.mxu0 %v3151
    %3208 = vmatpush.bf16.msra.mxu0 %v3147
    %3209 = vmatpush.bf16.msra.mxu0 %v3143
    %3210 = vmatpush.bf16.msra.mxu0 %v3139
    %3211 = vmatmul.bf16.gmra.mxu0 0
    %v3212 = vpop.f32.mrf.mxu0
    %v3213 = vadd.f32 0.0, %v3212
    %v3214 = vpop.f32.mrf.mxu0
    %3215 = vdwg.mxu0
    %3216 = vmatpush.bf16.msra.mxu0 %v3168
    %3217 = vmatpush.bf16.msra.mxu0 %v3164
    %3218 = vmatpush.bf16.msra.mxu0 %v3160
    %3219 = vmatpush.bf16.msra.mxu0 %v3156
    %3220 = vmatpush.bf16.msra.mxu0 %v3152
    %3221 = vmatpush.bf16.msra.mxu0 %v3148
    %3222 = vmatpush.bf16.msra.mxu0 %v3144
    %3223 = vmatpush.bf16.msra.mxu0 %v3140
    %3224 = vmatmul.bf16.gmra.mxu0 0
    %v3225 = vpop.f32.mrf.mxu0
    %v3226 = vadd.f32 0.0, %v3225
    %v3227 = vpop.f32.mrf.mxu0
    %3228 = vdwg.mxu0
    %3229 = vmatpush.bf16.msra.mxu0 %v3169
    %3230 = vmatpush.bf16.msra.mxu0 %v3165
    %3231 = vmatpush.bf16.msra.mxu0 %v3161
    %3232 = vmatpush.bf16.msra.mxu0 %v3157
    %3233 = vmatpush.bf16.msra.mxu0 %v3153
    %3234 = vmatpush.bf16.msra.mxu0 %v3149
    %3235 = vmatpush.bf16.msra.mxu0 %v3145
    %3236 = vmatpush.bf16.msra.mxu0 %v3141
    %3237 = vmatmul.bf16.gmra.mxu0 0
    %v3238 = vpop.f32.mrf.mxu0
    %v3239 = vadd.f32 0.0, %v3238
    %v3240 = vpop.f32.mrf.mxu0
    %3241 = vdwg.mxu0
    %3242 = vmatpush.bf16.msra.mxu0 %v3170
    %3243 = vmatpush.bf16.msra.mxu0 %v3166
    %3244 = vmatpush.bf16.msra.mxu0 %v3162
    %3245 = vmatpush.bf16.msra.mxu0 %v3158
    %3246 = vmatpush.bf16.msra.mxu0 %v3154
    %3247 = vmatpush.bf16.msra.mxu0 %v3150
    %3248 = vmatpush.bf16.msra.mxu0 %v3146
    %3249 = vmatpush.bf16.msra.mxu0 %v3142
    %3250 = vmatmul.bf16.gmra.mxu0 0
    %v3251 = vpop.f32.mrf.mxu0
    %v3252 = vadd.f32 0.0, %v3251
    %v3253 = vpop.f32.mrf.mxu0
    %3254 = vdwg.mxu0
    %v3255 = vadd.f32 %v3007, %v3213
    %v3256 = vadd.f32 %v3008, %v3226
    %v3257 = vadd.f32 %v3009, %v3239
    %v3258 = vadd.f32 %v3010, %v3252
    %v3259 = vxor.u32 %v3255, 2147483648
    %v3260 = vmul.f32 %v3259, 1.442695
    %v3261 = vpow.pop %v3260
    %v3262 = vadd.f32 %v3261, 1.0
    %v3263 = vrcp.pop %v3262
    %v3264 = vmul.f32 %v3262, %v3263
    %v3265 = vsub.f32 1.0, %v3264
    %v3266 = vmul.f32 %v3263, %v3265
    %v3267 = vadd.f32 %v3263, %v3266
    %vm3268 = vweird.f32 %v3262
    %vm3269 = vweird.f32 %v3263
    %vm3270 = vmor %vm3268, %vm3269
    %v3271 = vsel %vm3270, %v3263, %v3267
    %v3272 = vand.u32 2147483647, %v3262
    %vm3273 = vcmp.eq.f32.partialorder %v3272, 8.507059e+37
    %v3274 = vand.u32 %v3262, 2147483648
    %v3275 = vor.u32 1.1754944e-38, %v3274
    %v3276 = vsel %vm3273, %v3275, %v3271
    %v3277 = vmul.f32 1.0, %v3276
    %v3278 = vxor.u32 %v3256, 2147483648
    %v3279 = vmul.f32 %v3278, 1.442695
    %v3280 = vpow.pop %v3279
    %v3281 = vadd.f32 %v3280, 1.0
    %v3282 = vrcp.pop %v3281
    %v3283 = vmul.f32 %v3281, %v3282
    %v3284 = vsub.f32 1.0, %v3283
    %v3285 = vmul.f32 %v3282, %v3284
    %v3286 = vadd.f32 %v3282, %v3285
    %vm3287 = vweird.f32 %v3281
    %vm3288 = vweird.f32 %v3282
    %vm3289 = vmor %vm3287, %vm3288
    %v3290 = vsel %vm3289, %v3282, %v3286
    %v3291 = vand.u32 2147483647, %v3281
    %vm3292 = vcmp.eq.f32.partialorder %v3291, 8.507059e+37
    %v3293 = vand.u32 %v3281, 2147483648
    %v3294 = vor.u32 1.1754944e-38, %v3293
    %v3295 = vsel %vm3292, %v3294, %v3290
    %v3296 = vmul.f32 1.0, %v3295
    %v3297 = vtanh.pop %v3257
    %v3298 = vxor.u32 %v3258, 2147483648
    %v3299 = vmul.f32 %v3298, 1.442695
    %v3300 = vpow.pop %v3299
    %v3301 = vadd.f32 %v3300, 1.0
    %v3302 = vrcp.pop %v3301
    %v3303 = vmul.f32 %v3301, %v3302
    %v3304 = vsub.f32 1.0, %v3303
    %v3305 = vmul.f32 %v3302, %v3304
    %v3306 = vadd.f32 %v3302, %v3305
    %vm3307 = vweird.f32 %v3301
    %vm3308 = vweird.f32 %v3302
    %vm3309 = vmor %vm3307, %vm3308
    %v3310 = vsel %vm3309, %v3302, %v3306
    %v3311 = vand.u32 2147483647, %v3301
    %vm3312 = vcmp.eq.f32.partialorder %v3311, 8.507059e+37
    %v3313 = vand.u32 %v3301, 2147483648
    %v3314 = vor.u32 1.1754944e-38, %v3313
    %v3315 = vsel %vm3312, %v3314, %v3310
    %v3316 = vmul.f32 1.0, %v3315
    %v3317 = vmul.f32 %v3296, 0.0
    %v3318 = vmul.f32 %v3277, %v3297
    %v3319 = vadd.f32 %v3317, %v3318
    %v3320 = vtanh.pop %v3319
    %v3321 = vmul.f32 %v3316, %v3320
    %s3322 = smul.addr %s396, 8
    %s3323 = scalar_lea.vmem [#allocation2], %s3322
    %v3324 = vld [vmem:[%s3323] sm:$0xff]
    %v3325 = vld [vmem:[%s3323 + $0x8] sm:$0xff]
    %v3326 = vld [vmem:[%s3323 + $0x10] sm:$0xff]
    %v3327 = vld [vmem:[%s3323 + $0x18] sm:$0xff]
    %v3328 = vpack.c.bf16 %v3321, %v3321
    %3329 = vmatpush.bf16.msra.mxu0 %v3167
    %3330 = vmatpush.bf16.msra.mxu0 %v3163
    %3331 = vmatpush.bf16.msra.mxu0 %v3159
    %3332 = vmatpush.bf16.msra.mxu0 %v3155
    %3333 = vmatpush.bf16.msra.mxu0 %v3151
    %3334 = vmatpush.bf16.msra.mxu0 %v3147
    %3335 = vmatpush.bf16.msra.mxu0 %v3143
    %3336 = vmatpush.bf16.msra.mxu0 %v3139
    %3337 = vmatmul.bf16.gmra.mxu0 %v3328
    %v3338 = vpop.f32.mrf.mxu0
    %v3339 = vadd.f32 0.0, %v3338
    %v3340 = vpop.f32.mrf.mxu0
    %3341 = vdwg.mxu0
    %3342 = vmatpush.bf16.msra.mxu0 %v3168
    %3343 = vmatpush.bf16.msra.mxu0 %v3164
    %3344 = vmatpush.bf16.msra.mxu0 %v3160
    %3345 = vmatpush.bf16.msra.mxu0 %v3156
    %3346 = vmatpush.bf16.msra.mxu0 %v3152
    %3347 = vmatpush.bf16.msra.mxu0 %v3148
    %3348 = vmatpush.bf16.msra.mxu0 %v3144
    %3349 = vmatpush.bf16.msra.mxu0 %v3140
    %3350 = vmatmul.bf16.gmra.mxu0 %v3328
    %v3351 = vpop.f32.mrf.mxu0
    %v3352 = vadd.f32 0.0, %v3351
    %v3353 = vpop.f32.mrf.mxu0
    %3354 = vdwg.mxu0
    %3355 = vmatpush.bf16.msra.mxu0 %v3169
    %3356 = vmatpush.bf16.msra.mxu0 %v3165
    %3357 = vmatpush.bf16.msra.mxu0 %v3161
    %3358 = vmatpush.bf16.msra.mxu0 %v3157
    %3359 = vmatpush.bf16.msra.mxu0 %v3153
    %3360 = vmatpush.bf16.msra.mxu0 %v3149
    %3361 = vmatpush.bf16.msra.mxu0 %v3145
    %3362 = vmatpush.bf16.msra.mxu0 %v3141
    %3363 = vmatmul.bf16.gmra.mxu0 %v3328
    %v3364 = vpop.f32.mrf.mxu0
    %v3365 = vadd.f32 0.0, %v3364
    %v3366 = vpop.f32.mrf.mxu0
    %3367 = vdwg.mxu0
    %3368 = vmatpush.bf16.msra.mxu0 %v3170
    %3369 = vmatpush.bf16.msra.mxu0 %v3166
    %3370 = vmatpush.bf16.msra.mxu0 %v3162
    %3371 = vmatpush.bf16.msra.mxu0 %v3158
    %3372 = vmatpush.bf16.msra.mxu0 %v3154
    %3373 = vmatpush.bf16.msra.mxu0 %v3150
    %3374 = vmatpush.bf16.msra.mxu0 %v3146
    %3375 = vmatpush.bf16.msra.mxu0 %v3142
    %3376 = vmatmul.bf16.gmra.mxu0 %v3328
    %v3377 = vpop.f32.mrf.mxu0
    %v3378 = vadd.f32 0.0, %v3377
    %v3379 = vpop.f32.mrf.mxu0
    %3380 = vdwg.mxu0
    %v3381 = vadd.f32 %v3324, %v3339
    %v3382 = vadd.f32 %v3325, %v3352
    %v3383 = vadd.f32 %v3326, %v3365
    %v3384 = vadd.f32 %v3327, %v3378
    %v3385 = vxor.u32 %v3381, 2147483648
    %v3386 = vmul.f32 %v3385, 1.442695
    %v3387 = vpow.pop %v3386
    %v3388 = vadd.f32 %v3387, 1.0
    %v3389 = vrcp.pop %v3388
    %v3390 = vmul.f32 %v3388, %v3389
    %v3391 = vsub.f32 1.0, %v3390
    %v3392 = vmul.f32 %v3389, %v3391
    %v3393 = vadd.f32 %v3389, %v3392
    %vm3394 = vweird.f32 %v3388
    %vm3395 = vweird.f32 %v3389
    %vm3396 = vmor %vm3394, %vm3395
    %v3397 = vsel %vm3396, %v3389, %v3393
    %v3398 = vand.u32 2147483647, %v3388
    %vm3399 = vcmp.eq.f32.partialorder %v3398, 8.507059e+37
    %v3400 = vand.u32 %v3388, 2147483648
    %v3401 = vor.u32 1.1754944e-38, %v3400
    %v3402 = vsel %vm3399, %v3401, %v3397
    %v3403 = vmul.f32 1.0, %v3402
    %v3404 = vxor.u32 %v3382, 2147483648
    %v3405 = vmul.f32 %v3404, 1.442695
    %v3406 = vpow.pop %v3405
    %v3407 = vadd.f32 %v3406, 1.0
    %v3408 = vrcp.pop %v3407
    %v3409 = vmul.f32 %v3407, %v3408
    %v3410 = vsub.f32 1.0, %v3409
    %v3411 = vmul.f32 %v3408, %v3410
    %v3412 = vadd.f32 %v3408, %v3411
    %vm3413 = vweird.f32 %v3407
    %vm3414 = vweird.f32 %v3408
    %vm3415 = vmor %vm3413, %vm3414
    %v3416 = vsel %vm3415, %v3408, %v3412
    %v3417 = vand.u32 2147483647, %v3407
    %vm3418 = vcmp.eq.f32.partialorder %v3417, 8.507059e+37
    %v3419 = vand.u32 %v3407, 2147483648
    %v3420 = vor.u32 1.1754944e-38, %v3419
    %v3421 = vsel %vm3418, %v3420, %v3416
    %v3422 = vmul.f32 1.0, %v3421
    %v3423 = vtanh.pop %v3383
    %v3424 = vxor.u32 %v3384, 2147483648
    %v3425 = vmul.f32 %v3424, 1.442695
    %v3426 = vpow.pop %v3425
    %v3427 = vadd.f32 %v3426, 1.0
    %v3428 = vrcp.pop %v3427
    %v3429 = vmul.f32 %v3427, %v3428
    %v3430 = vsub.f32 1.0, %v3429
    %v3431 = vmul.f32 %v3428, %v3430
    %v3432 = vadd.f32 %v3428, %v3431
    %vm3433 = vweird.f32 %v3427
    %vm3434 = vweird.f32 %v3428
    %vm3435 = vmor %vm3433, %vm3434
    %v3436 = vsel %vm3435, %v3428, %v3432
    %v3437 = vand.u32 2147483647, %v3427
    %vm3438 = vcmp.eq.f32.partialorder %v3437, 8.507059e+37
    %v3439 = vand.u32 %v3427, 2147483648
    %v3440 = vor.u32 1.1754944e-38, %v3439
    %v3441 = vsel %vm3438, %v3440, %v3436
    %v3442 = vmul.f32 1.0, %v3441
    %v3443 = vmul.f32 %v3422, %v3319
    %v3444 = vmul.f32 %v3403, %v3423
    %v3445 = vadd.f32 %v3443, %v3444
    %v3446 = vtanh.pop %v3445
    %v3447 = vmul.f32 %v3442, %v3446
    %s3448 = smul.addr %s717, 8
    %s3449 = scalar_lea.vmem [#allocation2], %s3448
    %v3450 = vld [vmem:[%s3449] sm:$0xff]
    %v3451 = vld [vmem:[%s3449 + $0x8] sm:$0xff]
    %v3452 = vld [vmem:[%s3449 + $0x10] sm:$0xff]
    %v3453 = vld [vmem:[%s3449 + $0x18] sm:$0xff]
    %v3454 = vpack.c.bf16 %v3447, %v3447
    %3455 = vmatpush.bf16.msra.mxu0 %v3167
    %3456 = vmatpush.bf16.msra.mxu0 %v3163
    %3457 = vmatpush.bf16.msra.mxu0 %v3159
    %3458 = vmatpush.bf16.msra.mxu0 %v3155
    %3459 = vmatpush.bf16.msra.mxu0 %v3151
    %3460 = vmatpush.bf16.msra.mxu0 %v3147
    %3461 = vmatpush.bf16.msra.mxu0 %v3143
    %3462 = vmatpush.bf16.msra.mxu0 %v3139
    %3463 = vmatmul.bf16.gmra.mxu0 %v3454
    %v3464 = vpop.f32.mrf.mxu0
    %v3465 = vadd.f32 0.0, %v3464
    %v3466 = vpop.f32.mrf.mxu0
    %3467 = vdwg.mxu0
    %3468 = vmatpush.bf16.msra.mxu0 %v3168
    %3469 = vmatpush.bf16.msra.mxu0 %v3164
    %3470 = vmatpush.bf16.msra.mxu0 %v3160
    %3471 = vmatpush.bf16.msra.mxu0 %v3156
    %3472 = vmatpush.bf16.msra.mxu0 %v3152
    %3473 = vmatpush.bf16.msra.mxu0 %v3148
    %3474 = vmatpush.bf16.msra.mxu0 %v3144
    %3475 = vmatpush.bf16.msra.mxu0 %v3140
    %3476 = vmatmul.bf16.gmra.mxu0 %v3454
    %v3477 = vpop.f32.mrf.mxu0
    %v3478 = vadd.f32 0.0, %v3477
    %v3479 = vpop.f32.mrf.mxu0
    %3480 = vdwg.mxu0
    %3481 = vmatpush.bf16.msra.mxu0 %v3169
    %3482 = vmatpush.bf16.msra.mxu0 %v3165
    %3483 = vmatpush.bf16.msra.mxu0 %v3161
    %3484 = vmatpush.bf16.msra.mxu0 %v3157
    %3485 = vmatpush.bf16.msra.mxu0 %v3153
    %3486 = vmatpush.bf16.msra.mxu0 %v3149
    %3487 = vmatpush.bf16.msra.mxu0 %v3145
    %3488 = vmatpush.bf16.msra.mxu0 %v3141
    %3489 = vmatmul.bf16.gmra.mxu0 %v3454
    %v3490 = vpop.f32.mrf.mxu0
    %v3491 = vadd.f32 0.0, %v3490
    %v3492 = vpop.f32.mrf.mxu0
    %3493 = vdwg.mxu0
    %3494 = vmatpush.bf16.msra.mxu0 %v3170
    %3495 = vmatpush.bf16.msra.mxu0 %v3166
    %3496 = vmatpush.bf16.msra.mxu0 %v3162
    %3497 = vmatpush.bf16.msra.mxu0 %v3158
    %3498 = vmatpush.bf16.msra.mxu0 %v3154
    %3499 = vmatpush.bf16.msra.mxu0 %v3150
    %3500 = vmatpush.bf16.msra.mxu0 %v3146
    %3501 = vmatpush.bf16.msra.mxu0 %v3142
    %3502 = vmatmul.bf16.gmra.mxu0 %v3454
    %v3503 = vpop.f32.mrf.mxu0
    %v3504 = vadd.f32 0.0, %v3503
    %v3505 = vpop.f32.mrf.mxu0
    %3506 = vdwg.mxu0
    %v3507 = vadd.f32 %v3450, %v3465
    %v3508 = vadd.f32 %v3451, %v3478
    %v3509 = vadd.f32 %v3452, %v3491
    %v3510 = vadd.f32 %v3453, %v3504
    %v3511 = vxor.u32 %v3507, 2147483648
    %v3512 = vmul.f32 %v3511, 1.442695
    %v3513 = vpow.pop %v3512
    %v3514 = vadd.f32 %v3513, 1.0
    %v3515 = vrcp.pop %v3514
    %v3516 = vmul.f32 %v3514, %v3515
    %v3517 = vsub.f32 1.0, %v3516
    %v3518 = vmul.f32 %v3515, %v3517
    %v3519 = vadd.f32 %v3515, %v3518
    %vm3520 = vweird.f32 %v3514
    %vm3521 = vweird.f32 %v3515
    %vm3522 = vmor %vm3520, %vm3521
    %v3523 = vsel %vm3522, %v3515, %v3519
    %v3524 = vand.u32 2147483647, %v3514
    %vm3525 = vcmp.eq.f32.partialorder %v3524, 8.507059e+37
    %v3526 = vand.u32 %v3514, 2147483648
    %v3527 = vor.u32 1.1754944e-38, %v3526
    %v3528 = vsel %vm3525, %v3527, %v3523
    %v3529 = vmul.f32 1.0, %v3528
    %v3530 = vxor.u32 %v3508, 2147483648
    %v3531 = vmul.f32 %v3530, 1.442695
    %v3532 = vpow.pop %v3531
    %v3533 = vadd.f32 %v3532, 1.0
    %v3534 = vrcp.pop %v3533
    %v3535 = vmul.f32 %v3533, %v3534
    %v3536 = vsub.f32 1.0, %v3535
    %v3537 = vmul.f32 %v3534, %v3536
    %v3538 = vadd.f32 %v3534, %v3537
    %vm3539 = vweird.f32 %v3533
    %vm3540 = vweird.f32 %v3534
    %vm3541 = vmor %vm3539, %vm3540
    %v3542 = vsel %vm3541, %v3534, %v3538
    %v3543 = vand.u32 2147483647, %v3533
    %vm3544 = vcmp.eq.f32.partialorder %v3543, 8.507059e+37
    %v3545 = vand.u32 %v3533, 2147483648
    %v3546 = vor.u32 1.1754944e-38, %v3545
    %v3547 = vsel %vm3544, %v3546, %v3542
    %v3548 = vmul.f32 1.0, %v3547
    %v3549 = vtanh.pop %v3509
    %v3550 = vxor.u32 %v3510, 2147483648
    %v3551 = vmul.f32 %v3550, 1.442695
    %v3552 = vpow.pop %v3551
    %v3553 = vadd.f32 %v3552, 1.0
    %v3554 = vrcp.pop %v3553
    %v3555 = vmul.f32 %v3553, %v3554
    %v3556 = vsub.f32 1.0, %v3555
    %v3557 = vmul.f32 %v3554, %v3556
    %v3558 = vadd.f32 %v3554, %v3557
    %vm3559 = vweird.f32 %v3553
    %vm3560 = vweird.f32 %v3554
    %vm3561 = vmor %vm3559, %vm3560
    %v3562 = vsel %vm3561, %v3554, %v3558
    %v3563 = vand.u32 2147483647, %v3553
    %vm3564 = vcmp.eq.f32.partialorder %v3563, 8.507059e+37
    %v3565 = vand.u32 %v3553, 2147483648
    %v3566 = vor.u32 1.1754944e-38, %v3565
    %v3567 = vsel %vm3564, %v3566, %v3562
    %v3568 = vmul.f32 1.0, %v3567
    %v3569 = vmul.f32 %v3548, %v3445
    %v3570 = vmul.f32 %v3529, %v3549
    %v3571 = vadd.f32 %v3569, %v3570
    %v3572 = vtanh.pop %v3571
    %v3573 = vmul.f32 %v3568, %v3572
    %s3574 = smul.addr %s1038, 8
    %s3575 = scalar_lea.vmem [#allocation2], %s3574
    %v3576 = vld [vmem:[%s3575] sm:$0xff]
    %v3577 = vld [vmem:[%s3575 + $0x8] sm:$0xff]
    %v3578 = vld [vmem:[%s3575 + $0x10] sm:$0xff]
    %v3579 = vld [vmem:[%s3575 + $0x18] sm:$0xff]
    %v3580 = vpack.c.bf16 %v3573, %v3573
    %3581 = vmatpush.bf16.msra.mxu0 %v3167
    %3582 = vmatpush.bf16.msra.mxu0 %v3163
    %3583 = vmatpush.bf16.msra.mxu0 %v3159
    %3584 = vmatpush.bf16.msra.mxu0 %v3155
    %3585 = vmatpush.bf16.msra.mxu0 %v3151
    %3586 = vmatpush.bf16.msra.mxu0 %v3147
    %3587 = vmatpush.bf16.msra.mxu0 %v3143
    %3588 = vmatpush.bf16.msra.mxu0 %v3139
    %3589 = vmatmul.bf16.gmra.mxu0 %v3580
    %v3590 = vpop.f32.mrf.mxu0
    %v3591 = vadd.f32 0.0, %v3590
    %v3592 = vpop.f32.mrf.mxu0
    %3593 = vdwg.mxu0
    %3594 = vmatpush.bf16.msra.mxu0 %v3168
    %3595 = vmatpush.bf16.msra.mxu0 %v3164
    %3596 = vmatpush.bf16.msra.mxu0 %v3160
    %3597 = vmatpush.bf16.msra.mxu0 %v3156
    %3598 = vmatpush.bf16.msra.mxu0 %v3152
    %3599 = vmatpush.bf16.msra.mxu0 %v3148
    %3600 = vmatpush.bf16.msra.mxu0 %v3144
    %3601 = vmatpush.bf16.msra.mxu0 %v3140
    %3602 = vmatmul.bf16.gmra.mxu0 %v3580
    %v3603 = vpop.f32.mrf.mxu0
    %v3604 = vadd.f32 0.0, %v3603
    %v3605 = vpop.f32.mrf.mxu0
    %3606 = vdwg.mxu0
    %3607 = vmatpush.bf16.msra.mxu0 %v3169
    %3608 = vmatpush.bf16.msra.mxu0 %v3165
    %3609 = vmatpush.bf16.msra.mxu0 %v3161
    %3610 = vmatpush.bf16.msra.mxu0 %v3157
    %3611 = vmatpush.bf16.msra.mxu0 %v3153
    %3612 = vmatpush.bf16.msra.mxu0 %v3149
    %3613 = vmatpush.bf16.msra.mxu0 %v3145
    %3614 = vmatpush.bf16.msra.mxu0 %v3141
    %3615 = vmatmul.bf16.gmra.mxu0 %v3580
    %v3616 = vpop.f32.mrf.mxu0
    %v3617 = vadd.f32 0.0, %v3616
    %v3618 = vpop.f32.mrf.mxu0
    %3619 = vdwg.mxu0
    %3620 = vmatpush.bf16.msra.mxu0 %v3170
    %3621 = vmatpush.bf16.msra.mxu0 %v3166
    %3622 = vmatpush.bf16.msra.mxu0 %v3162
    %3623 = vmatpush.bf16.msra.mxu0 %v3158
    %3624 = vmatpush.bf16.msra.mxu0 %v3154
    %3625 = vmatpush.bf16.msra.mxu0 %v3150
    %3626 = vmatpush.bf16.msra.mxu0 %v3146
    %3627 = vmatpush.bf16.msra.mxu0 %v3142
    %3628 = vmatmul.bf16.gmra.mxu0 %v3580
    %v3629 = vpop.f32.mrf.mxu0
    %v3630 = vadd.f32 0.0, %v3629
    %v3631 = vpop.f32.mrf.mxu0
    %3632 = vdwg.mxu0
    %v3633 = vadd.f32 %v3576, %v3591
    %v3634 = vadd.f32 %v3577, %v3604
    %v3635 = vadd.f32 %v3578, %v3617
    %v3636 = vadd.f32 %v3579, %v3630
    %v3637 = vxor.u32 %v3633, 2147483648
    %v3638 = vmul.f32 %v3637, 1.442695
    %v3639 = vpow.pop %v3638
    %v3640 = vadd.f32 %v3639, 1.0
    %v3641 = vrcp.pop %v3640
    %v3642 = vmul.f32 %v3640, %v3641
    %v3643 = vsub.f32 1.0, %v3642
    %v3644 = vmul.f32 %v3641, %v3643
    %v3645 = vadd.f32 %v3641, %v3644
    %vm3646 = vweird.f32 %v3640
    %vm3647 = vweird.f32 %v3641
    %vm3648 = vmor %vm3646, %vm3647
    %v3649 = vsel %vm3648, %v3641, %v3645
    %v3650 = vand.u32 2147483647, %v3640
    %vm3651 = vcmp.eq.f32.partialorder %v3650, 8.507059e+37
    %v3652 = vand.u32 %v3640, 2147483648
    %v3653 = vor.u32 1.1754944e-38, %v3652
    %v3654 = vsel %vm3651, %v3653, %v3649
    %v3655 = vmul.f32 1.0, %v3654
    %v3656 = vxor.u32 %v3634, 2147483648
    %v3657 = vmul.f32 %v3656, 1.442695
    %v3658 = vpow.pop %v3657
    %v3659 = vadd.f32 %v3658, 1.0
    %v3660 = vrcp.pop %v3659
    %v3661 = vmul.f32 %v3659, %v3660
    %v3662 = vsub.f32 1.0, %v3661
    %v3663 = vmul.f32 %v3660, %v3662
    %v3664 = vadd.f32 %v3660, %v3663
    %vm3665 = vweird.f32 %v3659
    %vm3666 = vweird.f32 %v3660
    %vm3667 = vmor %vm3665, %vm3666
    %v3668 = vsel %vm3667, %v3660, %v3664
    %v3669 = vand.u32 2147483647, %v3659
    %vm3670 = vcmp.eq.f32.partialorder %v3669, 8.507059e+37
    %v3671 = vand.u32 %v3659, 2147483648
    %v3672 = vor.u32 1.1754944e-38, %v3671
    %v3673 = vsel %vm3670, %v3672, %v3668
    %v3674 = vmul.f32 1.0, %v3673
    %v3675 = vtanh.pop %v3635
    %v3676 = vxor.u32 %v3636, 2147483648
    %v3677 = vmul.f32 %v3676, 1.442695
    %v3678 = vpow.pop %v3677
    %v3679 = vadd.f32 %v3678, 1.0
    %v3680 = vrcp.pop %v3679
    %v3681 = vmul.f32 %v3679, %v3680
    %v3682 = vsub.f32 1.0, %v3681
    %v3683 = vmul.f32 %v3680, %v3682
    %v3684 = vadd.f32 %v3680, %v3683
    %vm3685 = vweird.f32 %v3679
    %vm3686 = vweird.f32 %v3680
    %vm3687 = vmor %vm3685, %vm3686
    %v3688 = vsel %vm3687, %v3680, %v3684
    %v3689 = vand.u32 2147483647, %v3679
    %vm3690 = vcmp.eq.f32.partialorder %v3689, 8.507059e+37
    %v3691 = vand.u32 %v3679, 2147483648
    %v3692 = vor.u32 1.1754944e-38, %v3691
    %v3693 = vsel %vm3690, %v3692, %v3688
    %v3694 = vmul.f32 1.0, %v3693
    %v3695 = vmul.f32 %v3674, %v3571
    %v3696 = vmul.f32 %v3655, %v3675
    %v3697 = vadd.f32 %v3695, %v3696
    %v3698 = vtanh.pop %v3697
    %v3699 = vmul.f32 %v3694, %v3698
    %s3700 = smul.addr %s1359, 8
    %s3701 = scalar_lea.vmem [#allocation2], %s3700
    %v3702 = vld [vmem:[%s3701] sm:$0xff]
    %v3703 = vld [vmem:[%s3701 + $0x8] sm:$0xff]
    %v3704 = vld [vmem:[%s3701 + $0x10] sm:$0xff]
    %v3705 = vld [vmem:[%s3701 + $0x18] sm:$0xff]
    %v3706 = vpack.c.bf16 %v3699, %v3699
    %3707 = vmatpush.bf16.msra.mxu0 %v3167
    %3708 = vmatpush.bf16.msra.mxu0 %v3163
    %3709 = vmatpush.bf16.msra.mxu0 %v3159
    %3710 = vmatpush.bf16.msra.mxu0 %v3155
    %3711 = vmatpush.bf16.msra.mxu0 %v3151
    %3712 = vmatpush.bf16.msra.mxu0 %v3147
    %3713 = vmatpush.bf16.msra.mxu0 %v3143
    %3714 = vmatpush.bf16.msra.mxu0 %v3139
    %3715 = vmatmul.bf16.gmra.mxu0 %v3706
    %v3716 = vpop.f32.mrf.mxu0
    %v3717 = vadd.f32 0.0, %v3716
    %v3718 = vpop.f32.mrf.mxu0
    %3719 = vdwg.mxu0
    %3720 = vmatpush.bf16.msra.mxu0 %v3168
    %3721 = vmatpush.bf16.msra.mxu0 %v3164
    %3722 = vmatpush.bf16.msra.mxu0 %v3160
    %3723 = vmatpush.bf16.msra.mxu0 %v3156
    %3724 = vmatpush.bf16.msra.mxu0 %v3152
    %3725 = vmatpush.bf16.msra.mxu0 %v3148
    %3726 = vmatpush.bf16.msra.mxu0 %v3144
    %3727 = vmatpush.bf16.msra.mxu0 %v3140
    %3728 = vmatmul.bf16.gmra.mxu0 %v3706
    %v3729 = vpop.f32.mrf.mxu0
    %v3730 = vadd.f32 0.0, %v3729
    %v3731 = vpop.f32.mrf.mxu0
    %3732 = vdwg.mxu0
    %3733 = vmatpush.bf16.msra.mxu0 %v3169
    %3734 = vmatpush.bf16.msra.mxu0 %v3165
    %3735 = vmatpush.bf16.msra.mxu0 %v3161
    %3736 = vmatpush.bf16.msra.mxu0 %v3157
    %3737 = vmatpush.bf16.msra.mxu0 %v3153
    %3738 = vmatpush.bf16.msra.mxu0 %v3149
    %3739 = vmatpush.bf16.msra.mxu0 %v3145
    %3740 = vmatpush.bf16.msra.mxu0 %v3141
    %3741 = vmatmul.bf16.gmra.mxu0 %v3706
    %v3742 = vpop.f32.mrf.mxu0
    %v3743 = vadd.f32 0.0, %v3742
    %v3744 = vpop.f32.mrf.mxu0
    %3745 = vdwg.mxu0
    %3746 = vmatpush.bf16.msra.mxu0 %v3170
    %3747 = vmatpush.bf16.msra.mxu0 %v3166
    %3748 = vmatpush.bf16.msra.mxu0 %v3162
    %3749 = vmatpush.bf16.msra.mxu0 %v3158
    %3750 = vmatpush.bf16.msra.mxu0 %v3154
    %3751 = vmatpush.bf16.msra.mxu0 %v3150
    %3752 = vmatpush.bf16.msra.mxu0 %v3146
    %3753 = vmatpush.bf16.msra.mxu0 %v3142
    %3754 = vmatmul.bf16.gmra.mxu0 %v3706
    %v3755 = vpop.f32.mrf.mxu0
    %v3756 = vadd.f32 0.0, %v3755
    %v3757 = vpop.f32.mrf.mxu0
    %3758 = vdwg.mxu0
    %v3759 = vadd.f32 %v3702, %v3717
    %v3760 = vadd.f32 %v3703, %v3730
    %v3761 = vadd.f32 %v3704, %v3743
    %v3762 = vadd.f32 %v3705, %v3756
    %v3763 = vxor.u32 %v3759, 2147483648
    %v3764 = vmul.f32 %v3763, 1.442695
    %v3765 = vpow.pop %v3764
    %v3766 = vadd.f32 %v3765, 1.0
    %v3767 = vrcp.pop %v3766
    %v3768 = vmul.f32 %v3766, %v3767
    %v3769 = vsub.f32 1.0, %v3768
    %v3770 = vmul.f32 %v3767, %v3769
    %v3771 = vadd.f32 %v3767, %v3770
    %vm3772 = vweird.f32 %v3766
    %vm3773 = vweird.f32 %v3767
    %vm3774 = vmor %vm3772, %vm3773
    %v3775 = vsel %vm3774, %v3767, %v3771
    %v3776 = vand.u32 2147483647, %v3766
    %vm3777 = vcmp.eq.f32.partialorder %v3776, 8.507059e+37
    %v3778 = vand.u32 %v3766, 2147483648
    %v3779 = vor.u32 1.1754944e-38, %v3778
    %v3780 = vsel %vm3777, %v3779, %v3775
    %v3781 = vmul.f32 1.0, %v3780
    %v3782 = vxor.u32 %v3760, 2147483648
    %v3783 = vmul.f32 %v3782, 1.442695
    %v3784 = vpow.pop %v3783
    %v3785 = vadd.f32 %v3784, 1.0
    %v3786 = vrcp.pop %v3785
    %v3787 = vmul.f32 %v3785, %v3786
    %v3788 = vsub.f32 1.0, %v3787
    %v3789 = vmul.f32 %v3786, %v3788
    %v3790 = vadd.f32 %v3786, %v3789
    %vm3791 = vweird.f32 %v3785
    %vm3792 = vweird.f32 %v3786
    %vm3793 = vmor %vm3791, %vm3792
    %v3794 = vsel %vm3793, %v3786, %v3790
    %v3795 = vand.u32 2147483647, %v3785
    %vm3796 = vcmp.eq.f32.partialorder %v3795, 8.507059e+37
    %v3797 = vand.u32 %v3785, 2147483648
    %v3798 = vor.u32 1.1754944e-38, %v3797
    %v3799 = vsel %vm3796, %v3798, %v3794
    %v3800 = vmul.f32 1.0, %v3799
    %v3801 = vtanh.pop %v3761
    %v3802 = vxor.u32 %v3762, 2147483648
    %v3803 = vmul.f32 %v3802, 1.442695
    %v3804 = vpow.pop %v3803
    %v3805 = vadd.f32 %v3804, 1.0
    %v3806 = vrcp.pop %v3805
    %v3807 = vmul.f32 %v3805, %v3806
    %v3808 = vsub.f32 1.0, %v3807
    %v3809 = vmul.f32 %v3806, %v3808
    %v3810 = vadd.f32 %v3806, %v3809
    %vm3811 = vweird.f32 %v3805
    %vm3812 = vweird.f32 %v3806
    %vm3813 = vmor %vm3811, %vm3812
    %v3814 = vsel %vm3813, %v3806, %v3810
    %v3815 = vand.u32 2147483647, %v3805
    %vm3816 = vcmp.eq.f32.partialorder %v3815, 8.507059e+37
    %v3817 = vand.u32 %v3805, 2147483648
    %v3818 = vor.u32 1.1754944e-38, %v3817
    %v3819 = vsel %vm3816, %v3818, %v3814
    %v3820 = vmul.f32 1.0, %v3819
    %v3821 = vmul.f32 %v3800, %v3697
    %v3822 = vmul.f32 %v3781, %v3801
    %v3823 = vadd.f32 %v3821, %v3822
    %v3824 = vtanh.pop %v3823
    %v3825 = vmul.f32 %v3820, %v3824
    %s3826 = smul.addr %s1680, 8
    %s3827 = scalar_lea.vmem [#allocation2], %s3826
    %v3828 = vld [vmem:[%s3827] sm:$0xff]
    %v3829 = vld [vmem:[%s3827 + $0x8] sm:$0xff]
    %v3830 = vld [vmem:[%s3827 + $0x10] sm:$0xff]
    %v3831 = vld [vmem:[%s3827 + $0x18] sm:$0xff]
    %v3832 = vpack.c.bf16 %v3825, %v3825
    %3833 = vmatpush.bf16.msra.mxu0 %v3167
    %3834 = vmatpush.bf16.msra.mxu0 %v3163
    %3835 = vmatpush.bf16.msra.mxu0 %v3159
    %3836 = vmatpush.bf16.msra.mxu0 %v3155
    %3837 = vmatpush.bf16.msra.mxu0 %v3151
    %3838 = vmatpush.bf16.msra.mxu0 %v3147
    %3839 = vmatpush.bf16.msra.mxu0 %v3143
    %3840 = vmatpush.bf16.msra.mxu0 %v3139
    %3841 = vmatmul.bf16.gmra.mxu0 %v3832
    %v3842 = vpop.f32.mrf.mxu0
    %v3843 = vadd.f32 0.0, %v3842
    %v3844 = vpop.f32.mrf.mxu0
    %3845 = vdwg.mxu0
    %3846 = vmatpush.bf16.msra.mxu0 %v3168
    %3847 = vmatpush.bf16.msra.mxu0 %v3164
    %3848 = vmatpush.bf16.msra.mxu0 %v3160
    %3849 = vmatpush.bf16.msra.mxu0 %v3156
    %3850 = vmatpush.bf16.msra.mxu0 %v3152
    %3851 = vmatpush.bf16.msra.mxu0 %v3148
    %3852 = vmatpush.bf16.msra.mxu0 %v3144
    %3853 = vmatpush.bf16.msra.mxu0 %v3140
    %3854 = vmatmul.bf16.gmra.mxu0 %v3832
    %v3855 = vpop.f32.mrf.mxu0
    %v3856 = vadd.f32 0.0, %v3855
    %v3857 = vpop.f32.mrf.mxu0
    %3858 = vdwg.mxu0
    %3859 = vmatpush.bf16.msra.mxu0 %v3169
    %3860 = vmatpush.bf16.msra.mxu0 %v3165
    %3861 = vmatpush.bf16.msra.mxu0 %v3161
    %3862 = vmatpush.bf16.msra.mxu0 %v3157
    %3863 = vmatpush.bf16.msra.mxu0 %v3153
    %3864 = vmatpush.bf16.msra.mxu0 %v3149
    %3865 = vmatpush.bf16.msra.mxu0 %v3145
    %3866 = vmatpush.bf16.msra.mxu0 %v3141
    %3867 = vmatmul.bf16.gmra.mxu0 %v3832
    %v3868 = vpop.f32.mrf.mxu0
    %v3869 = vadd.f32 0.0, %v3868
    %v3870 = vpop.f32.mrf.mxu0
    %3871 = vdwg.mxu0
    %3872 = vmatpush.bf16.msra.mxu0 %v3170
    %3873 = vmatpush.bf16.msra.mxu0 %v3166
    %3874 = vmatpush.bf16.msra.mxu0 %v3162
    %3875 = vmatpush.bf16.msra.mxu0 %v3158
    %3876 = vmatpush.bf16.msra.mxu0 %v3154
    %3877 = vmatpush.bf16.msra.mxu0 %v3150
    %3878 = vmatpush.bf16.msra.mxu0 %v3146
    %3879 = vmatpush.bf16.msra.mxu0 %v3142
    %3880 = vmatmul.bf16.gmra.mxu0 %v3832
    %v3881 = vpop.f32.mrf.mxu0
    %v3882 = vadd.f32 0.0, %v3881
    %v3883 = vpop.f32.mrf.mxu0
    %3884 = vdwg.mxu0
    %v3885 = vadd.f32 %v3828, %v3843
    %v3886 = vadd.f32 %v3829, %v3856
    %v3887 = vadd.f32 %v3830, %v3869
    %v3888 = vadd.f32 %v3831, %v3882
    %v3889 = vxor.u32 %v3885, 2147483648
    %v3890 = vmul.f32 %v3889, 1.442695
    %v3891 = vpow.pop %v3890
    %v3892 = vadd.f32 %v3891, 1.0
    %v3893 = vrcp.pop %v3892
    %v3894 = vmul.f32 %v3892, %v3893
    %v3895 = vsub.f32 1.0, %v3894
    %v3896 = vmul.f32 %v3893, %v3895
    %v3897 = vadd.f32 %v3893, %v3896
    %vm3898 = vweird.f32 %v3892
    %vm3899 = vweird.f32 %v3893
    %vm3900 = vmor %vm3898, %vm3899
    %v3901 = vsel %vm3900, %v3893, %v3897
    %v3902 = vand.u32 2147483647, %v3892
    %vm3903 = vcmp.eq.f32.partialorder %v3902, 8.507059e+37
    %v3904 = vand.u32 %v3892, 2147483648
    %v3905 = vor.u32 1.1754944e-38, %v3904
    %v3906 = vsel %vm3903, %v3905, %v3901
    %v3907 = vmul.f32 1.0, %v3906
    %v3908 = vxor.u32 %v3886, 2147483648
    %v3909 = vmul.f32 %v3908, 1.442695
    %v3910 = vpow.pop %v3909
    %v3911 = vadd.f32 %v3910, 1.0
    %v3912 = vrcp.pop %v3911
    %v3913 = vmul.f32 %v3911, %v3912
    %v3914 = vsub.f32 1.0, %v3913
    %v3915 = vmul.f32 %v3912, %v3914
    %v3916 = vadd.f32 %v3912, %v3915
    %vm3917 = vweird.f32 %v3911
    %vm3918 = vweird.f32 %v3912
    %vm3919 = vmor %vm3917, %vm3918
    %v3920 = vsel %vm3919, %v3912, %v3916
    %v3921 = vand.u32 2147483647, %v3911
    %vm3922 = vcmp.eq.f32.partialorder %v3921, 8.507059e+37
    %v3923 = vand.u32 %v3911, 2147483648
    %v3924 = vor.u32 1.1754944e-38, %v3923
    %v3925 = vsel %vm3922, %v3924, %v3920
    %v3926 = vmul.f32 1.0, %v3925
    %v3927 = vtanh.pop %v3887
    %v3928 = vxor.u32 %v3888, 2147483648
    %v3929 = vmul.f32 %v3928, 1.442695
    %v3930 = vpow.pop %v3929
    %v3931 = vadd.f32 %v3930, 1.0
    %v3932 = vrcp.pop %v3931
    %v3933 = vmul.f32 %v3931, %v3932
    %v3934 = vsub.f32 1.0, %v3933
    %v3935 = vmul.f32 %v3932, %v3934
    %v3936 = vadd.f32 %v3932, %v3935
    %vm3937 = vweird.f32 %v3931
    %vm3938 = vweird.f32 %v3932
    %vm3939 = vmor %vm3937, %vm3938
    %v3940 = vsel %vm3939, %v3932, %v3936
    %v3941 = vand.u32 2147483647, %v3931
    %vm3942 = vcmp.eq.f32.partialorder %v3941, 8.507059e+37
    %v3943 = vand.u32 %v3931, 2147483648
    %v3944 = vor.u32 1.1754944e-38, %v3943
    %v3945 = vsel %vm3942, %v3944, %v3940
    %v3946 = vmul.f32 1.0, %v3945
    %v3947 = vmul.f32 %v3926, %v3823
    %v3948 = vmul.f32 %v3907, %v3927
    %v3949 = vadd.f32 %v3947, %v3948
    %v3950 = vtanh.pop %v3949
    %v3951 = vmul.f32 %v3946, %v3950
    %s3952 = smul.addr %s2001, 8
    %s3953 = scalar_lea.vmem [#allocation2], %s3952
    %v3954 = vld [vmem:[%s3953] sm:$0xff]
    %v3955 = vld [vmem:[%s3953 + $0x8] sm:$0xff]
    %v3956 = vld [vmem:[%s3953 + $0x10] sm:$0xff]
    %v3957 = vld [vmem:[%s3953 + $0x18] sm:$0xff]
    %v3958 = vpack.c.bf16 %v3951, %v3951
    %3959 = vmatpush.bf16.msra.mxu0 %v3167
    %3960 = vmatpush.bf16.msra.mxu0 %v3163
    %3961 = vmatpush.bf16.msra.mxu0 %v3159
    %3962 = vmatpush.bf16.msra.mxu0 %v3155
    %3963 = vmatpush.bf16.msra.mxu0 %v3151
    %3964 = vmatpush.bf16.msra.mxu0 %v3147
    %3965 = vmatpush.bf16.msra.mxu0 %v3143
    %3966 = vmatpush.bf16.msra.mxu0 %v3139
    %3967 = vmatmul.bf16.gmra.mxu0 %v3958
    %v3968 = vpop.f32.mrf.mxu0
    %v3969 = vadd.f32 0.0, %v3968
    %v3970 = vpop.f32.mrf.mxu0
    %3971 = vdwg.mxu0
    %3972 = vmatpush.bf16.msra.mxu0 %v3168
    %3973 = vmatpush.bf16.msra.mxu0 %v3164
    %3974 = vmatpush.bf16.msra.mxu0 %v3160
    %3975 = vmatpush.bf16.msra.mxu0 %v3156
    %3976 = vmatpush.bf16.msra.mxu0 %v3152
    %3977 = vmatpush.bf16.msra.mxu0 %v3148
    %3978 = vmatpush.bf16.msra.mxu0 %v3144
    %3979 = vmatpush.bf16.msra.mxu0 %v3140
    %3980 = vmatmul.bf16.gmra.mxu0 %v3958
    %v3981 = vpop.f32.mrf.mxu0
    %v3982 = vadd.f32 0.0, %v3981
    %v3983 = vpop.f32.mrf.mxu0
    %3984 = vdwg.mxu0
    %3985 = vmatpush.bf16.msra.mxu0 %v3169
    %3986 = vmatpush.bf16.msra.mxu0 %v3165
    %3987 = vmatpush.bf16.msra.mxu0 %v3161
    %3988 = vmatpush.bf16.msra.mxu0 %v3157
    %3989 = vmatpush.bf16.msra.mxu0 %v3153
    %3990 = vmatpush.bf16.msra.mxu0 %v3149
    %3991 = vmatpush.bf16.msra.mxu0 %v3145
    %3992 = vmatpush.bf16.msra.mxu0 %v3141
    %3993 = vmatmul.bf16.gmra.mxu0 %v3958
    %v3994 = vpop.f32.mrf.mxu0
    %v3995 = vadd.f32 0.0, %v3994
    %v3996 = vpop.f32.mrf.mxu0
    %3997 = vdwg.mxu0
    %3998 = vmatpush.bf16.msra.mxu0 %v3170
    %3999 = vmatpush.bf16.msra.mxu0 %v3166
    %4000 = vmatpush.bf16.msra.mxu0 %v3162
    %4001 = vmatpush.bf16.msra.mxu0 %v3158
    %4002 = vmatpush.bf16.msra.mxu0 %v3154
    %4003 = vmatpush.bf16.msra.mxu0 %v3150
    %4004 = vmatpush.bf16.msra.mxu0 %v3146
    %4005 = vmatpush.bf16.msra.mxu0 %v3142
    %4006 = vmatmul.bf16.gmra.mxu0 %v3958
    %v4007 = vpop.f32.mrf.mxu0
    %v4008 = vadd.f32 0.0, %v4007
    %v4009 = vpop.f32.mrf.mxu0
    %4010 = vdwg.mxu0
    %v4011 = vadd.f32 %v3954, %v3969
    %v4012 = vadd.f32 %v3955, %v3982
    %v4013 = vadd.f32 %v3956, %v3995
    %v4014 = vadd.f32 %v3957, %v4008
    %v4015 = vxor.u32 %v4011, 2147483648
    %v4016 = vmul.f32 %v4015, 1.442695
    %v4017 = vpow.pop %v4016
    %v4018 = vadd.f32 %v4017, 1.0
    %v4019 = vrcp.pop %v4018
    %v4020 = vmul.f32 %v4018, %v4019
    %v4021 = vsub.f32 1.0, %v4020
    %v4022 = vmul.f32 %v4019, %v4021
    %v4023 = vadd.f32 %v4019, %v4022
    %vm4024 = vweird.f32 %v4018
    %vm4025 = vweird.f32 %v4019
    %vm4026 = vmor %vm4024, %vm4025
    %v4027 = vsel %vm4026, %v4019, %v4023
    %v4028 = vand.u32 2147483647, %v4018
    %vm4029 = vcmp.eq.f32.partialorder %v4028, 8.507059e+37
    %v4030 = vand.u32 %v4018, 2147483648
    %v4031 = vor.u32 1.1754944e-38, %v4030
    %v4032 = vsel %vm4029, %v4031, %v4027
    %v4033 = vmul.f32 1.0, %v4032
    %v4034 = vxor.u32 %v4012, 2147483648
    %v4035 = vmul.f32 %v4034, 1.442695
    %v4036 = vpow.pop %v4035
    %v4037 = vadd.f32 %v4036, 1.0
    %v4038 = vrcp.pop %v4037
    %v4039 = vmul.f32 %v4037, %v4038
    %v4040 = vsub.f32 1.0, %v4039
    %v4041 = vmul.f32 %v4038, %v4040
    %v4042 = vadd.f32 %v4038, %v4041
    %vm4043 = vweird.f32 %v4037
    %vm4044 = vweird.f32 %v4038
    %vm4045 = vmor %vm4043, %vm4044
    %v4046 = vsel %vm4045, %v4038, %v4042
    %v4047 = vand.u32 2147483647, %v4037
    %vm4048 = vcmp.eq.f32.partialorder %v4047, 8.507059e+37
    %v4049 = vand.u32 %v4037, 2147483648
    %v4050 = vor.u32 1.1754944e-38, %v4049
    %v4051 = vsel %vm4048, %v4050, %v4046
    %v4052 = vmul.f32 1.0, %v4051
    %v4053 = vtanh.pop %v4013
    %v4054 = vxor.u32 %v4014, 2147483648
    %v4055 = vmul.f32 %v4054, 1.442695
    %v4056 = vpow.pop %v4055
    %v4057 = vadd.f32 %v4056, 1.0
    %v4058 = vrcp.pop %v4057
    %v4059 = vmul.f32 %v4057, %v4058
    %v4060 = vsub.f32 1.0, %v4059
    %v4061 = vmul.f32 %v4058, %v4060
    %v4062 = vadd.f32 %v4058, %v4061
    %vm4063 = vweird.f32 %v4057
    %vm4064 = vweird.f32 %v4058
    %vm4065 = vmor %vm4063, %vm4064
    %v4066 = vsel %vm4065, %v4058, %v4062
    %v4067 = vand.u32 2147483647, %v4057
    %vm4068 = vcmp.eq.f32.partialorder %v4067, 8.507059e+37
    %v4069 = vand.u32 %v4057, 2147483648
    %v4070 = vor.u32 1.1754944e-38, %v4069
    %v4071 = vsel %vm4068, %v4070, %v4066
    %v4072 = vmul.f32 1.0, %v4071
    %v4073 = vmul.f32 %v4052, %v3949
    %v4074 = vmul.f32 %v4033, %v4053
    %v4075 = vadd.f32 %v4073, %v4074
    %v4076 = vtanh.pop %v4075
    %v4077 = vmul.f32 %v4072, %v4076
    %s4078 = smul.addr %s2322, 8
    %s4079 = scalar_lea.vmem [#allocation2], %s4078
    %v4080 = vld [vmem:[%s4079] sm:$0xff]
    %v4081 = vld [vmem:[%s4079 + $0x8] sm:$0xff]
    %v4082 = vld [vmem:[%s4079 + $0x10] sm:$0xff]
    %v4083 = vld [vmem:[%s4079 + $0x18] sm:$0xff]
    %v4084 = vpack.c.bf16 %v4077, %v4077
    %4085 = vmatpush.bf16.msra.mxu0 %v3167
    %4086 = vmatpush.bf16.msra.mxu0 %v3163
    %4087 = vmatpush.bf16.msra.mxu0 %v3159
    %4088 = vmatpush.bf16.msra.mxu0 %v3155
    %4089 = vmatpush.bf16.msra.mxu0 %v3151
    %4090 = vmatpush.bf16.msra.mxu0 %v3147
    %4091 = vmatpush.bf16.msra.mxu0 %v3143
    %4092 = vmatpush.bf16.msra.mxu0 %v3139
    %4093 = vmatmul.bf16.gmra.mxu0 %v4084
    %v4094 = vpop.f32.mrf.mxu0
    %v4095 = vadd.f32 0.0, %v4094
    %v4096 = vpop.f32.mrf.mxu0
    %4097 = vdwg.mxu0
    %4098 = vmatpush.bf16.msra.mxu0 %v3168
    %4099 = vmatpush.bf16.msra.mxu0 %v3164
    %4100 = vmatpush.bf16.msra.mxu0 %v3160
    %4101 = vmatpush.bf16.msra.mxu0 %v3156
    %4102 = vmatpush.bf16.msra.mxu0 %v3152
    %4103 = vmatpush.bf16.msra.mxu0 %v3148
    %4104 = vmatpush.bf16.msra.mxu0 %v3144
    %4105 = vmatpush.bf16.msra.mxu0 %v3140
    %4106 = vmatmul.bf16.gmra.mxu0 %v4084
    %v4107 = vpop.f32.mrf.mxu0
    %v4108 = vadd.f32 0.0, %v4107
    %v4109 = vpop.f32.mrf.mxu0
    %4110 = vdwg.mxu0
    %4111 = vmatpush.bf16.msra.mxu0 %v3169
    %4112 = vmatpush.bf16.msra.mxu0 %v3165
    %4113 = vmatpush.bf16.msra.mxu0 %v3161
    %4114 = vmatpush.bf16.msra.mxu0 %v3157
    %4115 = vmatpush.bf16.msra.mxu0 %v3153
    %4116 = vmatpush.bf16.msra.mxu0 %v3149
    %4117 = vmatpush.bf16.msra.mxu0 %v3145
    %4118 = vmatpush.bf16.msra.mxu0 %v3141
    %4119 = vmatmul.bf16.gmra.mxu0 %v4084
    %v4120 = vpop.f32.mrf.mxu0
    %v4121 = vadd.f32 0.0, %v4120
    %v4122 = vpop.f32.mrf.mxu0
    %4123 = vdwg.mxu0
    %4124 = vmatpush.bf16.msra.mxu0 %v3170
    %4125 = vmatpush.bf16.msra.mxu0 %v3166
    %4126 = vmatpush.bf16.msra.mxu0 %v3162
    %4127 = vmatpush.bf16.msra.mxu0 %v3158
    %4128 = vmatpush.bf16.msra.mxu0 %v3154
    %4129 = vmatpush.bf16.msra.mxu0 %v3150
    %4130 = vmatpush.bf16.msra.mxu0 %v3146
    %4131 = vmatpush.bf16.msra.mxu0 %v3142
    %4132 = vmatmul.bf16.gmra.mxu0 %v4084
    %v4133 = vpop.f32.mrf.mxu0
    %v4134 = vadd.f32 0.0, %v4133
    %v4135 = vpop.f32.mrf.mxu0
    %4136 = vdwg.mxu0
    %v4137 = vadd.f32 %v4080, %v4095
    %v4138 = vadd.f32 %v4081, %v4108
    %v4139 = vadd.f32 %v4082, %v4121
    %v4140 = vadd.f32 %v4083, %v4134
    %v4141 = vxor.u32 %v4137, 2147483648
    %v4142 = vmul.f32 %v4141, 1.442695
    %v4143 = vpow.pop %v4142
    %v4144 = vadd.f32 %v4143, 1.0
    %v4145 = vrcp.pop %v4144
    %v4146 = vmul.f32 %v4144, %v4145
    %v4147 = vsub.f32 1.0, %v4146
    %v4148 = vmul.f32 %v4145, %v4147
    %v4149 = vadd.f32 %v4145, %v4148
    %vm4150 = vweird.f32 %v4144
    %vm4151 = vweird.f32 %v4145
    %vm4152 = vmor %vm4150, %vm4151
    %v4153 = vsel %vm4152, %v4145, %v4149
    %v4154 = vand.u32 2147483647, %v4144
    %vm4155 = vcmp.eq.f32.partialorder %v4154, 8.507059e+37
    %v4156 = vand.u32 %v4144, 2147483648
    %v4157 = vor.u32 1.1754944e-38, %v4156
    %v4158 = vsel %vm4155, %v4157, %v4153
    %v4159 = vmul.f32 1.0, %v4158
    %v4160 = vxor.u32 %v4138, 2147483648
    %v4161 = vmul.f32 %v4160, 1.442695
    %v4162 = vpow.pop %v4161
    %v4163 = vadd.f32 %v4162, 1.0
    %v4164 = vrcp.pop %v4163
    %v4165 = vmul.f32 %v4163, %v4164
    %v4166 = vsub.f32 1.0, %v4165
    %v4167 = vmul.f32 %v4164, %v4166
    %v4168 = vadd.f32 %v4164, %v4167
    %vm4169 = vweird.f32 %v4163
    %vm4170 = vweird.f32 %v4164
    %vm4171 = vmor %vm4169, %vm4170
    %v4172 = vsel %vm4171, %v4164, %v4168
    %v4173 = vand.u32 2147483647, %v4163
    %vm4174 = vcmp.eq.f32.partialorder %v4173, 8.507059e+37
    %v4175 = vand.u32 %v4163, 2147483648
    %v4176 = vor.u32 1.1754944e-38, %v4175
    %v4177 = vsel %vm4174, %v4176, %v4172
    %v4178 = vmul.f32 1.0, %v4177
    %v4179 = vtanh.pop %v4139
    %v4180 = vxor.u32 %v4140, 2147483648
    %v4181 = vmul.f32 %v4180, 1.442695
    %v4182 = vpow.pop %v4181
    %v4183 = vadd.f32 %v4182, 1.0
    %v4184 = vrcp.pop %v4183
    %v4185 = vmul.f32 %v4183, %v4184
    %v4186 = vsub.f32 1.0, %v4185
    %v4187 = vmul.f32 %v4184, %v4186
    %v4188 = vadd.f32 %v4184, %v4187
    %vm4189 = vweird.f32 %v4183
    %vm4190 = vweird.f32 %v4184
    %vm4191 = vmor %vm4189, %vm4190
    %v4192 = vsel %vm4191, %v4184, %v4188
    %v4193 = vand.u32 2147483647, %v4183
    %vm4194 = vcmp.eq.f32.partialorder %v4193, 8.507059e+37
    %v4195 = vand.u32 %v4183, 2147483648
    %v4196 = vor.u32 1.1754944e-38, %v4195
    %v4197 = vsel %vm4194, %v4196, %v4192
    %v4198 = vmul.f32 1.0, %v4197
    %v4199 = vmul.f32 %v4178, %v4075
    %v4200 = vmul.f32 %v4159, %v4179
    %v4201 = vadd.f32 %v4199, %v4200
    %v4202 = vtanh.pop %v4201
    %v4203 = vmul.f32 %v4198, %v4202
    %v4204 = vld [vmem:[%s5] sm:$0xff]
    %v4205 = vld [vmem:[%s5 + $0x8] sm:$0xff]
    %v4206 = vld [vmem:[%s5 + $0x10] sm:$0xff]
    %v4207 = vld [vmem:[%s5 + $0x18] sm:$0xff]
    %v4208 = vld [vmem:[%s5 + $0x20] sm:$0xff]
    %v4209 = vld [vmem:[%s5 + $0x28] sm:$0xff]
    %v4210 = vld [vmem:[%s5 + $0x30] sm:$0xff]
    %v4211 = vld [vmem:[%s5 + $0x38] sm:$0xff]
    %v4212 = vld [vmem:[%s5 + $0x40] sm:$0xff]
    %v4213 = vld [vmem:[%s5 + $0x48] sm:$0xff]
    %v4214 = vld [vmem:[%s5 + $0x50] sm:$0xff]
    %v4215 = vld [vmem:[%s5 + $0x58] sm:$0xff]
    %v4216 = vld [vmem:[%s5 + $0x60] sm:$0xff]
    %v4217 = vld [vmem:[%s5 + $0x68] sm:$0xff]
    %v4218 = vld [vmem:[%s5 + $0x70] sm:$0xff]
    %v4219 = vld [vmem:[%s5 + $0x78] sm:$0xff]
    %v4220 = vld [vmem:[%s6] sm:$0x1]
    %v4222 = vperm.slane %v4220, 0
    %4224 = vmatpush.msra.mxu0 %v4219
    %4225 = vmatpush.msra.mxu0 %v4218
    %4226 = vmatpush.msra.mxu0 %v4217
    %4227 = vmatpush.msra.mxu0 %v4216
    %4228 = vmatpush.msra.mxu0 %v4215
    %4229 = vmatpush.msra.mxu0 %v4214
    %4230 = vmatpush.msra.mxu0 %v4213
    %4231 = vmatpush.msra.mxu0 %v4212
    %4232 = vmatpush.msra.mxu0 %v4211
    %4233 = vmatpush.msra.mxu0 %v4210
    %4234 = vmatpush.msra.mxu0 %v4209
    %4235 = vmatpush.msra.mxu0 %v4208
    %4236 = vmatpush.msra.mxu0 %v4207
    %4237 = vmatpush.msra.mxu0 %v4206
    %4238 = vmatpush.msra.mxu0 %v4205
    %4239 = vmatpush.msra.mxu0 %v4204
    %4240 = vmatmul.f32.gmra.mxu0 %v4203
    %v4241 = vpop.f32.mrf.mxu0
    %v4242 = vadd.f32 %v4222, %v4241
    %4243 = vdwg.mxu0
    %v4244 = vmax.f32 %v4242, 0.0
    %v4245 = vld [vmem:[%s7] sm:$0xff]
    %v4246 = vld [vmem:[%s8] sm:$0x1]
    %v4248 = vperm.slane %v4246, 0
    %vm4250 = vcmask 64512
    %v4252 = vsel %vm4250, %v4244, 0
    %4254 = vmatpush.msra.mxu0 0.0
    %4255 = vmatpush.msra.mxu0 0.0
    %4256 = vmatpush.msra.mxu0 0.0
    %4257 = vmatpush.msra.mxu0 0.0
    %4258 = vmatpush.msra.mxu0 0.0
    %4259 = vmatpush.msra.mxu0 0.0
    %4260 = vmatpush.msra.mxu0 0.0
    %4261 = vmatpush.msra.mxu0 0.0
    %4262 = vmatpush.msra.mxu0 0.0
    %4263 = vmatpush.msra.mxu0 0.0
    %4264 = vmatpush.msra.mxu0 0.0
    %4265 = vmatpush.msra.mxu0 0.0
    %4266 = vmatpush.msra.mxu0 0.0
    %4267 = vmatpush.msra.mxu0 0.0
    %4268 = vmatpush.msra.mxu0 0.0
    %4269 = vmatpush.msra.mxu0 %v4245
    %4270 = vmatmul.f32.gmra.mxu0 %v4252
    %v4271 = vpop.f32.mrf.mxu0
    %v4272 = vadd.f32 %v4248, %v4271
    %4273 = vdwg.mxu0
    %v4274 = vmax.f32 %v4272, 0.0
    %v4275 = vld [vmem:[%s9] sm:$0xf]
    %v4276 = vld [vmem:[%s10] sm:$0x1]
    %v4278 = vperm.slane %v4276, 0
    %vm4280 = vcmask 31744
    %v4282 = vsel %vm4280, %v4274, 0
    %vm4284 = vcmask 1043456
    %v4286 = vsel %vm4284, %v4275, 0
    %4288 = vmatpush.msra.mxu0 0.0
    %4289 = vmatpush.msra.mxu0 0.0
    %4290 = vmatpush.msra.mxu0 0.0
    %4291 = vmatpush.msra.mxu0 0.0
    %4292 = vmatpush.msra.mxu0 0.0
    %4293 = vmatpush.msra.mxu0 0.0
    %4294 = vmatpush.msra.mxu0 0.0
    %4295 = vmatpush.msra.mxu0 0.0
    %4296 = vmatpush.msra.mxu0 0.0
    %4297 = vmatpush.msra.mxu0 0.0
    %4298 = vmatpush.msra.mxu0 0.0
    %4299 = vmatpush.msra.mxu0 0.0
    %4300 = vmatpush.msra.mxu0 0.0
    %4301 = vmatpush.msra.mxu0 0.0
    %4302 = vmatpush.msra.mxu0 0.0
    %4303 = vmatpush.msra.mxu0 %v4286
    %4304 = vmatmul.f32.gmra.mxu0 %v4282
    %v4305 = vpop.f32.mrf.mxu0
    %v4306 = vadd.f32 %v4278, %v4305
    %4307 = vdwg.mxu0
    %v4308 = vmax.f32 %v4306, 0.0
    %v4309 = vld [vmem:[%s11] sm:$0x3]
    %v4310 = vld [vmem:[%s12] sm:$0x1]
    %v4312 = vperm.slane %v4310, 0
    %vm4314 = vcmask 15360
    %v4316 = vsel %vm4314, %v4308, 0
    %vm4318 = vcmask 1041408
    %v4320 = vsel %vm4318, %v4309, 0
    %4322 = vmatpush.msra.mxu0 0.0
    %4323 = vmatpush.msra.mxu0 0.0
    %4324 = vmatpush.msra.mxu0 0.0
    %4325 = vmatpush.msra.mxu0 0.0
    %4326 = vmatpush.msra.mxu0 0.0
    %4327 = vmatpush.msra.mxu0 0.0
    %4328 = vmatpush.msra.mxu0 0.0
    %4329 = vmatpush.msra.mxu0 0.0
    %4330 = vmatpush.msra.mxu0 0.0
    %4331 = vmatpush.msra.mxu0 0.0
    %4332 = vmatpush.msra.mxu0 0.0
    %4333 = vmatpush.msra.mxu0 0.0
    %4334 = vmatpush.msra.mxu0 0.0
    %4335 = vmatpush.msra.mxu0 0.0
    %4336 = vmatpush.msra.mxu0 0.0
    %4337 = vmatpush.msra.mxu0 %v4320
    %4338 = vmatmul.f32.gmra.mxu0 %v4316
    %v4339 = vpop.f32.mrf.mxu0
    %v4340 = vadd.f32 %v4312, %v4339
    %4341 = vdwg.mxu0
    %4342 = vst.msk [vmem:[%s13] sm:$0xff] %vm4280, %v4340
    // Predicated region
    $region62: #{lstm_model_forward.1} parent=1 // pred_check
      _
    $region63: #{lstm_model_forward.1} parent=1 // pred_check_branch
      %4344 = sbr.rel (0) target = $region65
    $region64: #{lstm_model_forward.1} parent=1 // pred_region
      _
    $region65: #{lstm_model_forward.1} parent=1 // pred_fallthru
      _
    // Predicated region
    $region66: #{lstm_model_forward.1} parent=1 // pred_check
      _
    $region67: #{lstm_model_forward.1} parent=1 // pred_check_branch
      %4346 = sbr.rel (0) target = $region69
    $region68: #{lstm_model_forward.1} parent=1 // pred_region
      _
    $region69: #{lstm_model_forward.1} parent=1 // pred_fallthru
      _
    %4347 = vsyncpa [#allocation5], 1
    %4348 = vsyncpa [#allocation7], 1

</llo_original>
